<compile_context>
chip_gen: v7x
topology: tpu7x:2x2x1
jax: 0.10.0
libtpu: 0.0.40
codegen_flags: <defaults>
</compile_context>

<pallas_src>
import jax
import jax.numpy as jnp
import numpy as np
from jax.experimental import pallas as pl
from jax.experimental.pallas import tpu as pltpu

NEG_SLOPE = 0.01                 # torch.nn.LeakyReLU default
MATMUL_DTYPE = jnp.bfloat16      # bf16 matmul operands, f32 accumulate (all chips)


def _leaky_relu(x):
    # slope in (0,1) => leaky_relu(x) == max(x, slope*x); 2 VPU ops, no select
    return jnp.maximum(x, NEG_SLOPE * x)


# ---------------------------------------------------------------------------
# One-time host-side weight packing (free at runtime)
# ---------------------------------------------------------------------------
def _conv_pool_matrix(w_oihw, bias, hi, wi):
    """Fold conv2d('same') into a dense matrix whose output columns are ordered
    (s, ph, pw, cout) with s = 2*(oh%2)+(ow%2) the 2x2 pool-window slot.

    Input rows : activation flattened in (h, w, cin) order, length hi*wi*cin.
    The 2x2 maxpool then becomes the elementwise max of 4 contiguous,
    128-aligned column slabs; the pooled result is in (h, w, c) order.
    The bias is returned QUARTER-sized ((ph,pw,cout) tile) so it can be added
    AFTER the pool (valid because it is identical across the 4 slots and
    LeakyReLU is monotone).
    """
    w = np.asarray(w_oihw, np.float32)                # (Cout, Cin, KH, KW)
    cout, cin, kh_sz, kw_sz = w.shape
    pad_h, pad_w = kh_sz // 2, kw_sz // 2
    ph_n, pw_n = hi // 2, wi // 2
    mat = np.zeros((hi * wi * cin, 4 * ph_n * pw_n * cout), np.float32)
    for oh in range(hi):
        for ow in range(wi):
            s = (oh % 2) * 2 + (ow % 2)
            p = (oh // 2) * pw_n + (ow // 2)
            col0 = (s * ph_n * pw_n + p) * cout
            for kh in range(kh_sz):
                ih = oh + kh - pad_h
                if ih < 0 or ih >= hi:
                    continue
                for kw in range(kw_sz):
                    iw = ow + kw - pad_w
                    if iw < 0 or iw >= wi:
                        continue
                    row0 = (ih * wi + iw) * cin
                    mat[row0:row0 + cin, col0:col0 + cout] = w[:, :, kh, kw].T
    # quarter-size bias: one (ph, pw, cout) tile, added post-pool
    b_q = np.tile(np.asarray(bias, np.float32), ph_n * pw_n)[None, :]
    return mat, b_q


def _linear_matrix(w_lin, b_lin, h=2, w=2, c=64, pad_to=128):
    """Pre-permute nn.Linear weights (torch flattens (c,h,w); our pooled
    features are (h,w,c)) and zero-pad the output dim to 128 so the kernel's
    output block is lane-dense (unmasked stores)."""
    wl = np.asarray(w_lin, np.float32)                # (out, c*h*w)
    out = wl.shape[0]
    wl = wl.reshape(out, c, h, w).transpose(2, 3, 1, 0).reshape(h * w * c, out)
    wl_pad = np.zeros((h * w * c, pad_to), np.float32)
    wl_pad[:, :out] = wl
    b_pad = np.zeros((1, pad_to), np.float32)
    b_pad[0, :out] = np.asarray(b_lin, np.float32)
    return wl_pad, b_pad


def pack_params(p):
    m1, c1 = _conv_pool_matrix(p["w1"], p["b1"], 16, 16)   # (256, 2048) / (1, 512)
    m2, c2 = _conv_pool_matrix(p["w2"], p["b2"], 8, 8)     # (512, 1024) / (1, 256)
    m3, c3 = _conv_pool_matrix(p["w3"], p["b3"], 4, 4)     # (256, 1024) / (1, 256)
    ml, cl = _linear_matrix(p["w_lin"], p["b_lin"])        # (256, 128)  / (1, 128)
    wcast = lambda a: jnp.asarray(a, MATMUL_DTYPE)         # matmul operands
    bcast = lambda a: jnp.asarray(a, jnp.float32)          # biases stay f32
    return (wcast(m1), bcast(c1), wcast(m2), bcast(c2),
            wcast(m3), bcast(c3), wcast(ml), bcast(cl))


# ---------------------------------------------------------------------------
# Fused kernel: 3x (matmul -> maxpool -> bias -> LeakyReLU) + linear
# ---------------------------------------------------------------------------
def _fused_kernel(x_ref, m1_ref, c1_ref, m2_ref, c2_ref, m3_ref, c3_ref,
                  ml_ref, cl_ref, o_ref):
    def conv_pool(h, m_ref, c_ref):
        y = jnp.dot(h.astype(m_ref.dtype), m_ref[...],
                    preferred_element_type=jnp.float32)     # MXU, f32 accum
        q = y.shape[1] // 4                                  # 4 pool-slot slabs
        pooled = jnp.maximum(jnp.maximum(y[:, 0:q], y[:, q:2 * q]),
                             jnp.maximum(y[:, 2 * q:3 * q], y[:, 3 * q:4 * q]))
        return _leaky_relu(pooled + c_ref[...])              # f32 VPU, post-pool

    h = x_ref[...]                               # (B, 256)  f32, (h,w) order
    h = conv_pool(h, m1_ref, c1_ref)             # (B, 512)  = 8x8x8   (h,w,c)
    h = conv_pool(h, m2_ref, c2_ref)             # (B, 256)  = 4x4x16
    h = conv_pool(h, m3_ref, c3_ref)             # (B, 256)  = 2x2x64
    o_ref[...] = jnp.dot(h.astype(ml_ref.dtype), ml_ref[...],
                         preferred_element_type=jnp.float32) + cl_ref[...]


def _pick_batch_tile(n, max_tile=256):
    """Largest sublane-aligned (multiple-of-8) divisor of n up to max_tile.
    Small batches run as a single grid step (no forced split across cores)."""
    cands = [b for b in range(8, min(n, max_tile) + 1, 8) if n % b == 0]
    if cands:
        return max(cands)
    return n   # tiny / awkward batches: single full-array block, grid=(1,)


@jax.jit
def conv3lin1_forward(x_nchw, packed):
    m1, c1, m2, c2, m3, c3, ml, cl = packed
    n = x_nchw.shape[0]
    x = x_nchw.reshape(n, 16 * 16)        # Cin == 1, so this IS (h, w) order
    b = _pick_batch_tile(n)

    const = lambda shape: pl.BlockSpec(shape, lambda i: (0, 0))
    out_pad = pl.pallas_call(
        _fused_kernel,
        out_shape=jax.ShapeDtypeStruct((n, 128), jnp.float32),
        grid=(n // b,),
        in_specs=[
            pl.BlockSpec((b, 256), lambda i: (i, 0)),
            const(m1.shape), const(c1.shape),
            const(m2.shape), const(c2.shape),
            const(m3.shape), const(c3.shape),
            const(ml.shape), const(cl.shape),
        ],
        out_specs=pl.BlockSpec((b, 128), lambda i: (i, 0)),
        compiler_params=pltpu.CompilerParams(
            dimension_semantics=("parallel",),
            vmem_limit_bytes=32 * 1024 * 1024),
    )(x, m1, c1, m2, c2, m3, c3, ml, cl)
    return out_pad[:, :10]                # drop the lane padding (fused in jit)


# ---------------------------------------------------------------------------
# Deterministic PyTorch-style init (OIHW conv weights, (out,in) linear weight)
# ---------------------------------------------------------------------------
def init_params(key):
    ks = jax.random.split(key, 8)

    def u(k, shape, fan_in):
        bound = 1.0 / float(fan_in) ** 0.5
        return jax.random.uniform(k, shape, jnp.float32, -bound, bound)

    return {
        "w1": u(ks[0], (8, 1, 3, 3), 1 * 3 * 3),
        "b1": u(ks[1], (8,), 1 * 3 * 3),
        "w2": u(ks[2], (16, 8, 5, 5), 8 * 5 * 5),
        "b2": u(ks[3], (16,), 8 * 5 * 5),
        "w3": u(ks[4], (64, 16, 5, 5), 16 * 5 * 5),
        "b3": u(ks[5], (64,), 16 * 5 * 5),
        "w_lin": u(ks[6], (10, 256), 256),
        "b_lin": u(ks[7], (10,), 256),
    }


# ---------------------------------------------------------------------------
# Pure-JAX reference (correctness check only; f32, HIGHEST precision)
# ---------------------------------------------------------------------------
def reference_forward(x_nchw, p):
    hp = jax.lax.Precision.HIGHEST
    x = jnp.transpose(x_nchw, (0, 2, 3, 1))                       # NHWC

    def stage(x, w_oihw, b):
        w = jnp.transpose(w_oihw, (2, 3, 1, 0))                   # OIHW -> HWIO
        y = jax.lax.conv_general_dilated(
            x, w, window_strides=(1, 1), padding="SAME",
            dimension_numbers=("NHWC", "HWIO", "NHWC"), precision=hp)
        y = jnp.where(y + b.reshape(1, 1, 1, -1) >= 0,
                      y + b.reshape(1, 1, 1, -1),
                      NEG_SLOPE * (y + b.reshape(1, 1, 1, -1)))
        return jax.lax.reduce_window(y, -jnp.inf, jax.lax.max,
                                     (1, 2, 2, 1), (1, 2, 2, 1), "VALID")

    x = stage(x, p["w1"], p["b1"])
    x = stage(x, p["w2"], p["b2"])
    x = stage(x, p["w3"], p["b3"])
    feat = jnp.transpose(x, (0, 3, 1, 2)).reshape(x.shape[0], -1)  # (c,h,w)
    return jnp.dot(feat, p["w_lin"].T, precision=hp) + p["b_lin"]


if __name__ == "__main__":
    key = jax.random.PRNGKey(0)
    k_x, k_p = jax.random.split(key)
    # Linear(256,10) after three /2 pools over 64 channels => 16x16, 1-channel input
    x = jax.random.normal(k_x, (2, 1, 16, 16), jnp.float32)        # NCHW
    raw = init_params(k_p)
    packed = pack_params(raw)          # one-time weight transformation

    out = jax.block_until_ready(conv3lin1_forward(x, packed))
    ref = reference_forward(x, raw)

    assert out.shape == (2, 10), out.shape
    tol = 1e-4 if MATMUL_DTYPE == jnp.float32 else 3e-2
    assert jnp.allclose(out, ref, rtol=tol, atol=tol), \
        float(jnp.max(jnp.abs(out - ref)))
    print("KERNEL_OK")
</pallas_src>

<mosaic_0001>
module attributes {stable_mosaic.version = 11 : i64} {
  func.func @_fused_kernel(%arg0: i32, %arg1: memref<2x256xf32, #tpu.memory_space<vmem>>, %arg2: memref<256x2048xbf16, #tpu.memory_space<vmem>>, %arg3: memref<1x512xf32, #tpu.memory_space<vmem>>, %arg4: memref<512x1024xbf16, #tpu.memory_space<vmem>>, %arg5: memref<1x256xf32, #tpu.memory_space<vmem>>, %arg6: memref<256x1024xbf16, #tpu.memory_space<vmem>>, %arg7: memref<1x256xf32, #tpu.memory_space<vmem>>, %arg8: memref<256x128xbf16, #tpu.memory_space<vmem>>, %arg9: memref<1x128xf32, #tpu.memory_space<vmem>>, %arg10: memref<2x128xf32, #tpu.memory_space<vmem>>) attributes {dimension_semantics = [#tpu.dimension_semantics<parallel>], iteration_bounds = array<i64: 1>, scalar_prefetch = 0 : i64, scratch_operands = 0 : i64, tpu.core_type = #tpu.core_type<tc>, window_params = [{transform_indices = @transform_0, window_bounds = array<i64: 2, 256>}, {pipeline_mode = #tpu.pipeline_mode<synchronous>, transform_indices = @transform_1, window_bounds = array<i64: 256, 2048>}, {pipeline_mode = #tpu.pipeline_mode<synchronous>, transform_indices = @transform_2, window_bounds = array<i64: 1, 512>}, {pipeline_mode = #tpu.pipeline_mode<synchronous>, transform_indices = @transform_3, window_bounds = array<i64: 512, 1024>}, {pipeline_mode = #tpu.pipeline_mode<synchronous>, transform_indices = @transform_4, window_bounds = array<i64: 1, 256>}, {pipeline_mode = #tpu.pipeline_mode<synchronous>, transform_indices = @transform_5, window_bounds = array<i64: 256, 1024>}, {pipeline_mode = #tpu.pipeline_mode<synchronous>, transform_indices = @transform_6, window_bounds = array<i64: 1, 256>}, {pipeline_mode = #tpu.pipeline_mode<synchronous>, transform_indices = @transform_7, window_bounds = array<i64: 256, 128>}, {pipeline_mode = #tpu.pipeline_mode<synchronous>, transform_indices = @transform_8, window_bounds = array<i64: 1, 128>}, {transform_indices = @transform_9, window_bounds = array<i64: 2, 128>}]} {
    %c0 = arith.constant 0 : index
    %c0_0 = arith.constant 0 : index
    %0 = vector.load %arg1[%c0, %c0_0] : memref<2x256xf32, #tpu.memory_space<vmem>>, vector<2x256xf32>
    %1 = arith.truncf %0 : vector<2x256xf32> to vector<2x256xbf16>
    %c0_1 = arith.constant 0 : index
    %c0_2 = arith.constant 0 : index
    %2 = vector.load %arg2[%c0_1, %c0_2] : memref<256x2048xbf16, #tpu.memory_space<vmem>>, vector<256x2048xbf16>
    %cst = arith.constant dense<0.000000e+00> : vector<2x2048xf32>
    %3 = tpu.matmul %1, %2, %cst {dimension_numbers = #tpu.dot_dimension_numbers<[1], [0], [0], [1], [0, 0, 1, 1], [], []>} : vector<2x256xbf16>, vector<256x2048xbf16>, vector<2x2048xf32> -> vector<2x2048xf32>
    %4 = vector.extract_strided_slice %3 {offsets = [0, 0], sizes = [2, 512], strides = [1, 1]} : vector<2x2048xf32> to vector<2x512xf32>
    %5 = vector.extract_strided_slice %3 {offsets = [0, 512], sizes = [2, 512], strides = [1, 1]} : vector<2x2048xf32> to vector<2x512xf32>
    %6 = arith.maximumf %4, %5 : vector<2x512xf32>
    %7 = vector.extract_strided_slice %3 {offsets = [0, 1024], sizes = [2, 512], strides = [1, 1]} : vector<2x2048xf32> to vector<2x512xf32>
    %8 = vector.extract_strided_slice %3 {offsets = [0, 1536], sizes = [2, 512], strides = [1, 1]} : vector<2x2048xf32> to vector<2x512xf32>
    %9 = arith.maximumf %7, %8 : vector<2x512xf32>
    %10 = arith.maximumf %6, %9 : vector<2x512xf32>
    %c0_3 = arith.constant 0 : index
    %c0_4 = arith.constant 0 : index
    %11 = vector.load %arg3[%c0_3, %c0_4] : memref<1x512xf32, #tpu.memory_space<vmem>>, vector<1x512xf32>
    %12 = vector.broadcast %11 : vector<1x512xf32> to vector<2x512xf32>
    %13 = arith.addf %10, %12 : vector<2x512xf32>
    %cst_5 = arith.constant 0.00999999977 : f32
    %14 = vector.broadcast %cst_5 : f32 to vector<2x512xf32>
    %15 = arith.mulf %14, %13 : vector<2x512xf32>
    %16 = arith.maximumf %13, %15 : vector<2x512xf32>
    %17 = arith.truncf %16 : vector<2x512xf32> to vector<2x512xbf16>
    %c0_6 = arith.constant 0 : index
    %c0_7 = arith.constant 0 : index
    %18 = vector.load %arg4[%c0_6, %c0_7] : memref<512x1024xbf16, #tpu.memory_space<vmem>>, vector<512x1024xbf16>
    %cst_8 = arith.constant dense<0.000000e+00> : vector<2x1024xf32>
    %19 = tpu.matmul %17, %18, %cst_8 {dimension_numbers = #tpu.dot_dimension_numbers<[1], [0], [0], [1], [0, 0, 1, 1], [], []>} : vector<2x512xbf16>, vector<512x1024xbf16>, vector<2x1024xf32> -> vector<2x1024xf32>
    %20 = vector.extract_strided_slice %19 {offsets = [0, 0], sizes = [2, 256], strides = [1, 1]} : vector<2x1024xf32> to vector<2x256xf32>
    %21 = vector.extract_strided_slice %19 {offsets = [0, 256], sizes = [2, 256], strides = [1, 1]} : vector<2x1024xf32> to vector<2x256xf32>
    %22 = arith.maximumf %20, %21 : vector<2x256xf32>
    %23 = vector.extract_strided_slice %19 {offsets = [0, 512], sizes = [2, 256], strides = [1, 1]} : vector<2x1024xf32> to vector<2x256xf32>
    %24 = vector.extract_strided_slice %19 {offsets = [0, 768], sizes = [2, 256], strides = [1, 1]} : vector<2x1024xf32> to vector<2x256xf32>
    %25 = arith.maximumf %23, %24 : vector<2x256xf32>
    %26 = arith.maximumf %22, %25 : vector<2x256xf32>
    %c0_9 = arith.constant 0 : index
    %c0_10 = arith.constant 0 : index
    %27 = vector.load %arg5[%c0_9, %c0_10] : memref<1x256xf32, #tpu.memory_space<vmem>>, vector<1x256xf32>
    %28 = vector.broadcast %27 : vector<1x256xf32> to vector<2x256xf32>
    %29 = arith.addf %26, %28 : vector<2x256xf32>
    %cst_11 = arith.constant 0.00999999977 : f32
    %30 = vector.broadcast %cst_11 : f32 to vector<2x256xf32>
    %31 = arith.mulf %30, %29 : vector<2x256xf32>
    %32 = arith.maximumf %29, %31 : vector<2x256xf32>
    %33 = arith.truncf %32 : vector<2x256xf32> to vector<2x256xbf16>
    %c0_12 = arith.constant 0 : index
    %c0_13 = arith.constant 0 : index
    %34 = vector.load %arg6[%c0_12, %c0_13] : memref<256x1024xbf16, #tpu.memory_space<vmem>>, vector<256x1024xbf16>
    %cst_14 = arith.constant dense<0.000000e+00> : vector<2x1024xf32>
    %35 = tpu.matmul %33, %34, %cst_14 {dimension_numbers = #tpu.dot_dimension_numbers<[1], [0], [0], [1], [0, 0, 1, 1], [], []>} : vector<2x256xbf16>, vector<256x1024xbf16>, vector<2x1024xf32> -> vector<2x1024xf32>
    %36 = vector.extract_strided_slice %35 {offsets = [0, 0], sizes = [2, 256], strides = [1, 1]} : vector<2x1024xf32> to vector<2x256xf32>
    %37 = vector.extract_strided_slice %35 {offsets = [0, 256], sizes = [2, 256], strides = [1, 1]} : vector<2x1024xf32> to vector<2x256xf32>
    %38 = arith.maximumf %36, %37 : vector<2x256xf32>
    %39 = vector.extract_strided_slice %35 {offsets = [0, 512], sizes = [2, 256], strides = [1, 1]} : vector<2x1024xf32> to vector<2x256xf32>
    %40 = vector.extract_strided_slice %35 {offsets = [0, 768], sizes = [2, 256], strides = [1, 1]} : vector<2x1024xf32> to vector<2x256xf32>
    %41 = arith.maximumf %39, %40 : vector<2x256xf32>
    %42 = arith.maximumf %38, %41 : vector<2x256xf32>
    %c0_15 = arith.constant 0 : index
    %c0_16 = arith.constant 0 : index
    %43 = vector.load %arg7[%c0_15, %c0_16] : memref<1x256xf32, #tpu.memory_space<vmem>>, vector<1x256xf32>
    %44 = vector.broadcast %43 : vector<1x256xf32> to vector<2x256xf32>
    %45 = arith.addf %42, %44 : vector<2x256xf32>
    %cst_17 = arith.constant 0.00999999977 : f32
    %46 = vector.broadcast %cst_17 : f32 to vector<2x256xf32>
    %47 = arith.mulf %46, %45 : vector<2x256xf32>
    %48 = arith.maximumf %45, %47 : vector<2x256xf32>
    %49 = arith.truncf %48 : vector<2x256xf32> to vector<2x256xbf16>
    %c0_18 = arith.constant 0 : index
    %c0_19 = arith.constant 0 : index
    %50 = vector.load %arg8[%c0_18, %c0_19] : memref<256x128xbf16, #tpu.memory_space<vmem>>, vector<256x128xbf16>
    %cst_20 = arith.constant dense<0.000000e+00> : vector<2x128xf32>
    %51 = tpu.matmul %49, %50, %cst_20 {dimension_numbers = #tpu.dot_dimension_numbers<[1], [0], [0], [1], [0, 0, 1, 1], [], []>} : vector<2x256xbf16>, vector<256x128xbf16>, vector<2x128xf32> -> vector<2x128xf32>
    %c0_21 = arith.constant 0 : index
    %c0_22 = arith.constant 0 : index
    %52 = vector.load %arg9[%c0_21, %c0_22] : memref<1x128xf32, #tpu.memory_space<vmem>>, vector<1x128xf32>
    %53 = vector.broadcast %52 : vector<1x128xf32> to vector<2x128xf32>
    %54 = arith.addf %51, %53 : vector<2x128xf32>
    %c0_23 = arith.constant 0 : index
    %c0_24 = arith.constant 0 : index
    %55 = vector.load %arg10[%c0_23, %c0_24] : memref<2x128xf32, #tpu.memory_space<vmem>>, vector<2x128xf32>
    tpu.vector_store %arg10[%c0_23, %c0_24], %54 {strides = array<i32>} : memref<2x128xf32, #tpu.memory_space<vmem>>, vector<2x128xf32>,
    return
  }
  func.func @transform_0(%arg0: i32) -> (i32, i32) {
    %c0_i32 = arith.constant 0 : i32
    %c0_i32_0 = arith.constant 0 : i32
    return %arg0, %c0_i32 : i32, i32
  }
  func.func @transform_1(%arg0: i32) -> (i32, i32) {
    %c0_i32 = arith.constant 0 : i32
    %c0_i32_0 = arith.constant 0 : i32
    %c0_i32_1 = arith.constant 0 : i32
    return %c0_i32, %c0_i32_0 : i32, i32
  }
  func.func @transform_2(%arg0: i32) -> (i32, i32) {
    %c0_i32 = arith.constant 0 : i32
    %c0_i32_0 = arith.constant 0 : i32
    %c0_i32_1 = arith.constant 0 : i32
    return %c0_i32, %c0_i32_0 : i32, i32
  }
  func.func @transform_3(%arg0: i32) -> (i32, i32) {
    %c0_i32 = arith.constant 0 : i32
    %c0_i32_0 = arith.constant 0 : i32
    %c0_i32_1 = arith.constant 0 : i32
    return %c0_i32, %c0_i32_0 : i32, i32
  }
  func.func @transform_4(%arg0: i32) -> (i32, i32) {
    %c0_i32 = arith.constant 0 : i32
    %c0_i32_0 = arith.constant 0 : i32
    %c0_i32_1 = arith.constant 0 : i32
    return %c0_i32, %c0_i32_0 : i32, i32
  }
  func.func @transform_5(%arg0: i32) -> (i32, i32) {
    %c0_i32 = arith.constant 0 : i32
    %c0_i32_0 = arith.constant 0 : i32
    %c0_i32_1 = arith.constant 0 : i32
    return %c0_i32, %c0_i32_0 : i32, i32
  }
  func.func @transform_6(%arg0: i32) -> (i32, i32) {
    %c0_i32 = arith.constant 0 : i32
    %c0_i32_0 = arith.constant 0 : i32
    %c0_i32_1 = arith.constant 0 : i32
    return %c0_i32, %c0_i32_0 : i32, i32
  }
  func.func @transform_7(%arg0: i32) -> (i32, i32) {
    %c0_i32 = arith.constant 0 : i32
    %c0_i32_0 = arith.constant 0 : i32
    %c0_i32_1 = arith.constant 0 : i32
    return %c0_i32, %c0_i32_0 : i32, i32
  }
  func.func @transform_8(%arg0: i32) -> (i32, i32) {
    %c0_i32 = arith.constant 0 : i32
    %c0_i32_0 = arith.constant 0 : i32
    %c0_i32_1 = arith.constant 0 : i32
    return %c0_i32, %c0_i32_0 : i32, i32
  }
  func.func @transform_9(%arg0: i32) -> (i32, i32) {
    %c0_i32 = arith.constant 0 : i32
    %c0_i32_0 = arith.constant 0 : i32
    return %arg0, %c0_i32 : i32, i32
  }
}

</mosaic_0001>

<llo_original>
// kernel: conv3lin1_forward.1
$region0: #{conv3lin1_forward.1}
  #allocation0 [shape = 'u32[]', space=smem, size = 0x4, offset = 0x4, fixed_abs, tag = 'smem constant byte address 0x4 - core index']
  #allocation1 [shape = 'u32[144,128]{1,0:T(1,128)}', space=vmem, size = 0x12000, scoped, tag = 'internal scratch']
  %s0 = inlined_call_operand.vmem [shape: f32[2,256], index: 0, kind: input, shape index: {}]
  %s1 = inlined_call_operand.hbm [shape: bf16[256,2048], index: 1, kind: input, shape index: {}]
  %s2 = inlined_call_operand.vmem [shape: f32[1,512], index: 2, kind: input, shape index: {}]
  %s3 = inlined_call_operand.hbm [shape: bf16[512,1024], index: 3, kind: input, shape index: {}]
  %s4 = inlined_call_operand.vmem [shape: f32[1,256], index: 4, kind: input, shape index: {}]
  %s5 = inlined_call_operand.hbm [shape: bf16[256,1024], index: 5, kind: input, shape index: {}]
  %s6 = inlined_call_operand.vmem [shape: f32[1,256], index: 6, kind: input, shape index: {}]
  %s7 = inlined_call_operand.hbm [shape: bf16[256,128], index: 7, kind: input, shape index: {}]
  %s8 = inlined_call_operand.vmem [shape: f32[1,128], index: 8, kind: input, shape index: {}]
  %s9 = inlined_call_operand.hbm [shape: f32[2,128], index: 9, kind: output, shape index: {}]
  %s10 = sld [smem:[#allocation0]]
  $region62: #{conv3lin1_forward.1} parent=0
    _
  %s12 = ssub.s32 1, %s10
  %s13 = scalar_select 0, %s12, %s10
  $region1: #{conv3lin1_forward.1} parent=0
    #allocation2 [shape = 'u8[1048576]{0}', space=vmem, size = 0x100000, scoped, tag = 'input window, operand 1, single buffered']
    #allocation3 [shape = 's32[1]{0}', space=sflag, size = 0x4, scoped, tag = 'scoped memory for conv3lin1_forward.1']
    #allocation4 [shape = 's32[1]{0}', space=sflag, size = 0x4, scoped, tag = 'scoped memory for conv3lin1_forward.1']
    #allocation5 [shape = 'u8[1048576]{0}', space=vmem, size = 0x100000, scoped, tag = 'input window, operand 3, single buffered']
    #allocation6 [shape = 's32[1]{0}', space=sflag, size = 0x4, scoped, tag = 'scoped memory for conv3lin1_forward.1']
    #allocation7 [shape = 'u8[524288]{0}', space=vmem, size = 0x80000, scoped, tag = 'input window, operand 5, single buffered']
    #allocation8 [shape = 'u8[65536]{0}', space=vmem, size = 0x10000, scoped, tag = 'input window, operand 7, single buffered']
    #allocation9 [shape = 's32[1]{0}', space=sflag, size = 0x4, scoped, tag = 'scoped memory for conv3lin1_forward.1']
    #allocation10 [shape = 'u8[1024]{0}', space=vmem, size = 0x400, scoped, tag = 'output window, operand 0, single buffered']
    %14 = vsyncpa [#allocation3], 0
    %15 = vsyncpa [#allocation6], 0
    %16 = vsyncpa [#allocation9], 0
    %17 = vsyncpa [#allocation4], 0
    // Predicated region
    $region2: #{conv3lin1_forward.1} parent=1 // pred_check
      _
    $region3: #{conv3lin1_forward.1} parent=1 // pred_check_branch
      %19 = sbr.rel (0) target = $region5
    $region4: #{conv3lin1_forward.1} parent=1 // pred_region
      _
    $region5: #{conv3lin1_forward.1} parent=1 // pred_fallthru
      _
    // Predicated region
    $region6: #{conv3lin1_forward.1} parent=1 // pred_check
      _
    $region7: #{conv3lin1_forward.1} parent=1 // pred_check_branch
      %21 = sbr.rel (0) target = $region9
    $region8: #{conv3lin1_forward.1} parent=1 // pred_region
      %s23 = ssub.s32 32768, 32768
      %24 = vsyncadd [#allocation3], %s23
      %s25 = sshll.u32 [#allocation2], 4
      %s26 = int_to_ptr.vmem [resolvable:$true] %s25
      %31 = dma.hbm_to_vmem [thread:$0]  %s1, 32768, %s26, [#allocation3], 1024, 1024, 64
    $region9: #{conv3lin1_forward.1} parent=1 // pred_fallthru
      _
    // Predicated region
    $region10: #{conv3lin1_forward.1} parent=1 // pred_check
      _
    $region11: #{conv3lin1_forward.1} parent=1 // pred_check_branch
      %33 = sbr.rel (0) target = $region13
    $region12: #{conv3lin1_forward.1} parent=1 // pred_region
      _
    $region13: #{conv3lin1_forward.1} parent=1 // pred_fallthru
      _
    // Predicated region
    $region14: #{conv3lin1_forward.1} parent=1 // pred_check
      _
    $region15: #{conv3lin1_forward.1} parent=1 // pred_check_branch
      %35 = sbr.rel (0) target = $region17
    $region16: #{conv3lin1_forward.1} parent=1 // pred_region
      %s37 = ssub.s32 32768, 32768
      %38 = vsyncadd [#allocation6], %s37
      %s39 = sshll.u32 [#allocation5], 4
      %s40 = int_to_ptr.vmem [resolvable:$true] %s39
      %45 = dma.hbm_to_vmem [thread:$0]  %s3, 32768, %s40, [#allocation6], 512, 512, 32
    $region17: #{conv3lin1_forward.1} parent=1 // pred_fallthru
      _
    // Predicated region
    $region18: #{conv3lin1_forward.1} parent=1 // pred_check
      _
    $region19: #{conv3lin1_forward.1} parent=1 // pred_check_branch
      %47 = sbr.rel (0) target = $region21
    $region20: #{conv3lin1_forward.1} parent=1 // pred_region
      _
    $region21: #{conv3lin1_forward.1} parent=1 // pred_fallthru
      _
    // Predicated region
    $region22: #{conv3lin1_forward.1} parent=1 // pred_check
      _
    $region23: #{conv3lin1_forward.1} parent=1 // pred_check_branch
      %49 = sbr.rel (0) target = $region25
    $region24: #{conv3lin1_forward.1} parent=1 // pred_region
      %s51 = ssub.s32 16384, 16384
      %52 = vsyncadd [#allocation6], %s51
      %s53 = sshll.u32 [#allocation7], 4
      %s54 = int_to_ptr.vmem [resolvable:$true] %s53
      %59 = dma.hbm_to_vmem [thread:$0]  %s5, 16384, %s54, [#allocation6], 512, 512, 32
    $region25: #{conv3lin1_forward.1} parent=1 // pred_fallthru
      _
    // Predicated region
    $region26: #{conv3lin1_forward.1} parent=1 // pred_check
      _
    $region27: #{conv3lin1_forward.1} parent=1 // pred_check_branch
      %61 = sbr.rel (0) target = $region29
    $region28: #{conv3lin1_forward.1} parent=1 // pred_region
      _
    $region29: #{conv3lin1_forward.1} parent=1 // pred_fallthru
      _
    // Predicated region
    $region30: #{conv3lin1_forward.1} parent=1 // pred_check
      _
    $region31: #{conv3lin1_forward.1} parent=1 // pred_check_branch
      %63 = sbr.rel (0) target = $region33
    $region32: #{conv3lin1_forward.1} parent=1 // pred_region
      %s65 = ssub.s32 2048, 2048
      %66 = vsyncadd [#allocation9], %s65
      %s67 = sshll.u32 [#allocation8], 4
      %s68 = int_to_ptr.vmem [resolvable:$true] %s67
      %73 = dma.hbm_to_vmem [thread:$0]  %s7, 2048, %s68, [#allocation9], 64, 64, 4
    $region33: #{conv3lin1_forward.1} parent=1 // pred_fallthru
      _
    // Predicated region
    $region34: #{conv3lin1_forward.1} parent=1 // pred_check
      _
    $region35: #{conv3lin1_forward.1} parent=1 // pred_check_branch
      %75 = sbr.rel (0) target = $region37
    $region36: #{conv3lin1_forward.1} parent=1 // pred_region
      _
    $region37: #{conv3lin1_forward.1} parent=1 // pred_fallthru
      _
    // Predicated region
    $region38: #{conv3lin1_forward.1} parent=1 // pred_check
      _
    $region39: #{conv3lin1_forward.1} parent=1 // pred_check_branch
      %77 = sbr.rel (0) target = $region41
    $region40: #{conv3lin1_forward.1} parent=1 // pred_region
      %78 = dma.done [#allocation3], 32768
    $region41: #{conv3lin1_forward.1} parent=1 // pred_fallthru
      _
    // Predicated region
    $region42: #{conv3lin1_forward.1} parent=1 // pred_check
      _
    $region43: #{conv3lin1_forward.1} parent=1 // pred_check_branch
      %80 = sbr.rel (0) target = $region45
    $region44: #{conv3lin1_forward.1} parent=1 // pred_region
      %81 = dma.done [#allocation6], 32768
    $region45: #{conv3lin1_forward.1} parent=1 // pred_fallthru
      _
    // Predicated region
    $region46: #{conv3lin1_forward.1} parent=1 // pred_check
      _
    $region47: #{conv3lin1_forward.1} parent=1 // pred_check_branch
      %83 = sbr.rel (0) target = $region49
    $region48: #{conv3lin1_forward.1} parent=1 // pred_region
      %84 = dma.done [#allocation6], 16384
    $region49: #{conv3lin1_forward.1} parent=1 // pred_fallthru
      _
    // Predicated region
    $region50: #{conv3lin1_forward.1} parent=1 // pred_check
      _
    $region51: #{conv3lin1_forward.1} parent=1 // pred_check_branch
      %86 = sbr.rel (0) target = $region53
    $region52: #{conv3lin1_forward.1} parent=1 // pred_region
      %87 = dma.done [#allocation9], 2048
    $region53: #{conv3lin1_forward.1} parent=1 // pred_fallthru
      _
    %v89 = vld [vmem:[%s0] sm:$0xf]
    %v92 = vunpack.c.l.s4 1983009808
    %v93 = vunpack.c.0.s8 %v92
    %v94 = vlaneseq
    %v95 = vshrl.u32 %v94, 7
    %v96 = vsub.s32 %v93, %v95
    %v97 = vrot.slane %v89, %v96
    %v98 = vcombine.high %v97, %v97
    %v101 = vpack.c.bf16 %v97, %v97
    %v102 = vpack.c.bf16 %v98, %v98
    %v103 = vld [vmem:[#allocation2] sm:$0xff]
    %v104 = vld [vmem:[#allocation2 + $0x8] sm:$0xff]
    %v105 = vld [vmem:[#allocation2 + $0x10] sm:$0xff]
    %v106 = vld [vmem:[#allocation2 + $0x18] sm:$0xff]
    %v107 = vld [vmem:[#allocation2 + $0x20] sm:$0xff]
    %v108 = vld [vmem:[#allocation2 + $0x28] sm:$0xff]
    %v109 = vld [vmem:[#allocation2 + $0x30] sm:$0xff]
    %v110 = vld [vmem:[#allocation2 + $0x38] sm:$0xff]
    %v111 = vld [vmem:[#allocation2 + $0x40] sm:$0xff]
    %v112 = vld [vmem:[#allocation2 + $0x48] sm:$0xff]
    %v113 = vld [vmem:[#allocation2 + $0x50] sm:$0xff]
    %v114 = vld [vmem:[#allocation2 + $0x58] sm:$0xff]
    %v115 = vld [vmem:[#allocation2 + $0x60] sm:$0xff]
    %v116 = vld [vmem:[#allocation2 + $0x68] sm:$0xff]
    %v117 = vld [vmem:[#allocation2 + $0x70] sm:$0xff]
    %v118 = vld [vmem:[#allocation2 + $0x78] sm:$0xff]
    %v119 = vld [vmem:[#allocation2 + $0x80] sm:$0xff]
    %v120 = vld [vmem:[#allocation2 + $0x88] sm:$0xff]
    %v121 = vld [vmem:[#allocation2 + $0x90] sm:$0xff]
    %v122 = vld [vmem:[#allocation2 + $0x98] sm:$0xff]
    %v123 = vld [vmem:[#allocation2 + $0xa0] sm:$0xff]
    %v124 = vld [vmem:[#allocation2 + $0xa8] sm:$0xff]
    %v125 = vld [vmem:[#allocation2 + $0xb0] sm:$0xff]
    %v126 = vld [vmem:[#allocation2 + $0xb8] sm:$0xff]
    %v127 = vld [vmem:[#allocation2 + $0xc0] sm:$0xff]
    %v128 = vld [vmem:[#allocation2 + $0xc8] sm:$0xff]
    %v129 = vld [vmem:[#allocation2 + $0xd0] sm:$0xff]
    %v130 = vld [vmem:[#allocation2 + $0xd8] sm:$0xff]
    %v131 = vld [vmem:[#allocation2 + $0xe0] sm:$0xff]
    %v132 = vld [vmem:[#allocation2 + $0xe8] sm:$0xff]
    %v133 = vld [vmem:[#allocation2 + $0xf0] sm:$0xff]
    %v134 = vld [vmem:[#allocation2 + $0xf8] sm:$0xff]
    %v135 = vld [vmem:[#allocation2 + $0x100] sm:$0xff]
    %v136 = vld [vmem:[#allocation2 + $0x108] sm:$0xff]
    %v137 = vld [vmem:[#allocation2 + $0x110] sm:$0xff]
    %v138 = vld [vmem:[#allocation2 + $0x118] sm:$0xff]
    %v139 = vld [vmem:[#allocation2 + $0x120] sm:$0xff]
    %v140 = vld [vmem:[#allocation2 + $0x128] sm:$0xff]
    %v141 = vld [vmem:[#allocation2 + $0x130] sm:$0xff]
    %v142 = vld [vmem:[#allocation2 + $0x138] sm:$0xff]
    %v143 = vld [vmem:[#allocation2 + $0x140] sm:$0xff]
    %v144 = vld [vmem:[#allocation2 + $0x148] sm:$0xff]
    %v145 = vld [vmem:[#allocation2 + $0x150] sm:$0xff]
    %v146 = vld [vmem:[#allocation2 + $0x158] sm:$0xff]
    %v147 = vld [vmem:[#allocation2 + $0x160] sm:$0xff]
    %v148 = vld [vmem:[#allocation2 + $0x168] sm:$0xff]
    %v149 = vld [vmem:[#allocation2 + $0x170] sm:$0xff]
    %v150 = vld [vmem:[#allocation2 + $0x178] sm:$0xff]
    %v151 = vld [vmem:[#allocation2 + $0x180] sm:$0xff]
    %v152 = vld [vmem:[#allocation2 + $0x188] sm:$0xff]
    %v153 = vld [vmem:[#allocation2 + $0x190] sm:$0xff]
    %v154 = vld [vmem:[#allocation2 + $0x198] sm:$0xff]
    %v155 = vld [vmem:[#allocation2 + $0x1a0] sm:$0xff]
    %v156 = vld [vmem:[#allocation2 + $0x1a8] sm:$0xff]
    %v157 = vld [vmem:[#allocation2 + $0x1b0] sm:$0xff]
    %v158 = vld [vmem:[#allocation2 + $0x1b8] sm:$0xff]
    %v159 = vld [vmem:[#allocation2 + $0x1c0] sm:$0xff]
    %v160 = vld [vmem:[#allocation2 + $0x1c8] sm:$0xff]
    %v161 = vld [vmem:[#allocation2 + $0x1d0] sm:$0xff]
    %v162 = vld [vmem:[#allocation2 + $0x1d8] sm:$0xff]
    %v163 = vld [vmem:[#allocation2 + $0x1e0] sm:$0xff]
    %v164 = vld [vmem:[#allocation2 + $0x1e8] sm:$0xff]
    %v165 = vld [vmem:[#allocation2 + $0x1f0] sm:$0xff]
    %v166 = vld [vmem:[#allocation2 + $0x1f8] sm:$0xff]
    %v167 = vld [vmem:[#allocation2 + $0x200] sm:$0xff]
    %v168 = vld [vmem:[#allocation2 + $0x208] sm:$0xff]
    %v169 = vld [vmem:[#allocation2 + $0x210] sm:$0xff]
    %v170 = vld [vmem:[#allocation2 + $0x218] sm:$0xff]
    %v171 = vld [vmem:[#allocation2 + $0x220] sm:$0xff]
    %v172 = vld [vmem:[#allocation2 + $0x228] sm:$0xff]
    %v173 = vld [vmem:[#allocation2 + $0x230] sm:$0xff]
    %v174 = vld [vmem:[#allocation2 + $0x238] sm:$0xff]
    %v175 = vld [vmem:[#allocation2 + $0x240] sm:$0xff]
    %v176 = vld [vmem:[#allocation2 + $0x248] sm:$0xff]
    %v177 = vld [vmem:[#allocation2 + $0x250] sm:$0xff]
    %v178 = vld [vmem:[#allocation2 + $0x258] sm:$0xff]
    %v179 = vld [vmem:[#allocation2 + $0x260] sm:$0xff]
    %v180 = vld [vmem:[#allocation2 + $0x268] sm:$0xff]
    %v181 = vld [vmem:[#allocation2 + $0x270] sm:$0xff]
    %v182 = vld [vmem:[#allocation2 + $0x278] sm:$0xff]
    %v183 = vld [vmem:[#allocation2 + $0x280] sm:$0xff]
    %v184 = vld [vmem:[#allocation2 + $0x288] sm:$0xff]
    %v185 = vld [vmem:[#allocation2 + $0x290] sm:$0xff]
    %v186 = vld [vmem:[#allocation2 + $0x298] sm:$0xff]
    %v187 = vld [vmem:[#allocation2 + $0x2a0] sm:$0xff]
    %v188 = vld [vmem:[#allocation2 + $0x2a8] sm:$0xff]
    %v189 = vld [vmem:[#allocation2 + $0x2b0] sm:$0xff]
    %v190 = vld [vmem:[#allocation2 + $0x2b8] sm:$0xff]
    %v191 = vld [vmem:[#allocation2 + $0x2c0] sm:$0xff]
    %v192 = vld [vmem:[#allocation2 + $0x2c8] sm:$0xff]
    %v193 = vld [vmem:[#allocation2 + $0x2d0] sm:$0xff]
    %v194 = vld [vmem:[#allocation2 + $0x2d8] sm:$0xff]
    %v195 = vld [vmem:[#allocation2 + $0x2e0] sm:$0xff]
    %v196 = vld [vmem:[#allocation2 + $0x2e8] sm:$0xff]
    %v197 = vld [vmem:[#allocation2 + $0x2f0] sm:$0xff]
    %v198 = vld [vmem:[#allocation2 + $0x2f8] sm:$0xff]
    %v199 = vld [vmem:[#allocation2 + $0x300] sm:$0xff]
    %v200 = vld [vmem:[#allocation2 + $0x308] sm:$0xff]
    %v201 = vld [vmem:[#allocation2 + $0x310] sm:$0xff]
    %v202 = vld [vmem:[#allocation2 + $0x318] sm:$0xff]
    %v203 = vld [vmem:[#allocation2 + $0x320] sm:$0xff]
    %v204 = vld [vmem:[#allocation2 + $0x328] sm:$0xff]
    %v205 = vld [vmem:[#allocation2 + $0x330] sm:$0xff]
    %v206 = vld [vmem:[#allocation2 + $0x338] sm:$0xff]
    %v207 = vld [vmem:[#allocation2 + $0x340] sm:$0xff]
    %v208 = vld [vmem:[#allocation2 + $0x348] sm:$0xff]
    %v209 = vld [vmem:[#allocation2 + $0x350] sm:$0xff]
    %v210 = vld [vmem:[#allocation2 + $0x358] sm:$0xff]
    %v211 = vld [vmem:[#allocation2 + $0x360] sm:$0xff]
    %v212 = vld [vmem:[#allocation2 + $0x368] sm:$0xff]
    %v213 = vld [vmem:[#allocation2 + $0x370] sm:$0xff]
    %v214 = vld [vmem:[#allocation2 + $0x378] sm:$0xff]
    %v215 = vld [vmem:[#allocation2 + $0x380] sm:$0xff]
    %v216 = vld [vmem:[#allocation2 + $0x388] sm:$0xff]
    %v217 = vld [vmem:[#allocation2 + $0x390] sm:$0xff]
    %v218 = vld [vmem:[#allocation2 + $0x398] sm:$0xff]
    %v219 = vld [vmem:[#allocation2 + $0x3a0] sm:$0xff]
    %v220 = vld [vmem:[#allocation2 + $0x3a8] sm:$0xff]
    %v221 = vld [vmem:[#allocation2 + $0x3b0] sm:$0xff]
    %v222 = vld [vmem:[#allocation2 + $0x3b8] sm:$0xff]
    %v223 = vld [vmem:[#allocation2 + $0x3c0] sm:$0xff]
    %v224 = vld [vmem:[#allocation2 + $0x3c8] sm:$0xff]
    %v225 = vld [vmem:[#allocation2 + $0x3d0] sm:$0xff]
    %v226 = vld [vmem:[#allocation2 + $0x3d8] sm:$0xff]
    %v227 = vld [vmem:[#allocation2 + $0x3e0] sm:$0xff]
    %v228 = vld [vmem:[#allocation2 + $0x3e8] sm:$0xff]
    %v229 = vld [vmem:[#allocation2 + $0x3f0] sm:$0xff]
    %v230 = vld [vmem:[#allocation2 + $0x3f8] sm:$0xff]
    %v231 = vld [vmem:[#allocation2 + $0x400] sm:$0xff]
    %v232 = vld [vmem:[#allocation2 + $0x408] sm:$0xff]
    %v233 = vld [vmem:[#allocation2 + $0x410] sm:$0xff]
    %v234 = vld [vmem:[#allocation2 + $0x418] sm:$0xff]
    %v235 = vld [vmem:[#allocation2 + $0x420] sm:$0xff]
    %v236 = vld [vmem:[#allocation2 + $0x428] sm:$0xff]
    %v237 = vld [vmem:[#allocation2 + $0x430] sm:$0xff]
    %v238 = vld [vmem:[#allocation2 + $0x438] sm:$0xff]
    %v239 = vld [vmem:[#allocation2 + $0x440] sm:$0xff]
    %v240 = vld [vmem:[#allocation2 + $0x448] sm:$0xff]
    %v241 = vld [vmem:[#allocation2 + $0x450] sm:$0xff]
    %v242 = vld [vmem:[#allocation2 + $0x458] sm:$0xff]
    %v243 = vld [vmem:[#allocation2 + $0x460] sm:$0xff]
    %v244 = vld [vmem:[#allocation2 + $0x468] sm:$0xff]
    %v245 = vld [vmem:[#allocation2 + $0x470] sm:$0xff]
    %v246 = vld [vmem:[#allocation2 + $0x478] sm:$0xff]
    %v247 = vld [vmem:[#allocation2 + $0x480] sm:$0xff]
    %v248 = vld [vmem:[#allocation2 + $0x488] sm:$0xff]
    %v249 = vld [vmem:[#allocation2 + $0x490] sm:$0xff]
    %v250 = vld [vmem:[#allocation2 + $0x498] sm:$0xff]
    %v251 = vld [vmem:[#allocation2 + $0x4a0] sm:$0xff]
    %v252 = vld [vmem:[#allocation2 + $0x4a8] sm:$0xff]
    %v253 = vld [vmem:[#allocation2 + $0x4b0] sm:$0xff]
    %v254 = vld [vmem:[#allocation2 + $0x4b8] sm:$0xff]
    %v255 = vld [vmem:[#allocation2 + $0x4c0] sm:$0xff]
    %v256 = vld [vmem:[#allocation2 + $0x4c8] sm:$0xff]
    %v257 = vld [vmem:[#allocation2 + $0x4d0] sm:$0xff]
    %v258 = vld [vmem:[#allocation2 + $0x4d8] sm:$0xff]
    %v259 = vld [vmem:[#allocation2 + $0x4e0] sm:$0xff]
    %v260 = vld [vmem:[#allocation2 + $0x4e8] sm:$0xff]
    %v261 = vld [vmem:[#allocation2 + $0x4f0] sm:$0xff]
    %v262 = vld [vmem:[#allocation2 + $0x4f8] sm:$0xff]
    %v263 = vld [vmem:[#allocation2 + $0x500] sm:$0xff]
    %v264 = vld [vmem:[#allocation2 + $0x508] sm:$0xff]
    %v265 = vld [vmem:[#allocation2 + $0x510] sm:$0xff]
    %v266 = vld [vmem:[#allocation2 + $0x518] sm:$0xff]
    %v267 = vld [vmem:[#allocation2 + $0x520] sm:$0xff]
    %v268 = vld [vmem:[#allocation2 + $0x528] sm:$0xff]
    %v269 = vld [vmem:[#allocation2 + $0x530] sm:$0xff]
    %v270 = vld [vmem:[#allocation2 + $0x538] sm:$0xff]
    %v271 = vld [vmem:[#allocation2 + $0x540] sm:$0xff]
    %v272 = vld [vmem:[#allocation2 + $0x548] sm:$0xff]
    %v273 = vld [vmem:[#allocation2 + $0x550] sm:$0xff]
    %v274 = vld [vmem:[#allocation2 + $0x558] sm:$0xff]
    %v275 = vld [vmem:[#allocation2 + $0x560] sm:$0xff]
    %v276 = vld [vmem:[#allocation2 + $0x568] sm:$0xff]
    %v277 = vld [vmem:[#allocation2 + $0x570] sm:$0xff]
    %v278 = vld [vmem:[#allocation2 + $0x578] sm:$0xff]
    %v279 = vld [vmem:[#allocation2 + $0x580] sm:$0xff]
    %v280 = vld [vmem:[#allocation2 + $0x588] sm:$0xff]
    %v281 = vld [vmem:[#allocation2 + $0x590] sm:$0xff]
    %v282 = vld [vmem:[#allocation2 + $0x598] sm:$0xff]
    %v283 = vld [vmem:[#allocation2 + $0x5a0] sm:$0xff]
    %v284 = vld [vmem:[#allocation2 + $0x5a8] sm:$0xff]
    %v285 = vld [vmem:[#allocation2 + $0x5b0] sm:$0xff]
    %v286 = vld [vmem:[#allocation2 + $0x5b8] sm:$0xff]
    %v287 = vld [vmem:[#allocation2 + $0x5c0] sm:$0xff]
    %v288 = vld [vmem:[#allocation2 + $0x5c8] sm:$0xff]
    %v289 = vld [vmem:[#allocation2 + $0x5d0] sm:$0xff]
    %v290 = vld [vmem:[#allocation2 + $0x5d8] sm:$0xff]
    %v291 = vld [vmem:[#allocation2 + $0x5e0] sm:$0xff]
    %v292 = vld [vmem:[#allocation2 + $0x5e8] sm:$0xff]
    %v293 = vld [vmem:[#allocation2 + $0x5f0] sm:$0xff]
    %v294 = vld [vmem:[#allocation2 + $0x5f8] sm:$0xff]
    %v295 = vld [vmem:[#allocation2 + $0x600] sm:$0xff]
    %v296 = vld [vmem:[#allocation2 + $0x608] sm:$0xff]
    %v297 = vld [vmem:[#allocation2 + $0x610] sm:$0xff]
    %v298 = vld [vmem:[#allocation2 + $0x618] sm:$0xff]
    %v299 = vld [vmem:[#allocation2 + $0x620] sm:$0xff]
    %v300 = vld [vmem:[#allocation2 + $0x628] sm:$0xff]
    %v301 = vld [vmem:[#allocation2 + $0x630] sm:$0xff]
    %v302 = vld [vmem:[#allocation2 + $0x638] sm:$0xff]
    %v303 = vld [vmem:[#allocation2 + $0x640] sm:$0xff]
    %v304 = vld [vmem:[#allocation2 + $0x648] sm:$0xff]
    %v305 = vld [vmem:[#allocation2 + $0x650] sm:$0xff]
    %v306 = vld [vmem:[#allocation2 + $0x658] sm:$0xff]
    %v307 = vld [vmem:[#allocation2 + $0x660] sm:$0xff]
    %v308 = vld [vmem:[#allocation2 + $0x668] sm:$0xff]
    %v309 = vld [vmem:[#allocation2 + $0x670] sm:$0xff]
    %v310 = vld [vmem:[#allocation2 + $0x678] sm:$0xff]
    %v311 = vld [vmem:[#allocation2 + $0x680] sm:$0xff]
    %v312 = vld [vmem:[#allocation2 + $0x688] sm:$0xff]
    %v313 = vld [vmem:[#allocation2 + $0x690] sm:$0xff]
    %v314 = vld [vmem:[#allocation2 + $0x698] sm:$0xff]
    %v315 = vld [vmem:[#allocation2 + $0x6a0] sm:$0xff]
    %v316 = vld [vmem:[#allocation2 + $0x6a8] sm:$0xff]
    %v317 = vld [vmem:[#allocation2 + $0x6b0] sm:$0xff]
    %v318 = vld [vmem:[#allocation2 + $0x6b8] sm:$0xff]
    %v319 = vld [vmem:[#allocation2 + $0x6c0] sm:$0xff]
    %v320 = vld [vmem:[#allocation2 + $0x6c8] sm:$0xff]
    %v321 = vld [vmem:[#allocation2 + $0x6d0] sm:$0xff]
    %v322 = vld [vmem:[#allocation2 + $0x6d8] sm:$0xff]
    %v323 = vld [vmem:[#allocation2 + $0x6e0] sm:$0xff]
    %v324 = vld [vmem:[#allocation2 + $0x6e8] sm:$0xff]
    %v325 = vld [vmem:[#allocation2 + $0x6f0] sm:$0xff]
    %v326 = vld [vmem:[#allocation2 + $0x6f8] sm:$0xff]
    %v327 = vld [vmem:[#allocation2 + $0x700] sm:$0xff]
    %v328 = vld [vmem:[#allocation2 + $0x708] sm:$0xff]
    %v329 = vld [vmem:[#allocation2 + $0x710] sm:$0xff]
    %v330 = vld [vmem:[#allocation2 + $0x718] sm:$0xff]
    %v331 = vld [vmem:[#allocation2 + $0x720] sm:$0xff]
    %v332 = vld [vmem:[#allocation2 + $0x728] sm:$0xff]
    %v333 = vld [vmem:[#allocation2 + $0x730] sm:$0xff]
    %v334 = vld [vmem:[#allocation2 + $0x738] sm:$0xff]
    %v335 = vld [vmem:[#allocation2 + $0x740] sm:$0xff]
    %v336 = vld [vmem:[#allocation2 + $0x748] sm:$0xff]
    %v337 = vld [vmem:[#allocation2 + $0x750] sm:$0xff]
    %v338 = vld [vmem:[#allocation2 + $0x758] sm:$0xff]
    %v339 = vld [vmem:[#allocation2 + $0x760] sm:$0xff]
    %v340 = vld [vmem:[#allocation2 + $0x768] sm:$0xff]
    %v341 = vld [vmem:[#allocation2 + $0x770] sm:$0xff]
    %v342 = vld [vmem:[#allocation2 + $0x778] sm:$0xff]
    %v343 = vld [vmem:[#allocation2 + $0x780] sm:$0xff]
    %v344 = vld [vmem:[#allocation2 + $0x788] sm:$0xff]
    %v345 = vld [vmem:[#allocation2 + $0x790] sm:$0xff]
    %v346 = vld [vmem:[#allocation2 + $0x798] sm:$0xff]
    %v347 = vld [vmem:[#allocation2 + $0x7a0] sm:$0xff]
    %v348 = vld [vmem:[#allocation2 + $0x7a8] sm:$0xff]
    %v349 = vld [vmem:[#allocation2 + $0x7b0] sm:$0xff]
    %v350 = vld [vmem:[#allocation2 + $0x7b8] sm:$0xff]
    %v351 = vld [vmem:[#allocation2 + $0x7c0] sm:$0xff]
    %v352 = vld [vmem:[#allocation2 + $0x7c8] sm:$0xff]
    %v353 = vld [vmem:[#allocation2 + $0x7d0] sm:$0xff]
    %v354 = vld [vmem:[#allocation2 + $0x7d8] sm:$0xff]
    %v355 = vld [vmem:[#allocation2 + $0x7e0] sm:$0xff]
    %v356 = vld [vmem:[#allocation2 + $0x7e8] sm:$0xff]
    %v357 = vld [vmem:[#allocation2 + $0x7f0] sm:$0xff]
    %v358 = vld [vmem:[#allocation2 + $0x7f8] sm:$0xff]
    %v615 = vunpack.c.l.b16 %v103
    %v616 = vunpack.c.h.b16 %v103
    %v617 = vunpack.c.l.b16 %v104
    %v618 = vunpack.c.h.b16 %v104
    %v619 = vunpack.c.l.b16 %v105
    %v620 = vunpack.c.h.b16 %v105
    %v621 = vunpack.c.l.b16 %v106
    %v622 = vunpack.c.h.b16 %v106
    %v623 = vunpack.c.l.b16 %v107
    %v624 = vunpack.c.h.b16 %v107
    %v625 = vunpack.c.l.b16 %v108
    %v626 = vunpack.c.h.b16 %v108
    %v627 = vunpack.c.l.b16 %v109
    %v628 = vunpack.c.h.b16 %v109
    %v629 = vunpack.c.l.b16 %v110
    %v630 = vunpack.c.h.b16 %v110
    %v631 = vunpack.c.l.b16 %v111
    %v632 = vunpack.c.h.b16 %v111
    %v633 = vunpack.c.l.b16 %v112
    %v634 = vunpack.c.h.b16 %v112
    %v635 = vunpack.c.l.b16 %v113
    %v636 = vunpack.c.h.b16 %v113
    %v637 = vunpack.c.l.b16 %v114
    %v638 = vunpack.c.h.b16 %v114
    %v639 = vunpack.c.l.b16 %v115
    %v640 = vunpack.c.h.b16 %v115
    %v641 = vunpack.c.l.b16 %v116
    %v642 = vunpack.c.h.b16 %v116
    %v643 = vunpack.c.l.b16 %v117
    %v644 = vunpack.c.h.b16 %v117
    %v645 = vunpack.c.l.b16 %v118
    %v646 = vunpack.c.h.b16 %v118
    %v647 = vunpack.c.l.b16 %v119
    %v648 = vunpack.c.h.b16 %v119
    %v649 = vunpack.c.l.b16 %v120
    %v650 = vunpack.c.h.b16 %v120
    %v651 = vunpack.c.l.b16 %v121
    %v652 = vunpack.c.h.b16 %v121
    %v653 = vunpack.c.l.b16 %v122
    %v654 = vunpack.c.h.b16 %v122
    %v655 = vunpack.c.l.b16 %v123
    %v656 = vunpack.c.h.b16 %v123
    %v657 = vunpack.c.l.b16 %v124
    %v658 = vunpack.c.h.b16 %v124
    %v659 = vunpack.c.l.b16 %v125
    %v660 = vunpack.c.h.b16 %v125
    %v661 = vunpack.c.l.b16 %v126
    %v662 = vunpack.c.h.b16 %v126
    %v663 = vunpack.c.l.b16 %v127
    %v664 = vunpack.c.h.b16 %v127
    %v665 = vunpack.c.l.b16 %v128
    %v666 = vunpack.c.h.b16 %v128
    %v667 = vunpack.c.l.b16 %v129
    %v668 = vunpack.c.h.b16 %v129
    %v669 = vunpack.c.l.b16 %v130
    %v670 = vunpack.c.h.b16 %v130
    %v671 = vunpack.c.l.b16 %v131
    %v672 = vunpack.c.h.b16 %v131
    %v673 = vunpack.c.l.b16 %v132
    %v674 = vunpack.c.h.b16 %v132
    %v675 = vunpack.c.l.b16 %v133
    %v676 = vunpack.c.h.b16 %v133
    %v677 = vunpack.c.l.b16 %v134
    %v678 = vunpack.c.h.b16 %v134
    %v679 = vunpack.c.l.b16 %v135
    %v680 = vunpack.c.h.b16 %v135
    %v681 = vunpack.c.l.b16 %v136
    %v682 = vunpack.c.h.b16 %v136
    %v683 = vunpack.c.l.b16 %v137
    %v684 = vunpack.c.h.b16 %v137
    %v685 = vunpack.c.l.b16 %v138
    %v686 = vunpack.c.h.b16 %v138
    %v687 = vunpack.c.l.b16 %v139
    %v688 = vunpack.c.h.b16 %v139
    %v689 = vunpack.c.l.b16 %v140
    %v690 = vunpack.c.h.b16 %v140
    %v691 = vunpack.c.l.b16 %v141
    %v692 = vunpack.c.h.b16 %v141
    %v693 = vunpack.c.l.b16 %v142
    %v694 = vunpack.c.h.b16 %v142
    %v695 = vunpack.c.l.b16 %v143
    %v696 = vunpack.c.h.b16 %v143
    %v697 = vunpack.c.l.b16 %v144
    %v698 = vunpack.c.h.b16 %v144
    %v699 = vunpack.c.l.b16 %v145
    %v700 = vunpack.c.h.b16 %v145
    %v701 = vunpack.c.l.b16 %v146
    %v702 = vunpack.c.h.b16 %v146
    %v703 = vunpack.c.l.b16 %v147
    %v704 = vunpack.c.h.b16 %v147
    %v705 = vunpack.c.l.b16 %v148
    %v706 = vunpack.c.h.b16 %v148
    %v707 = vunpack.c.l.b16 %v149
    %v708 = vunpack.c.h.b16 %v149
    %v709 = vunpack.c.l.b16 %v150
    %v710 = vunpack.c.h.b16 %v150
    %v711 = vunpack.c.l.b16 %v151
    %v712 = vunpack.c.h.b16 %v151
    %v713 = vunpack.c.l.b16 %v152
    %v714 = vunpack.c.h.b16 %v152
    %v715 = vunpack.c.l.b16 %v153
    %v716 = vunpack.c.h.b16 %v153
    %v717 = vunpack.c.l.b16 %v154
    %v718 = vunpack.c.h.b16 %v154
    %v719 = vunpack.c.l.b16 %v155
    %v720 = vunpack.c.h.b16 %v155
    %v721 = vunpack.c.l.b16 %v156
    %v722 = vunpack.c.h.b16 %v156
    %v723 = vunpack.c.l.b16 %v157
    %v724 = vunpack.c.h.b16 %v157
    %v725 = vunpack.c.l.b16 %v158
    %v726 = vunpack.c.h.b16 %v158
    %v727 = vunpack.c.l.b16 %v159
    %v728 = vunpack.c.h.b16 %v159
    %v729 = vunpack.c.l.b16 %v160
    %v730 = vunpack.c.h.b16 %v160
    %v731 = vunpack.c.l.b16 %v161
    %v732 = vunpack.c.h.b16 %v161
    %v733 = vunpack.c.l.b16 %v162
    %v734 = vunpack.c.h.b16 %v162
    %v735 = vunpack.c.l.b16 %v163
    %v736 = vunpack.c.h.b16 %v163
    %v737 = vunpack.c.l.b16 %v164
    %v738 = vunpack.c.h.b16 %v164
    %v739 = vunpack.c.l.b16 %v165
    %v740 = vunpack.c.h.b16 %v165
    %v741 = vunpack.c.l.b16 %v166
    %v742 = vunpack.c.h.b16 %v166
    %v743 = vunpack.c.l.b16 %v167
    %v744 = vunpack.c.h.b16 %v167
    %v745 = vunpack.c.l.b16 %v168
    %v746 = vunpack.c.h.b16 %v168
    %v747 = vunpack.c.l.b16 %v169
    %v748 = vunpack.c.h.b16 %v169
    %v749 = vunpack.c.l.b16 %v170
    %v750 = vunpack.c.h.b16 %v170
    %v751 = vunpack.c.l.b16 %v171
    %v752 = vunpack.c.h.b16 %v171
    %v753 = vunpack.c.l.b16 %v172
    %v754 = vunpack.c.h.b16 %v172
    %v755 = vunpack.c.l.b16 %v173
    %v756 = vunpack.c.h.b16 %v173
    %v757 = vunpack.c.l.b16 %v174
    %v758 = vunpack.c.h.b16 %v174
    %v759 = vunpack.c.l.b16 %v175
    %v760 = vunpack.c.h.b16 %v175
    %v761 = vunpack.c.l.b16 %v176
    %v762 = vunpack.c.h.b16 %v176
    %v763 = vunpack.c.l.b16 %v177
    %v764 = vunpack.c.h.b16 %v177
    %v765 = vunpack.c.l.b16 %v178
    %v766 = vunpack.c.h.b16 %v178
    %v767 = vunpack.c.l.b16 %v179
    %v768 = vunpack.c.h.b16 %v179
    %v769 = vunpack.c.l.b16 %v180
    %v770 = vunpack.c.h.b16 %v180
    %v771 = vunpack.c.l.b16 %v181
    %v772 = vunpack.c.h.b16 %v181
    %v773 = vunpack.c.l.b16 %v182
    %v774 = vunpack.c.h.b16 %v182
    %v775 = vunpack.c.l.b16 %v183
    %v776 = vunpack.c.h.b16 %v183
    %v777 = vunpack.c.l.b16 %v184
    %v778 = vunpack.c.h.b16 %v184
    %v779 = vunpack.c.l.b16 %v185
    %v780 = vunpack.c.h.b16 %v185
    %v781 = vunpack.c.l.b16 %v186
    %v782 = vunpack.c.h.b16 %v186
    %v783 = vunpack.c.l.b16 %v187
    %v784 = vunpack.c.h.b16 %v187
    %v785 = vunpack.c.l.b16 %v188
    %v786 = vunpack.c.h.b16 %v188
    %v787 = vunpack.c.l.b16 %v189
    %v788 = vunpack.c.h.b16 %v189
    %v789 = vunpack.c.l.b16 %v190
    %v790 = vunpack.c.h.b16 %v190
    %v791 = vunpack.c.l.b16 %v191
    %v792 = vunpack.c.h.b16 %v191
    %v793 = vunpack.c.l.b16 %v192
    %v794 = vunpack.c.h.b16 %v192
    %v795 = vunpack.c.l.b16 %v193
    %v796 = vunpack.c.h.b16 %v193
    %v797 = vunpack.c.l.b16 %v194
    %v798 = vunpack.c.h.b16 %v194
    %v799 = vunpack.c.l.b16 %v195
    %v800 = vunpack.c.h.b16 %v195
    %v801 = vunpack.c.l.b16 %v196
    %v802 = vunpack.c.h.b16 %v196
    %v803 = vunpack.c.l.b16 %v197
    %v804 = vunpack.c.h.b16 %v197
    %v805 = vunpack.c.l.b16 %v198
    %v806 = vunpack.c.h.b16 %v198
    %v807 = vunpack.c.l.b16 %v199
    %v808 = vunpack.c.h.b16 %v199
    %v809 = vunpack.c.l.b16 %v200
    %v810 = vunpack.c.h.b16 %v200
    %v811 = vunpack.c.l.b16 %v201
    %v812 = vunpack.c.h.b16 %v201
    %v813 = vunpack.c.l.b16 %v202
    %v814 = vunpack.c.h.b16 %v202
    %v815 = vunpack.c.l.b16 %v203
    %v816 = vunpack.c.h.b16 %v203
    %v817 = vunpack.c.l.b16 %v204
    %v818 = vunpack.c.h.b16 %v204
    %v819 = vunpack.c.l.b16 %v205
    %v820 = vunpack.c.h.b16 %v205
    %v821 = vunpack.c.l.b16 %v206
    %v822 = vunpack.c.h.b16 %v206
    %v823 = vunpack.c.l.b16 %v207
    %v824 = vunpack.c.h.b16 %v207
    %v825 = vunpack.c.l.b16 %v208
    %v826 = vunpack.c.h.b16 %v208
    %v827 = vunpack.c.l.b16 %v209
    %v828 = vunpack.c.h.b16 %v209
    %v829 = vunpack.c.l.b16 %v210
    %v830 = vunpack.c.h.b16 %v210
    %v831 = vunpack.c.l.b16 %v211
    %v832 = vunpack.c.h.b16 %v211
    %v833 = vunpack.c.l.b16 %v212
    %v834 = vunpack.c.h.b16 %v212
    %v835 = vunpack.c.l.b16 %v213
    %v836 = vunpack.c.h.b16 %v213
    %v837 = vunpack.c.l.b16 %v214
    %v838 = vunpack.c.h.b16 %v214
    %v839 = vunpack.c.l.b16 %v215
    %v840 = vunpack.c.h.b16 %v215
    %v841 = vunpack.c.l.b16 %v216
    %v842 = vunpack.c.h.b16 %v216
    %v843 = vunpack.c.l.b16 %v217
    %v844 = vunpack.c.h.b16 %v217
    %v845 = vunpack.c.l.b16 %v218
    %v846 = vunpack.c.h.b16 %v218
    %v847 = vunpack.c.l.b16 %v219
    %v848 = vunpack.c.h.b16 %v219
    %v849 = vunpack.c.l.b16 %v220
    %v850 = vunpack.c.h.b16 %v220
    %v851 = vunpack.c.l.b16 %v221
    %v852 = vunpack.c.h.b16 %v221
    %v853 = vunpack.c.l.b16 %v222
    %v854 = vunpack.c.h.b16 %v222
    %v855 = vunpack.c.l.b16 %v223
    %v856 = vunpack.c.h.b16 %v223
    %v857 = vunpack.c.l.b16 %v224
    %v858 = vunpack.c.h.b16 %v224
    %v859 = vunpack.c.l.b16 %v225
    %v860 = vunpack.c.h.b16 %v225
    %v861 = vunpack.c.l.b16 %v226
    %v862 = vunpack.c.h.b16 %v226
    %v863 = vunpack.c.l.b16 %v227
    %v864 = vunpack.c.h.b16 %v227
    %v865 = vunpack.c.l.b16 %v228
    %v866 = vunpack.c.h.b16 %v228
    %v867 = vunpack.c.l.b16 %v229
    %v868 = vunpack.c.h.b16 %v229
    %v869 = vunpack.c.l.b16 %v230
    %v870 = vunpack.c.h.b16 %v230
    %v871 = vunpack.c.l.b16 %v231
    %v872 = vunpack.c.h.b16 %v231
    %v873 = vunpack.c.l.b16 %v232
    %v874 = vunpack.c.h.b16 %v232
    %v875 = vunpack.c.l.b16 %v233
    %v876 = vunpack.c.h.b16 %v233
    %v877 = vunpack.c.l.b16 %v234
    %v878 = vunpack.c.h.b16 %v234
    %v879 = vunpack.c.l.b16 %v235
    %v880 = vunpack.c.h.b16 %v235
    %v881 = vunpack.c.l.b16 %v236
    %v882 = vunpack.c.h.b16 %v236
    %v883 = vunpack.c.l.b16 %v237
    %v884 = vunpack.c.h.b16 %v237
    %v885 = vunpack.c.l.b16 %v238
    %v886 = vunpack.c.h.b16 %v238
    %v887 = vunpack.c.l.b16 %v239
    %v888 = vunpack.c.h.b16 %v239
    %v889 = vunpack.c.l.b16 %v240
    %v890 = vunpack.c.h.b16 %v240
    %v891 = vunpack.c.l.b16 %v241
    %v892 = vunpack.c.h.b16 %v241
    %v893 = vunpack.c.l.b16 %v242
    %v894 = vunpack.c.h.b16 %v242
    %v895 = vunpack.c.l.b16 %v243
    %v896 = vunpack.c.h.b16 %v243
    %v897 = vunpack.c.l.b16 %v244
    %v898 = vunpack.c.h.b16 %v244
    %v899 = vunpack.c.l.b16 %v245
    %v900 = vunpack.c.h.b16 %v245
    %v901 = vunpack.c.l.b16 %v246
    %v902 = vunpack.c.h.b16 %v246
    %v903 = vunpack.c.l.b16 %v247
    %v904 = vunpack.c.h.b16 %v247
    %v905 = vunpack.c.l.b16 %v248
    %v906 = vunpack.c.h.b16 %v248
    %v907 = vunpack.c.l.b16 %v249
    %v908 = vunpack.c.h.b16 %v249
    %v909 = vunpack.c.l.b16 %v250
    %v910 = vunpack.c.h.b16 %v250
    %v911 = vunpack.c.l.b16 %v251
    %v912 = vunpack.c.h.b16 %v251
    %v913 = vunpack.c.l.b16 %v252
    %v914 = vunpack.c.h.b16 %v252
    %v915 = vunpack.c.l.b16 %v253
    %v916 = vunpack.c.h.b16 %v253
    %v917 = vunpack.c.l.b16 %v254
    %v918 = vunpack.c.h.b16 %v254
    %v919 = vunpack.c.l.b16 %v255
    %v920 = vunpack.c.h.b16 %v255
    %v921 = vunpack.c.l.b16 %v256
    %v922 = vunpack.c.h.b16 %v256
    %v923 = vunpack.c.l.b16 %v257
    %v924 = vunpack.c.h.b16 %v257
    %v925 = vunpack.c.l.b16 %v258
    %v926 = vunpack.c.h.b16 %v258
    %v927 = vunpack.c.l.b16 %v259
    %v928 = vunpack.c.h.b16 %v259
    %v929 = vunpack.c.l.b16 %v260
    %v930 = vunpack.c.h.b16 %v260
    %v931 = vunpack.c.l.b16 %v261
    %v932 = vunpack.c.h.b16 %v261
    %v933 = vunpack.c.l.b16 %v262
    %v934 = vunpack.c.h.b16 %v262
    %v935 = vunpack.c.l.b16 %v263
    %v936 = vunpack.c.h.b16 %v263
    %v937 = vunpack.c.l.b16 %v264
    %v938 = vunpack.c.h.b16 %v264
    %v939 = vunpack.c.l.b16 %v265
    %v940 = vunpack.c.h.b16 %v265
    %v941 = vunpack.c.l.b16 %v266
    %v942 = vunpack.c.h.b16 %v266
    %v943 = vunpack.c.l.b16 %v267
    %v944 = vunpack.c.h.b16 %v267
    %v945 = vunpack.c.l.b16 %v268
    %v946 = vunpack.c.h.b16 %v268
    %v947 = vunpack.c.l.b16 %v269
    %v948 = vunpack.c.h.b16 %v269
    %v949 = vunpack.c.l.b16 %v270
    %v950 = vunpack.c.h.b16 %v270
    %v951 = vunpack.c.l.b16 %v271
    %v952 = vunpack.c.h.b16 %v271
    %v953 = vunpack.c.l.b16 %v272
    %v954 = vunpack.c.h.b16 %v272
    %v955 = vunpack.c.l.b16 %v273
    %v956 = vunpack.c.h.b16 %v273
    %v957 = vunpack.c.l.b16 %v274
    %v958 = vunpack.c.h.b16 %v274
    %v959 = vunpack.c.l.b16 %v275
    %v960 = vunpack.c.h.b16 %v275
    %v961 = vunpack.c.l.b16 %v276
    %v962 = vunpack.c.h.b16 %v276
    %v963 = vunpack.c.l.b16 %v277
    %v964 = vunpack.c.h.b16 %v277
    %v965 = vunpack.c.l.b16 %v278
    %v966 = vunpack.c.h.b16 %v278
    %v967 = vunpack.c.l.b16 %v279
    %v968 = vunpack.c.h.b16 %v279
    %v969 = vunpack.c.l.b16 %v280
    %v970 = vunpack.c.h.b16 %v280
    %v971 = vunpack.c.l.b16 %v281
    %v972 = vunpack.c.h.b16 %v281
    %v973 = vunpack.c.l.b16 %v282
    %v974 = vunpack.c.h.b16 %v282
    %v975 = vunpack.c.l.b16 %v283
    %v976 = vunpack.c.h.b16 %v283
    %v977 = vunpack.c.l.b16 %v284
    %v978 = vunpack.c.h.b16 %v284
    %v979 = vunpack.c.l.b16 %v285
    %v980 = vunpack.c.h.b16 %v285
    %v981 = vunpack.c.l.b16 %v286
    %v982 = vunpack.c.h.b16 %v286
    %v983 = vunpack.c.l.b16 %v287
    %v984 = vunpack.c.h.b16 %v287
    %v985 = vunpack.c.l.b16 %v288
    %v986 = vunpack.c.h.b16 %v288
    %v987 = vunpack.c.l.b16 %v289
    %v988 = vunpack.c.h.b16 %v289
    %v989 = vunpack.c.l.b16 %v290
    %v990 = vunpack.c.h.b16 %v290
    %v991 = vunpack.c.l.b16 %v291
    %v992 = vunpack.c.h.b16 %v291
    %v993 = vunpack.c.l.b16 %v292
    %v994 = vunpack.c.h.b16 %v292
    %v995 = vunpack.c.l.b16 %v293
    %v996 = vunpack.c.h.b16 %v293
    %v997 = vunpack.c.l.b16 %v294
    %v998 = vunpack.c.h.b16 %v294
    %v999 = vunpack.c.l.b16 %v295
    %v1000 = vunpack.c.h.b16 %v295
    %v1001 = vunpack.c.l.b16 %v296
    %v1002 = vunpack.c.h.b16 %v296
    %v1003 = vunpack.c.l.b16 %v297
    %v1004 = vunpack.c.h.b16 %v297
    %v1005 = vunpack.c.l.b16 %v298
    %v1006 = vunpack.c.h.b16 %v298
    %v1007 = vunpack.c.l.b16 %v299
    %v1008 = vunpack.c.h.b16 %v299
    %v1009 = vunpack.c.l.b16 %v300
    %v1010 = vunpack.c.h.b16 %v300
    %v1011 = vunpack.c.l.b16 %v301
    %v1012 = vunpack.c.h.b16 %v301
    %v1013 = vunpack.c.l.b16 %v302
    %v1014 = vunpack.c.h.b16 %v302
    %v1015 = vunpack.c.l.b16 %v303
    %v1016 = vunpack.c.h.b16 %v303
    %v1017 = vunpack.c.l.b16 %v304
    %v1018 = vunpack.c.h.b16 %v304
    %v1019 = vunpack.c.l.b16 %v305
    %v1020 = vunpack.c.h.b16 %v305
    %v1021 = vunpack.c.l.b16 %v306
    %v1022 = vunpack.c.h.b16 %v306
    %v1023 = vunpack.c.l.b16 %v307
    %v1024 = vunpack.c.h.b16 %v307
    %v1025 = vunpack.c.l.b16 %v308
    %v1026 = vunpack.c.h.b16 %v308
    %v1027 = vunpack.c.l.b16 %v309
    %v1028 = vunpack.c.h.b16 %v309
    %v1029 = vunpack.c.l.b16 %v310
    %v1030 = vunpack.c.h.b16 %v310
    %v1031 = vunpack.c.l.b16 %v311
    %v1032 = vunpack.c.h.b16 %v311
    %v1033 = vunpack.c.l.b16 %v312
    %v1034 = vunpack.c.h.b16 %v312
    %v1035 = vunpack.c.l.b16 %v313
    %v1036 = vunpack.c.h.b16 %v313
    %v1037 = vunpack.c.l.b16 %v314
    %v1038 = vunpack.c.h.b16 %v314
    %v1039 = vunpack.c.l.b16 %v315
    %v1040 = vunpack.c.h.b16 %v315
    %v1041 = vunpack.c.l.b16 %v316
    %v1042 = vunpack.c.h.b16 %v316
    %v1043 = vunpack.c.l.b16 %v317
    %v1044 = vunpack.c.h.b16 %v317
    %v1045 = vunpack.c.l.b16 %v318
    %v1046 = vunpack.c.h.b16 %v318
    %v1047 = vunpack.c.l.b16 %v319
    %v1048 = vunpack.c.h.b16 %v319
    %v1049 = vunpack.c.l.b16 %v320
    %v1050 = vunpack.c.h.b16 %v320
    %v1051 = vunpack.c.l.b16 %v321
    %v1052 = vunpack.c.h.b16 %v321
    %v1053 = vunpack.c.l.b16 %v322
    %v1054 = vunpack.c.h.b16 %v322
    %v1055 = vunpack.c.l.b16 %v323
    %v1056 = vunpack.c.h.b16 %v323
    %v1057 = vunpack.c.l.b16 %v324
    %v1058 = vunpack.c.h.b16 %v324
    %v1059 = vunpack.c.l.b16 %v325
    %v1060 = vunpack.c.h.b16 %v325
    %v1061 = vunpack.c.l.b16 %v326
    %v1062 = vunpack.c.h.b16 %v326
    %v1063 = vunpack.c.l.b16 %v327
    %v1064 = vunpack.c.h.b16 %v327
    %v1065 = vunpack.c.l.b16 %v328
    %v1066 = vunpack.c.h.b16 %v328
    %v1067 = vunpack.c.l.b16 %v329
    %v1068 = vunpack.c.h.b16 %v329
    %v1069 = vunpack.c.l.b16 %v330
    %v1070 = vunpack.c.h.b16 %v330
    %v1071 = vunpack.c.l.b16 %v331
    %v1072 = vunpack.c.h.b16 %v331
    %v1073 = vunpack.c.l.b16 %v332
    %v1074 = vunpack.c.h.b16 %v332
    %v1075 = vunpack.c.l.b16 %v333
    %v1076 = vunpack.c.h.b16 %v333
    %v1077 = vunpack.c.l.b16 %v334
    %v1078 = vunpack.c.h.b16 %v334
    %v1079 = vunpack.c.l.b16 %v335
    %v1080 = vunpack.c.h.b16 %v335
    %v1081 = vunpack.c.l.b16 %v336
    %v1082 = vunpack.c.h.b16 %v336
    %v1083 = vunpack.c.l.b16 %v337
    %v1084 = vunpack.c.h.b16 %v337
    %v1085 = vunpack.c.l.b16 %v338
    %v1086 = vunpack.c.h.b16 %v338
    %v1087 = vunpack.c.l.b16 %v339
    %v1088 = vunpack.c.h.b16 %v339
    %v1089 = vunpack.c.l.b16 %v340
    %v1090 = vunpack.c.h.b16 %v340
    %v1091 = vunpack.c.l.b16 %v341
    %v1092 = vunpack.c.h.b16 %v341
    %v1093 = vunpack.c.l.b16 %v342
    %v1094 = vunpack.c.h.b16 %v342
    %v1095 = vunpack.c.l.b16 %v343
    %v1096 = vunpack.c.h.b16 %v343
    %v1097 = vunpack.c.l.b16 %v344
    %v1098 = vunpack.c.h.b16 %v344
    %v1099 = vunpack.c.l.b16 %v345
    %v1100 = vunpack.c.h.b16 %v345
    %v1101 = vunpack.c.l.b16 %v346
    %v1102 = vunpack.c.h.b16 %v346
    %v1103 = vunpack.c.l.b16 %v347
    %v1104 = vunpack.c.h.b16 %v347
    %v1105 = vunpack.c.l.b16 %v348
    %v1106 = vunpack.c.h.b16 %v348
    %v1107 = vunpack.c.l.b16 %v349
    %v1108 = vunpack.c.h.b16 %v349
    %v1109 = vunpack.c.l.b16 %v350
    %v1110 = vunpack.c.h.b16 %v350
    %v1111 = vunpack.c.l.b16 %v351
    %v1112 = vunpack.c.h.b16 %v351
    %v1113 = vunpack.c.l.b16 %v352
    %v1114 = vunpack.c.h.b16 %v352
    %v1115 = vunpack.c.l.b16 %v353
    %v1116 = vunpack.c.h.b16 %v353
    %v1117 = vunpack.c.l.b16 %v354
    %v1118 = vunpack.c.h.b16 %v354
    %v1119 = vunpack.c.l.b16 %v355
    %v1120 = vunpack.c.h.b16 %v355
    %v1121 = vunpack.c.l.b16 %v356
    %v1122 = vunpack.c.h.b16 %v356
    %v1123 = vunpack.c.l.b16 %v357
    %v1124 = vunpack.c.h.b16 %v357
    %v1125 = vunpack.c.l.b16 %v358
    %v1126 = vunpack.c.h.b16 %v358
    %v1127 = vpack.c.b16 %v631, %v615
    %v1128 = vpack.c.b16 %v632, %v616
    %v1129 = vpack.c.b16 %v633, %v617
    %v1130 = vpack.c.b16 %v634, %v618
    %v1131 = vpack.c.b16 %v635, %v619
    %v1132 = vpack.c.b16 %v636, %v620
    %v1133 = vpack.c.b16 %v637, %v621
    %v1134 = vpack.c.b16 %v638, %v622
    %v1135 = vpack.c.b16 %v639, %v623
    %v1136 = vpack.c.b16 %v640, %v624
    %v1137 = vpack.c.b16 %v641, %v625
    %v1138 = vpack.c.b16 %v642, %v626
    %v1139 = vpack.c.b16 %v643, %v627
    %v1140 = vpack.c.b16 %v644, %v628
    %v1141 = vpack.c.b16 %v645, %v629
    %v1142 = vpack.c.b16 %v646, %v630
    %v1143 = vpack.c.b16 %v663, %v647
    %v1144 = vpack.c.b16 %v664, %v648
    %v1145 = vpack.c.b16 %v665, %v649
    %v1146 = vpack.c.b16 %v666, %v650
    %v1147 = vpack.c.b16 %v667, %v651
    %v1148 = vpack.c.b16 %v668, %v652
    %v1149 = vpack.c.b16 %v669, %v653
    %v1150 = vpack.c.b16 %v670, %v654
    %v1151 = vpack.c.b16 %v671, %v655
    %v1152 = vpack.c.b16 %v672, %v656
    %v1153 = vpack.c.b16 %v673, %v657
    %v1154 = vpack.c.b16 %v674, %v658
    %v1155 = vpack.c.b16 %v675, %v659
    %v1156 = vpack.c.b16 %v676, %v660
    %v1157 = vpack.c.b16 %v677, %v661
    %v1158 = vpack.c.b16 %v678, %v662
    %v1159 = vpack.c.b16 %v695, %v679
    %v1160 = vpack.c.b16 %v696, %v680
    %v1161 = vpack.c.b16 %v697, %v681
    %v1162 = vpack.c.b16 %v698, %v682
    %v1163 = vpack.c.b16 %v699, %v683
    %v1164 = vpack.c.b16 %v700, %v684
    %v1165 = vpack.c.b16 %v701, %v685
    %v1166 = vpack.c.b16 %v702, %v686
    %v1167 = vpack.c.b16 %v703, %v687
    %v1168 = vpack.c.b16 %v704, %v688
    %v1169 = vpack.c.b16 %v705, %v689
    %v1170 = vpack.c.b16 %v706, %v690
    %v1171 = vpack.c.b16 %v707, %v691
    %v1172 = vpack.c.b16 %v708, %v692
    %v1173 = vpack.c.b16 %v709, %v693
    %v1174 = vpack.c.b16 %v710, %v694
    %v1175 = vpack.c.b16 %v727, %v711
    %v1176 = vpack.c.b16 %v728, %v712
    %v1177 = vpack.c.b16 %v729, %v713
    %v1178 = vpack.c.b16 %v730, %v714
    %v1179 = vpack.c.b16 %v731, %v715
    %v1180 = vpack.c.b16 %v732, %v716
    %v1181 = vpack.c.b16 %v733, %v717
    %v1182 = vpack.c.b16 %v734, %v718
    %v1183 = vpack.c.b16 %v735, %v719
    %v1184 = vpack.c.b16 %v736, %v720
    %v1185 = vpack.c.b16 %v737, %v721
    %v1186 = vpack.c.b16 %v738, %v722
    %v1187 = vpack.c.b16 %v739, %v723
    %v1188 = vpack.c.b16 %v740, %v724
    %v1189 = vpack.c.b16 %v741, %v725
    %v1190 = vpack.c.b16 %v742, %v726
    %v1191 = vpack.c.b16 %v759, %v743
    %v1192 = vpack.c.b16 %v760, %v744
    %v1193 = vpack.c.b16 %v761, %v745
    %v1194 = vpack.c.b16 %v762, %v746
    %v1195 = vpack.c.b16 %v763, %v747
    %v1196 = vpack.c.b16 %v764, %v748
    %v1197 = vpack.c.b16 %v765, %v749
    %v1198 = vpack.c.b16 %v766, %v750
    %v1199 = vpack.c.b16 %v767, %v751
    %v1200 = vpack.c.b16 %v768, %v752
    %v1201 = vpack.c.b16 %v769, %v753
    %v1202 = vpack.c.b16 %v770, %v754
    %v1203 = vpack.c.b16 %v771, %v755
    %v1204 = vpack.c.b16 %v772, %v756
    %v1205 = vpack.c.b16 %v773, %v757
    %v1206 = vpack.c.b16 %v774, %v758
    %v1207 = vpack.c.b16 %v791, %v775
    %v1208 = vpack.c.b16 %v792, %v776
    %v1209 = vpack.c.b16 %v793, %v777
    %v1210 = vpack.c.b16 %v794, %v778
    %v1211 = vpack.c.b16 %v795, %v779
    %v1212 = vpack.c.b16 %v796, %v780
    %v1213 = vpack.c.b16 %v797, %v781
    %v1214 = vpack.c.b16 %v798, %v782
    %v1215 = vpack.c.b16 %v799, %v783
    %v1216 = vpack.c.b16 %v800, %v784
    %v1217 = vpack.c.b16 %v801, %v785
    %v1218 = vpack.c.b16 %v802, %v786
    %v1219 = vpack.c.b16 %v803, %v787
    %v1220 = vpack.c.b16 %v804, %v788
    %v1221 = vpack.c.b16 %v805, %v789
    %v1222 = vpack.c.b16 %v806, %v790
    %v1223 = vpack.c.b16 %v823, %v807
    %v1224 = vpack.c.b16 %v824, %v808
    %v1225 = vpack.c.b16 %v825, %v809
    %v1226 = vpack.c.b16 %v826, %v810
    %v1227 = vpack.c.b16 %v827, %v811
    %v1228 = vpack.c.b16 %v828, %v812
    %v1229 = vpack.c.b16 %v829, %v813
    %v1230 = vpack.c.b16 %v830, %v814
    %v1231 = vpack.c.b16 %v831, %v815
    %v1232 = vpack.c.b16 %v832, %v816
    %v1233 = vpack.c.b16 %v833, %v817
    %v1234 = vpack.c.b16 %v834, %v818
    %v1235 = vpack.c.b16 %v835, %v819
    %v1236 = vpack.c.b16 %v836, %v820
    %v1237 = vpack.c.b16 %v837, %v821
    %v1238 = vpack.c.b16 %v838, %v822
    %v1239 = vpack.c.b16 %v855, %v839
    %v1240 = vpack.c.b16 %v856, %v840
    %v1241 = vpack.c.b16 %v857, %v841
    %v1242 = vpack.c.b16 %v858, %v842
    %v1243 = vpack.c.b16 %v859, %v843
    %v1244 = vpack.c.b16 %v860, %v844
    %v1245 = vpack.c.b16 %v861, %v845
    %v1246 = vpack.c.b16 %v862, %v846
    %v1247 = vpack.c.b16 %v863, %v847
    %v1248 = vpack.c.b16 %v864, %v848
    %v1249 = vpack.c.b16 %v865, %v849
    %v1250 = vpack.c.b16 %v866, %v850
    %v1251 = vpack.c.b16 %v867, %v851
    %v1252 = vpack.c.b16 %v868, %v852
    %v1253 = vpack.c.b16 %v869, %v853
    %v1254 = vpack.c.b16 %v870, %v854
    %v1255 = vpack.c.b16 %v887, %v871
    %v1256 = vpack.c.b16 %v888, %v872
    %v1257 = vpack.c.b16 %v889, %v873
    %v1258 = vpack.c.b16 %v890, %v874
    %v1259 = vpack.c.b16 %v891, %v875
    %v1260 = vpack.c.b16 %v892, %v876
    %v1261 = vpack.c.b16 %v893, %v877
    %v1262 = vpack.c.b16 %v894, %v878
    %v1263 = vpack.c.b16 %v895, %v879
    %v1264 = vpack.c.b16 %v896, %v880
    %v1265 = vpack.c.b16 %v897, %v881
    %v1266 = vpack.c.b16 %v898, %v882
    %v1267 = vpack.c.b16 %v899, %v883
    %v1268 = vpack.c.b16 %v900, %v884
    %v1269 = vpack.c.b16 %v901, %v885
    %v1270 = vpack.c.b16 %v902, %v886
    %v1271 = vpack.c.b16 %v919, %v903
    %v1272 = vpack.c.b16 %v920, %v904
    %v1273 = vpack.c.b16 %v921, %v905
    %v1274 = vpack.c.b16 %v922, %v906
    %v1275 = vpack.c.b16 %v923, %v907
    %v1276 = vpack.c.b16 %v924, %v908
    %v1277 = vpack.c.b16 %v925, %v909
    %v1278 = vpack.c.b16 %v926, %v910
    %v1279 = vpack.c.b16 %v927, %v911
    %v1280 = vpack.c.b16 %v928, %v912
    %v1281 = vpack.c.b16 %v929, %v913
    %v1282 = vpack.c.b16 %v930, %v914
    %v1283 = vpack.c.b16 %v931, %v915
    %v1284 = vpack.c.b16 %v932, %v916
    %v1285 = vpack.c.b16 %v933, %v917
    %v1286 = vpack.c.b16 %v934, %v918
    %v1287 = vpack.c.b16 %v951, %v935
    %v1288 = vpack.c.b16 %v952, %v936
    %v1289 = vpack.c.b16 %v953, %v937
    %v1290 = vpack.c.b16 %v954, %v938
    %v1291 = vpack.c.b16 %v955, %v939
    %v1292 = vpack.c.b16 %v956, %v940
    %v1293 = vpack.c.b16 %v957, %v941
    %v1294 = vpack.c.b16 %v958, %v942
    %v1295 = vpack.c.b16 %v959, %v943
    %v1296 = vpack.c.b16 %v960, %v944
    %v1297 = vpack.c.b16 %v961, %v945
    %v1298 = vpack.c.b16 %v962, %v946
    %v1299 = vpack.c.b16 %v963, %v947
    %v1300 = vpack.c.b16 %v964, %v948
    %v1301 = vpack.c.b16 %v965, %v949
    %v1302 = vpack.c.b16 %v966, %v950
    %v1303 = vpack.c.b16 %v983, %v967
    %v1304 = vpack.c.b16 %v984, %v968
    %v1305 = vpack.c.b16 %v985, %v969
    %v1306 = vpack.c.b16 %v986, %v970
    %v1307 = vpack.c.b16 %v987, %v971
    %v1308 = vpack.c.b16 %v988, %v972
    %v1309 = vpack.c.b16 %v989, %v973
    %v1310 = vpack.c.b16 %v990, %v974
    %v1311 = vpack.c.b16 %v991, %v975
    %v1312 = vpack.c.b16 %v992, %v976
    %v1313 = vpack.c.b16 %v993, %v977
    %v1314 = vpack.c.b16 %v994, %v978
    %v1315 = vpack.c.b16 %v995, %v979
    %v1316 = vpack.c.b16 %v996, %v980
    %v1317 = vpack.c.b16 %v997, %v981
    %v1318 = vpack.c.b16 %v998, %v982
    %v1319 = vpack.c.b16 %v1015, %v999
    %v1320 = vpack.c.b16 %v1016, %v1000
    %v1321 = vpack.c.b16 %v1017, %v1001
    %v1322 = vpack.c.b16 %v1018, %v1002
    %v1323 = vpack.c.b16 %v1019, %v1003
    %v1324 = vpack.c.b16 %v1020, %v1004
    %v1325 = vpack.c.b16 %v1021, %v1005
    %v1326 = vpack.c.b16 %v1022, %v1006
    %v1327 = vpack.c.b16 %v1023, %v1007
    %v1328 = vpack.c.b16 %v1024, %v1008
    %v1329 = vpack.c.b16 %v1025, %v1009
    %v1330 = vpack.c.b16 %v1026, %v1010
    %v1331 = vpack.c.b16 %v1027, %v1011
    %v1332 = vpack.c.b16 %v1028, %v1012
    %v1333 = vpack.c.b16 %v1029, %v1013
    %v1334 = vpack.c.b16 %v1030, %v1014
    %v1335 = vpack.c.b16 %v1047, %v1031
    %v1336 = vpack.c.b16 %v1048, %v1032
    %v1337 = vpack.c.b16 %v1049, %v1033
    %v1338 = vpack.c.b16 %v1050, %v1034
    %v1339 = vpack.c.b16 %v1051, %v1035
    %v1340 = vpack.c.b16 %v1052, %v1036
    %v1341 = vpack.c.b16 %v1053, %v1037
    %v1342 = vpack.c.b16 %v1054, %v1038
    %v1343 = vpack.c.b16 %v1055, %v1039
    %v1344 = vpack.c.b16 %v1056, %v1040
    %v1345 = vpack.c.b16 %v1057, %v1041
    %v1346 = vpack.c.b16 %v1058, %v1042
    %v1347 = vpack.c.b16 %v1059, %v1043
    %v1348 = vpack.c.b16 %v1060, %v1044
    %v1349 = vpack.c.b16 %v1061, %v1045
    %v1350 = vpack.c.b16 %v1062, %v1046
    %v1351 = vpack.c.b16 %v1079, %v1063
    %v1352 = vpack.c.b16 %v1080, %v1064
    %v1353 = vpack.c.b16 %v1081, %v1065
    %v1354 = vpack.c.b16 %v1082, %v1066
    %v1355 = vpack.c.b16 %v1083, %v1067
    %v1356 = vpack.c.b16 %v1084, %v1068
    %v1357 = vpack.c.b16 %v1085, %v1069
    %v1358 = vpack.c.b16 %v1086, %v1070
    %v1359 = vpack.c.b16 %v1087, %v1071
    %v1360 = vpack.c.b16 %v1088, %v1072
    %v1361 = vpack.c.b16 %v1089, %v1073
    %v1362 = vpack.c.b16 %v1090, %v1074
    %v1363 = vpack.c.b16 %v1091, %v1075
    %v1364 = vpack.c.b16 %v1092, %v1076
    %v1365 = vpack.c.b16 %v1093, %v1077
    %v1366 = vpack.c.b16 %v1094, %v1078
    %v1367 = vpack.c.b16 %v1111, %v1095
    %v1368 = vpack.c.b16 %v1112, %v1096
    %v1369 = vpack.c.b16 %v1113, %v1097
    %v1370 = vpack.c.b16 %v1114, %v1098
    %v1371 = vpack.c.b16 %v1115, %v1099
    %v1372 = vpack.c.b16 %v1116, %v1100
    %v1373 = vpack.c.b16 %v1117, %v1101
    %v1374 = vpack.c.b16 %v1118, %v1102
    %v1375 = vpack.c.b16 %v1119, %v1103
    %v1376 = vpack.c.b16 %v1120, %v1104
    %v1377 = vpack.c.b16 %v1121, %v1105
    %v1378 = vpack.c.b16 %v1122, %v1106
    %v1379 = vpack.c.b16 %v1123, %v1107
    %v1380 = vpack.c.b16 %v1124, %v1108
    %v1381 = vpack.c.b16 %v1125, %v1109
    %v1382 = vpack.c.b16 %v1126, %v1110
    %1639 = vmatprep.subr.bf16.mxu0 %v1128
    %1640 = vmatpush1.bf16.msra.mxu0 %v1127
    %1641 = vmatprep.subr.bf16.mxu0 %v1144
    %1642 = vmatpush1.bf16.msra.mxu0 %v1143
    %1643 = vmatprep.subr.bf16.mxu0 %v1160
    %1644 = vmatpush1.bf16.msra.mxu0 %v1159
    %1645 = vmatprep.subr.bf16.mxu0 %v1176
    %1646 = vmatpush1.bf16.msra.mxu0 %v1175
    %1647 = vmatprep.subr.bf16.mxu0 %v1192
    %1648 = vmatpush1.bf16.msra.mxu0 %v1191
    %1649 = vmatprep.subr.bf16.mxu0 %v1208
    %1650 = vmatpush1.bf16.msra.mxu0 %v1207
    %1651 = vmatprep.subr.bf16.mxu0 %v1224
    %1652 = vmatpush1.bf16.msra.mxu0 %v1223
    %1653 = vmatprep.subr.bf16.mxu0 %v1240
    %1654 = vmatpush1.bf16.msra.mxu0 %v1239
    %1655 = vmatprep.subr.bf16.mxu0 %v1256
    %1656 = vmatpush1.bf16.msra.mxu0 %v1255
    %1657 = vmatprep.subr.bf16.mxu0 %v1272
    %1658 = vmatpush1.bf16.msra.mxu0 %v1271
    %1659 = vmatprep.subr.bf16.mxu0 %v1288
    %1660 = vmatpush1.bf16.msra.mxu0 %v1287
    %1661 = vmatprep.subr.bf16.mxu0 %v1304
    %1662 = vmatpush1.bf16.msra.mxu0 %v1303
    %1663 = vmatprep.subr.bf16.mxu0 %v1320
    %1664 = vmatpush1.bf16.msra.mxu0 %v1319
    %1665 = vmatprep.subr.bf16.mxu0 %v1336
    %1666 = vmatpush1.bf16.msra.mxu0 %v1335
    %1667 = vmatprep.subr.bf16.mxu0 %v1352
    %1668 = vmatpush1.bf16.msra.mxu0 %v1351
    %1669 = vmatprep.subr.bf16.mxu0 %v1368
    %1670 = vmatpush1.bf16.msra.mxu0 %v1367
    %1671 = vmatprep.mubr.bf16.mxu0 %v102
    %1672 = vmatmul.mubr.bf16.gmra.mrb[0].mxu0 %v101
    %v1673 = vpop.f32.mrb[0].mxu0
    %v1674 = vadd.f32 0.0, %v1673
    %v1675 = vpop.f32.mrb[0].mxu0
    %v1676 = vadd.f32 0.0, %v1675
    %v1677 = vpop.f32.mrb[0].mxu0
    %v1678 = vpop.f32.mrb[0].mxu0
    %1679 = vdwg.mxu0
    %1680 = vmatprep.subr.bf16.mxu0 %v1130
    %1681 = vmatpush1.bf16.msra.mxu0 %v1129
    %1682 = vmatprep.subr.bf16.mxu0 %v1146
    %1683 = vmatpush1.bf16.msra.mxu0 %v1145
    %1684 = vmatprep.subr.bf16.mxu0 %v1162
    %1685 = vmatpush1.bf16.msra.mxu0 %v1161
    %1686 = vmatprep.subr.bf16.mxu0 %v1178
    %1687 = vmatpush1.bf16.msra.mxu0 %v1177
    %1688 = vmatprep.subr.bf16.mxu0 %v1194
    %1689 = vmatpush1.bf16.msra.mxu0 %v1193
    %1690 = vmatprep.subr.bf16.mxu0 %v1210
    %1691 = vmatpush1.bf16.msra.mxu0 %v1209
    %1692 = vmatprep.subr.bf16.mxu0 %v1226
    %1693 = vmatpush1.bf16.msra.mxu0 %v1225
    %1694 = vmatprep.subr.bf16.mxu0 %v1242
    %1695 = vmatpush1.bf16.msra.mxu0 %v1241
    %1696 = vmatprep.subr.bf16.mxu0 %v1258
    %1697 = vmatpush1.bf16.msra.mxu0 %v1257
    %1698 = vmatprep.subr.bf16.mxu0 %v1274
    %1699 = vmatpush1.bf16.msra.mxu0 %v1273
    %1700 = vmatprep.subr.bf16.mxu0 %v1290
    %1701 = vmatpush1.bf16.msra.mxu0 %v1289
    %1702 = vmatprep.subr.bf16.mxu0 %v1306
    %1703 = vmatpush1.bf16.msra.mxu0 %v1305
    %1704 = vmatprep.subr.bf16.mxu0 %v1322
    %1705 = vmatpush1.bf16.msra.mxu0 %v1321
    %1706 = vmatprep.subr.bf16.mxu0 %v1338
    %1707 = vmatpush1.bf16.msra.mxu0 %v1337
    %1708 = vmatprep.subr.bf16.mxu0 %v1354
    %1709 = vmatpush1.bf16.msra.mxu0 %v1353
    %1710 = vmatprep.subr.bf16.mxu0 %v1370
    %1711 = vmatpush1.bf16.msra.mxu0 %v1369
    %1712 = vmatprep.mubr.bf16.mxu0 %v102
    %1713 = vmatmul.mubr.bf16.gmra.mrb[0].mxu0 %v101
    %v1714 = vpop.f32.mrb[0].mxu0
    %v1715 = vadd.f32 0.0, %v1714
    %v1716 = vpop.f32.mrb[0].mxu0
    %v1717 = vadd.f32 0.0, %v1716
    %v1718 = vpop.f32.mrb[0].mxu0
    %v1719 = vpop.f32.mrb[0].mxu0
    %1720 = vdwg.mxu0
    %1721 = vmatprep.subr.bf16.mxu0 %v1132
    %1722 = vmatpush1.bf16.msra.mxu0 %v1131
    %1723 = vmatprep.subr.bf16.mxu0 %v1148
    %1724 = vmatpush1.bf16.msra.mxu0 %v1147
    %1725 = vmatprep.subr.bf16.mxu0 %v1164
    %1726 = vmatpush1.bf16.msra.mxu0 %v1163
    %1727 = vmatprep.subr.bf16.mxu0 %v1180
    %1728 = vmatpush1.bf16.msra.mxu0 %v1179
    %1729 = vmatprep.subr.bf16.mxu0 %v1196
    %1730 = vmatpush1.bf16.msra.mxu0 %v1195
    %1731 = vmatprep.subr.bf16.mxu0 %v1212
    %1732 = vmatpush1.bf16.msra.mxu0 %v1211
    %1733 = vmatprep.subr.bf16.mxu0 %v1228
    %1734 = vmatpush1.bf16.msra.mxu0 %v1227
    %1735 = vmatprep.subr.bf16.mxu0 %v1244
    %1736 = vmatpush1.bf16.msra.mxu0 %v1243
    %1737 = vmatprep.subr.bf16.mxu0 %v1260
    %1738 = vmatpush1.bf16.msra.mxu0 %v1259
    %1739 = vmatprep.subr.bf16.mxu0 %v1276
    %1740 = vmatpush1.bf16.msra.mxu0 %v1275
    %1741 = vmatprep.subr.bf16.mxu0 %v1292
    %1742 = vmatpush1.bf16.msra.mxu0 %v1291
    %1743 = vmatprep.subr.bf16.mxu0 %v1308
    %1744 = vmatpush1.bf16.msra.mxu0 %v1307
    %1745 = vmatprep.subr.bf16.mxu0 %v1324
    %1746 = vmatpush1.bf16.msra.mxu0 %v1323
    %1747 = vmatprep.subr.bf16.mxu0 %v1340
    %1748 = vmatpush1.bf16.msra.mxu0 %v1339
    %1749 = vmatprep.subr.bf16.mxu0 %v1356
    %1750 = vmatpush1.bf16.msra.mxu0 %v1355
    %1751 = vmatprep.subr.bf16.mxu0 %v1372
    %1752 = vmatpush1.bf16.msra.mxu0 %v1371
    %1753 = vmatprep.mubr.bf16.mxu0 %v102
    %1754 = vmatmul.mubr.bf16.gmra.mrb[0].mxu0 %v101
    %v1755 = vpop.f32.mrb[0].mxu0
    %v1756 = vadd.f32 0.0, %v1755
    %v1757 = vpop.f32.mrb[0].mxu0
    %v1758 = vadd.f32 0.0, %v1757
    %v1759 = vpop.f32.mrb[0].mxu0
    %v1760 = vpop.f32.mrb[0].mxu0
    %1761 = vdwg.mxu0
    %1762 = vmatprep.subr.bf16.mxu0 %v1134
    %1763 = vmatpush1.bf16.msra.mxu0 %v1133
    %1764 = vmatprep.subr.bf16.mxu0 %v1150
    %1765 = vmatpush1.bf16.msra.mxu0 %v1149
    %1766 = vmatprep.subr.bf16.mxu0 %v1166
    %1767 = vmatpush1.bf16.msra.mxu0 %v1165
    %1768 = vmatprep.subr.bf16.mxu0 %v1182
    %1769 = vmatpush1.bf16.msra.mxu0 %v1181
    %1770 = vmatprep.subr.bf16.mxu0 %v1198
    %1771 = vmatpush1.bf16.msra.mxu0 %v1197
    %1772 = vmatprep.subr.bf16.mxu0 %v1214
    %1773 = vmatpush1.bf16.msra.mxu0 %v1213
    %1774 = vmatprep.subr.bf16.mxu0 %v1230
    %1775 = vmatpush1.bf16.msra.mxu0 %v1229
    %1776 = vmatprep.subr.bf16.mxu0 %v1246
    %1777 = vmatpush1.bf16.msra.mxu0 %v1245
    %1778 = vmatprep.subr.bf16.mxu0 %v1262
    %1779 = vmatpush1.bf16.msra.mxu0 %v1261
    %1780 = vmatprep.subr.bf16.mxu0 %v1278
    %1781 = vmatpush1.bf16.msra.mxu0 %v1277
    %1782 = vmatprep.subr.bf16.mxu0 %v1294
    %1783 = vmatpush1.bf16.msra.mxu0 %v1293
    %1784 = vmatprep.subr.bf16.mxu0 %v1310
    %1785 = vmatpush1.bf16.msra.mxu0 %v1309
    %1786 = vmatprep.subr.bf16.mxu0 %v1326
    %1787 = vmatpush1.bf16.msra.mxu0 %v1325
    %1788 = vmatprep.subr.bf16.mxu0 %v1342
    %1789 = vmatpush1.bf16.msra.mxu0 %v1341
    %1790 = vmatprep.subr.bf16.mxu0 %v1358
    %1791 = vmatpush1.bf16.msra.mxu0 %v1357
    %1792 = vmatprep.subr.bf16.mxu0 %v1374
    %1793 = vmatpush1.bf16.msra.mxu0 %v1373
    %1794 = vmatprep.mubr.bf16.mxu0 %v102
    %1795 = vmatmul.mubr.bf16.gmra.mrb[0].mxu0 %v101
    %v1796 = vpop.f32.mrb[0].mxu0
    %v1797 = vadd.f32 0.0, %v1796
    %v1798 = vpop.f32.mrb[0].mxu0
    %v1799 = vadd.f32 0.0, %v1798
    %v1800 = vpop.f32.mrb[0].mxu0
    %v1801 = vpop.f32.mrb[0].mxu0
    %1802 = vdwg.mxu0
    %1803 = vmatprep.subr.bf16.mxu0 %v1136
    %1804 = vmatpush1.bf16.msra.mxu0 %v1135
    %1805 = vmatprep.subr.bf16.mxu0 %v1152
    %1806 = vmatpush1.bf16.msra.mxu0 %v1151
    %1807 = vmatprep.subr.bf16.mxu0 %v1168
    %1808 = vmatpush1.bf16.msra.mxu0 %v1167
    %1809 = vmatprep.subr.bf16.mxu0 %v1184
    %1810 = vmatpush1.bf16.msra.mxu0 %v1183
    %1811 = vmatprep.subr.bf16.mxu0 %v1200
    %1812 = vmatpush1.bf16.msra.mxu0 %v1199
    %1813 = vmatprep.subr.bf16.mxu0 %v1216
    %1814 = vmatpush1.bf16.msra.mxu0 %v1215
    %1815 = vmatprep.subr.bf16.mxu0 %v1232
    %1816 = vmatpush1.bf16.msra.mxu0 %v1231
    %1817 = vmatprep.subr.bf16.mxu0 %v1248
    %1818 = vmatpush1.bf16.msra.mxu0 %v1247
    %1819 = vmatprep.subr.bf16.mxu0 %v1264
    %1820 = vmatpush1.bf16.msra.mxu0 %v1263
    %1821 = vmatprep.subr.bf16.mxu0 %v1280
    %1822 = vmatpush1.bf16.msra.mxu0 %v1279
    %1823 = vmatprep.subr.bf16.mxu0 %v1296
    %1824 = vmatpush1.bf16.msra.mxu0 %v1295
    %1825 = vmatprep.subr.bf16.mxu0 %v1312
    %1826 = vmatpush1.bf16.msra.mxu0 %v1311
    %1827 = vmatprep.subr.bf16.mxu0 %v1328
    %1828 = vmatpush1.bf16.msra.mxu0 %v1327
    %1829 = vmatprep.subr.bf16.mxu0 %v1344
    %1830 = vmatpush1.bf16.msra.mxu0 %v1343
    %1831 = vmatprep.subr.bf16.mxu0 %v1360
    %1832 = vmatpush1.bf16.msra.mxu0 %v1359
    %1833 = vmatprep.subr.bf16.mxu0 %v1376
    %1834 = vmatpush1.bf16.msra.mxu0 %v1375
    %1835 = vmatprep.mubr.bf16.mxu0 %v102
    %1836 = vmatmul.mubr.bf16.gmra.mrb[0].mxu0 %v101
    %v1837 = vpop.f32.mrb[0].mxu0
    %v1838 = vadd.f32 0.0, %v1837
    %v1839 = vpop.f32.mrb[0].mxu0
    %v1840 = vadd.f32 0.0, %v1839
    %v1841 = vpop.f32.mrb[0].mxu0
    %v1842 = vpop.f32.mrb[0].mxu0
    %1843 = vdwg.mxu0
    %1844 = vmatprep.subr.bf16.mxu0 %v1138
    %1845 = vmatpush1.bf16.msra.mxu0 %v1137
    %1846 = vmatprep.subr.bf16.mxu0 %v1154
    %1847 = vmatpush1.bf16.msra.mxu0 %v1153
    %1848 = vmatprep.subr.bf16.mxu0 %v1170
    %1849 = vmatpush1.bf16.msra.mxu0 %v1169
    %1850 = vmatprep.subr.bf16.mxu0 %v1186
    %1851 = vmatpush1.bf16.msra.mxu0 %v1185
    %1852 = vmatprep.subr.bf16.mxu0 %v1202
    %1853 = vmatpush1.bf16.msra.mxu0 %v1201
    %1854 = vmatprep.subr.bf16.mxu0 %v1218
    %1855 = vmatpush1.bf16.msra.mxu0 %v1217
    %1856 = vmatprep.subr.bf16.mxu0 %v1234
    %1857 = vmatpush1.bf16.msra.mxu0 %v1233
    %1858 = vmatprep.subr.bf16.mxu0 %v1250
    %1859 = vmatpush1.bf16.msra.mxu0 %v1249
    %1860 = vmatprep.subr.bf16.mxu0 %v1266
    %1861 = vmatpush1.bf16.msra.mxu0 %v1265
    %1862 = vmatprep.subr.bf16.mxu0 %v1282
    %1863 = vmatpush1.bf16.msra.mxu0 %v1281
    %1864 = vmatprep.subr.bf16.mxu0 %v1298
    %1865 = vmatpush1.bf16.msra.mxu0 %v1297
    %1866 = vmatprep.subr.bf16.mxu0 %v1314
    %1867 = vmatpush1.bf16.msra.mxu0 %v1313
    %1868 = vmatprep.subr.bf16.mxu0 %v1330
    %1869 = vmatpush1.bf16.msra.mxu0 %v1329
    %1870 = vmatprep.subr.bf16.mxu0 %v1346
    %1871 = vmatpush1.bf16.msra.mxu0 %v1345
    %1872 = vmatprep.subr.bf16.mxu0 %v1362
    %1873 = vmatpush1.bf16.msra.mxu0 %v1361
    %1874 = vmatprep.subr.bf16.mxu0 %v1378
    %1875 = vmatpush1.bf16.msra.mxu0 %v1377
    %1876 = vmatprep.mubr.bf16.mxu0 %v102
    %1877 = vmatmul.mubr.bf16.gmra.mrb[0].mxu0 %v101
    %v1878 = vpop.f32.mrb[0].mxu0
    %v1879 = vadd.f32 0.0, %v1878
    %v1880 = vpop.f32.mrb[0].mxu0
    %v1881 = vadd.f32 0.0, %v1880
    %v1882 = vpop.f32.mrb[0].mxu0
    %v1883 = vpop.f32.mrb[0].mxu0
    %1884 = vdwg.mxu0
    %1885 = vmatprep.subr.bf16.mxu0 %v1140
    %1886 = vmatpush1.bf16.msra.mxu0 %v1139
    %1887 = vmatprep.subr.bf16.mxu0 %v1156
    %1888 = vmatpush1.bf16.msra.mxu0 %v1155
    %1889 = vmatprep.subr.bf16.mxu0 %v1172
    %1890 = vmatpush1.bf16.msra.mxu0 %v1171
    %1891 = vmatprep.subr.bf16.mxu0 %v1188
    %1892 = vmatpush1.bf16.msra.mxu0 %v1187
    %1893 = vmatprep.subr.bf16.mxu0 %v1204
    %1894 = vmatpush1.bf16.msra.mxu0 %v1203
    %1895 = vmatprep.subr.bf16.mxu0 %v1220
    %1896 = vmatpush1.bf16.msra.mxu0 %v1219
    %1897 = vmatprep.subr.bf16.mxu0 %v1236
    %1898 = vmatpush1.bf16.msra.mxu0 %v1235
    %1899 = vmatprep.subr.bf16.mxu0 %v1252
    %1900 = vmatpush1.bf16.msra.mxu0 %v1251
    %1901 = vmatprep.subr.bf16.mxu0 %v1268
    %1902 = vmatpush1.bf16.msra.mxu0 %v1267
    %1903 = vmatprep.subr.bf16.mxu0 %v1284
    %1904 = vmatpush1.bf16.msra.mxu0 %v1283
    %1905 = vmatprep.subr.bf16.mxu0 %v1300
    %1906 = vmatpush1.bf16.msra.mxu0 %v1299
    %1907 = vmatprep.subr.bf16.mxu0 %v1316
    %1908 = vmatpush1.bf16.msra.mxu0 %v1315
    %1909 = vmatprep.subr.bf16.mxu0 %v1332
    %1910 = vmatpush1.bf16.msra.mxu0 %v1331
    %1911 = vmatprep.subr.bf16.mxu0 %v1348
    %1912 = vmatpush1.bf16.msra.mxu0 %v1347
    %1913 = vmatprep.subr.bf16.mxu0 %v1364
    %1914 = vmatpush1.bf16.msra.mxu0 %v1363
    %1915 = vmatprep.subr.bf16.mxu0 %v1380
    %1916 = vmatpush1.bf16.msra.mxu0 %v1379
    %1917 = vmatprep.mubr.bf16.mxu0 %v102
    %1918 = vmatmul.mubr.bf16.gmra.mrb[0].mxu0 %v101
    %v1919 = vpop.f32.mrb[0].mxu0
    %v1920 = vadd.f32 0.0, %v1919
    %v1921 = vpop.f32.mrb[0].mxu0
    %v1922 = vadd.f32 0.0, %v1921
    %v1923 = vpop.f32.mrb[0].mxu0
    %v1924 = vpop.f32.mrb[0].mxu0
    %1925 = vdwg.mxu0
    %1926 = vmatprep.subr.bf16.mxu0 %v1142
    %1927 = vmatpush1.bf16.msra.mxu0 %v1141
    %1928 = vmatprep.subr.bf16.mxu0 %v1158
    %1929 = vmatpush1.bf16.msra.mxu0 %v1157
    %1930 = vmatprep.subr.bf16.mxu0 %v1174
    %1931 = vmatpush1.bf16.msra.mxu0 %v1173
    %1932 = vmatprep.subr.bf16.mxu0 %v1190
    %1933 = vmatpush1.bf16.msra.mxu0 %v1189
    %1934 = vmatprep.subr.bf16.mxu0 %v1206
    %1935 = vmatpush1.bf16.msra.mxu0 %v1205
    %1936 = vmatprep.subr.bf16.mxu0 %v1222
    %1937 = vmatpush1.bf16.msra.mxu0 %v1221
    %1938 = vmatprep.subr.bf16.mxu0 %v1238
    %1939 = vmatpush1.bf16.msra.mxu0 %v1237
    %1940 = vmatprep.subr.bf16.mxu0 %v1254
    %1941 = vmatpush1.bf16.msra.mxu0 %v1253
    %1942 = vmatprep.subr.bf16.mxu0 %v1270
    %1943 = vmatpush1.bf16.msra.mxu0 %v1269
    %1944 = vmatprep.subr.bf16.mxu0 %v1286
    %1945 = vmatpush1.bf16.msra.mxu0 %v1285
    %1946 = vmatprep.subr.bf16.mxu0 %v1302
    %1947 = vmatpush1.bf16.msra.mxu0 %v1301
    %1948 = vmatprep.subr.bf16.mxu0 %v1318
    %1949 = vmatpush1.bf16.msra.mxu0 %v1317
    %1950 = vmatprep.subr.bf16.mxu0 %v1334
    %1951 = vmatpush1.bf16.msra.mxu0 %v1333
    %1952 = vmatprep.subr.bf16.mxu0 %v1350
    %1953 = vmatpush1.bf16.msra.mxu0 %v1349
    %1954 = vmatprep.subr.bf16.mxu0 %v1366
    %1955 = vmatpush1.bf16.msra.mxu0 %v1365
    %1956 = vmatprep.subr.bf16.mxu0 %v1382
    %1957 = vmatpush1.bf16.msra.mxu0 %v1381
    %1958 = vmatprep.mubr.bf16.mxu0 %v102
    %1959 = vmatmul.mubr.bf16.gmra.mrb[0].mxu0 %v101
    %v1960 = vpop.f32.mrb[0].mxu0
    %v1961 = vadd.f32 0.0, %v1960
    %v1962 = vpop.f32.mrb[0].mxu0
    %v1963 = vadd.f32 0.0, %v1962
    %v1964 = vpop.f32.mrb[0].mxu0
    %v1965 = vpop.f32.mrb[0].mxu0
    %1966 = vdwg.mxu0
    %v1967 = vmax.f32 %v1674, %v1756
    %v1968 = vmax.f32 %v1676, %v1758
    %v1969 = vmax.f32 %v1715, %v1797
    %v1970 = vmax.f32 %v1717, %v1799
    %v1971 = vmax.f32 %v1838, %v1920
    %v1972 = vmax.f32 %v1840, %v1922
    %v1973 = vmax.f32 %v1879, %v1961
    %v1974 = vmax.f32 %v1881, %v1963
    %v1975 = vmax.f32 %v1967, %v1971
    %v1976 = vmax.f32 %v1968, %v1972
    %v1977 = vmax.f32 %v1969, %v1973
    %v1978 = vmax.f32 %v1970, %v1974
    %v1979 = vld [vmem:[%s2] sm:$0xf]
    %v1981 = vlaneseq
    %v1982 = vshrl.u32 %v1981, 7
    %v1983 = vsub.s32 0, %v1982
    %v1984 = vrot.slane %v1979, %v1983
    %v1985 = vlaneseq
    %v1986 = vshrl.u32 %v1985, 7
    %v1987 = vsub.s32 1, %v1986
    %v1988 = vrot.slane %v1979, %v1987
    %v1989 = vlaneseq
    %v1990 = vshrl.u32 %v1989, 7
    %v1991 = vsub.s32 2, %v1990
    %v1992 = vrot.slane %v1979, %v1991
    %v1993 = vlaneseq
    %v1994 = vshrl.u32 %v1993, 7
    %v1995 = vsub.s32 3, %v1994
    %v1996 = vrot.slane %v1979, %v1995
    %v2001 = vadd.f32 %v1975, %v1984
    %v2002 = vadd.f32 %v1976, %v1988
    %v2003 = vadd.f32 %v1977, %v1992
    %v2004 = vadd.f32 %v1978, %v1996
    %v2005 = vmul.f32 %v2001, 0.01
    %v2006 = vmul.f32 %v2002, 0.01
    %v2007 = vmul.f32 %v2003, 0.01
    %v2008 = vmul.f32 %v2004, 0.01
    %v2009 = vmax.f32 %v2001, %v2005
    %v2010 = vmax.f32 %v2002, %v2006
    %v2011 = vmax.f32 %v2003, %v2007
    %v2012 = vmax.f32 %v2004, %v2008
    %v2013 = vpack.c.bf16 %v2009, %v2009
    %v2014 = vpack.c.bf16 %v2010, %v2010
    %v2015 = vpack.c.bf16 %v2011, %v2011
    %v2016 = vpack.c.bf16 %v2012, %v2012
    %v2017 = vld [vmem:[#allocation5] sm:$0xff]
    %v2018 = vld [vmem:[#allocation5 + $0x8] sm:$0xff]
    %v2019 = vld [vmem:[#allocation5 + $0x10] sm:$0xff]
    %v2020 = vld [vmem:[#allocation5 + $0x18] sm:$0xff]
    %v2021 = vld [vmem:[#allocation5 + $0x20] sm:$0xff]
    %v2022 = vld [vmem:[#allocation5 + $0x28] sm:$0xff]
    %v2023 = vld [vmem:[#allocation5 + $0x30] sm:$0xff]
    %v2024 = vld [vmem:[#allocation5 + $0x38] sm:$0xff]
    %v2025 = vld [vmem:[#allocation5 + $0x40] sm:$0xff]
    %v2026 = vld [vmem:[#allocation5 + $0x48] sm:$0xff]
    %v2027 = vld [vmem:[#allocation5 + $0x50] sm:$0xff]
    %v2028 = vld [vmem:[#allocation5 + $0x58] sm:$0xff]
    %v2029 = vld [vmem:[#allocation5 + $0x60] sm:$0xff]
    %v2030 = vld [vmem:[#allocation5 + $0x68] sm:$0xff]
    %v2031 = vld [vmem:[#allocation5 + $0x70] sm:$0xff]
    %v2032 = vld [vmem:[#allocation5 + $0x78] sm:$0xff]
    %v2033 = vld [vmem:[#allocation5 + $0x80] sm:$0xff]
    %v2034 = vld [vmem:[#allocation5 + $0x88] sm:$0xff]
    %v2035 = vld [vmem:[#allocation5 + $0x90] sm:$0xff]
    %v2036 = vld [vmem:[#allocation5 + $0x98] sm:$0xff]
    %v2037 = vld [vmem:[#allocation5 + $0xa0] sm:$0xff]
    %v2038 = vld [vmem:[#allocation5 + $0xa8] sm:$0xff]
    %v2039 = vld [vmem:[#allocation5 + $0xb0] sm:$0xff]
    %v2040 = vld [vmem:[#allocation5 + $0xb8] sm:$0xff]
    %v2041 = vld [vmem:[#allocation5 + $0xc0] sm:$0xff]
    %v2042 = vld [vmem:[#allocation5 + $0xc8] sm:$0xff]
    %v2043 = vld [vmem:[#allocation5 + $0xd0] sm:$0xff]
    %v2044 = vld [vmem:[#allocation5 + $0xd8] sm:$0xff]
    %v2045 = vld [vmem:[#allocation5 + $0xe0] sm:$0xff]
    %v2046 = vld [vmem:[#allocation5 + $0xe8] sm:$0xff]
    %v2047 = vld [vmem:[#allocation5 + $0xf0] sm:$0xff]
    %v2048 = vld [vmem:[#allocation5 + $0xf8] sm:$0xff]
    %v2049 = vld [vmem:[#allocation5 + $0x100] sm:$0xff]
    %v2050 = vld [vmem:[#allocation5 + $0x108] sm:$0xff]
    %v2051 = vld [vmem:[#allocation5 + $0x110] sm:$0xff]
    %v2052 = vld [vmem:[#allocation5 + $0x118] sm:$0xff]
    %v2053 = vld [vmem:[#allocation5 + $0x120] sm:$0xff]
    %v2054 = vld [vmem:[#allocation5 + $0x128] sm:$0xff]
    %v2055 = vld [vmem:[#allocation5 + $0x130] sm:$0xff]
    %v2056 = vld [vmem:[#allocation5 + $0x138] sm:$0xff]
    %v2057 = vld [vmem:[#allocation5 + $0x140] sm:$0xff]
    %v2058 = vld [vmem:[#allocation5 + $0x148] sm:$0xff]
    %v2059 = vld [vmem:[#allocation5 + $0x150] sm:$0xff]
    %v2060 = vld [vmem:[#allocation5 + $0x158] sm:$0xff]
    %v2061 = vld [vmem:[#allocation5 + $0x160] sm:$0xff]
    %v2062 = vld [vmem:[#allocation5 + $0x168] sm:$0xff]
    %v2063 = vld [vmem:[#allocation5 + $0x170] sm:$0xff]
    %v2064 = vld [vmem:[#allocation5 + $0x178] sm:$0xff]
    %v2065 = vld [vmem:[#allocation5 + $0x180] sm:$0xff]
    %v2066 = vld [vmem:[#allocation5 + $0x188] sm:$0xff]
    %v2067 = vld [vmem:[#allocation5 + $0x190] sm:$0xff]
    %v2068 = vld [vmem:[#allocation5 + $0x198] sm:$0xff]
    %v2069 = vld [vmem:[#allocation5 + $0x1a0] sm:$0xff]
    %v2070 = vld [vmem:[#allocation5 + $0x1a8] sm:$0xff]
    %v2071 = vld [vmem:[#allocation5 + $0x1b0] sm:$0xff]
    %v2072 = vld [vmem:[#allocation5 + $0x1b8] sm:$0xff]
    %v2073 = vld [vmem:[#allocation5 + $0x1c0] sm:$0xff]
    %v2074 = vld [vmem:[#allocation5 + $0x1c8] sm:$0xff]
    %v2075 = vld [vmem:[#allocation5 + $0x1d0] sm:$0xff]
    %v2076 = vld [vmem:[#allocation5 + $0x1d8] sm:$0xff]
    %v2077 = vld [vmem:[#allocation5 + $0x1e0] sm:$0xff]
    %v2078 = vld [vmem:[#allocation5 + $0x1e8] sm:$0xff]
    %v2079 = vld [vmem:[#allocation5 + $0x1f0] sm:$0xff]
    %v2080 = vld [vmem:[#allocation5 + $0x1f8] sm:$0xff]
    %v2081 = vld [vmem:[#allocation5 + $0x200] sm:$0xff]
    %v2082 = vld [vmem:[#allocation5 + $0x208] sm:$0xff]
    %v2083 = vld [vmem:[#allocation5 + $0x210] sm:$0xff]
    %v2084 = vld [vmem:[#allocation5 + $0x218] sm:$0xff]
    %v2085 = vld [vmem:[#allocation5 + $0x220] sm:$0xff]
    %v2086 = vld [vmem:[#allocation5 + $0x228] sm:$0xff]
    %v2087 = vld [vmem:[#allocation5 + $0x230] sm:$0xff]
    %v2088 = vld [vmem:[#allocation5 + $0x238] sm:$0xff]
    %v2089 = vld [vmem:[#allocation5 + $0x240] sm:$0xff]
    %v2090 = vld [vmem:[#allocation5 + $0x248] sm:$0xff]
    %v2091 = vld [vmem:[#allocation5 + $0x250] sm:$0xff]
    %v2092 = vld [vmem:[#allocation5 + $0x258] sm:$0xff]
    %v2093 = vld [vmem:[#allocation5 + $0x260] sm:$0xff]
    %v2094 = vld [vmem:[#allocation5 + $0x268] sm:$0xff]
    %v2095 = vld [vmem:[#allocation5 + $0x270] sm:$0xff]
    %v2096 = vld [vmem:[#allocation5 + $0x278] sm:$0xff]
    %v2097 = vld [vmem:[#allocation5 + $0x280] sm:$0xff]
    %v2098 = vld [vmem:[#allocation5 + $0x288] sm:$0xff]
    %v2099 = vld [vmem:[#allocation5 + $0x290] sm:$0xff]
    %v2100 = vld [vmem:[#allocation5 + $0x298] sm:$0xff]
    %v2101 = vld [vmem:[#allocation5 + $0x2a0] sm:$0xff]
    %v2102 = vld [vmem:[#allocation5 + $0x2a8] sm:$0xff]
    %v2103 = vld [vmem:[#allocation5 + $0x2b0] sm:$0xff]
    %v2104 = vld [vmem:[#allocation5 + $0x2b8] sm:$0xff]
    %v2105 = vld [vmem:[#allocation5 + $0x2c0] sm:$0xff]
    %v2106 = vld [vmem:[#allocation5 + $0x2c8] sm:$0xff]
    %v2107 = vld [vmem:[#allocation5 + $0x2d0] sm:$0xff]
    %v2108 = vld [vmem:[#allocation5 + $0x2d8] sm:$0xff]
    %v2109 = vld [vmem:[#allocation5 + $0x2e0] sm:$0xff]
    %v2110 = vld [vmem:[#allocation5 + $0x2e8] sm:$0xff]
    %v2111 = vld [vmem:[#allocation5 + $0x2f0] sm:$0xff]
    %v2112 = vld [vmem:[#allocation5 + $0x2f8] sm:$0xff]
    %v2113 = vld [vmem:[#allocation5 + $0x300] sm:$0xff]
    %v2114 = vld [vmem:[#allocation5 + $0x308] sm:$0xff]
    %v2115 = vld [vmem:[#allocation5 + $0x310] sm:$0xff]
    %v2116 = vld [vmem:[#allocation5 + $0x318] sm:$0xff]
    %v2117 = vld [vmem:[#allocation5 + $0x320] sm:$0xff]
    %v2118 = vld [vmem:[#allocation5 + $0x328] sm:$0xff]
    %v2119 = vld [vmem:[#allocation5 + $0x330] sm:$0xff]
    %v2120 = vld [vmem:[#allocation5 + $0x338] sm:$0xff]
    %v2121 = vld [vmem:[#allocation5 + $0x340] sm:$0xff]
    %v2122 = vld [vmem:[#allocation5 + $0x348] sm:$0xff]
    %v2123 = vld [vmem:[#allocation5 + $0x350] sm:$0xff]
    %v2124 = vld [vmem:[#allocation5 + $0x358] sm:$0xff]
    %v2125 = vld [vmem:[#allocation5 + $0x360] sm:$0xff]
    %v2126 = vld [vmem:[#allocation5 + $0x368] sm:$0xff]
    %v2127 = vld [vmem:[#allocation5 + $0x370] sm:$0xff]
    %v2128 = vld [vmem:[#allocation5 + $0x378] sm:$0xff]
    %v2129 = vld [vmem:[#allocation5 + $0x380] sm:$0xff]
    %v2130 = vld [vmem:[#allocation5 + $0x388] sm:$0xff]
    %v2131 = vld [vmem:[#allocation5 + $0x390] sm:$0xff]
    %v2132 = vld [vmem:[#allocation5 + $0x398] sm:$0xff]
    %v2133 = vld [vmem:[#allocation5 + $0x3a0] sm:$0xff]
    %v2134 = vld [vmem:[#allocation5 + $0x3a8] sm:$0xff]
    %v2135 = vld [vmem:[#allocation5 + $0x3b0] sm:$0xff]
    %v2136 = vld [vmem:[#allocation5 + $0x3b8] sm:$0xff]
    %v2137 = vld [vmem:[#allocation5 + $0x3c0] sm:$0xff]
    %v2138 = vld [vmem:[#allocation5 + $0x3c8] sm:$0xff]
    %v2139 = vld [vmem:[#allocation5 + $0x3d0] sm:$0xff]
    %v2140 = vld [vmem:[#allocation5 + $0x3d8] sm:$0xff]
    %v2141 = vld [vmem:[#allocation5 + $0x3e0] sm:$0xff]
    %v2142 = vld [vmem:[#allocation5 + $0x3e8] sm:$0xff]
    %v2143 = vld [vmem:[#allocation5 + $0x3f0] sm:$0xff]
    %v2144 = vld [vmem:[#allocation5 + $0x3f8] sm:$0xff]
    %v2145 = vld [vmem:[#allocation5 + $0x400] sm:$0xff]
    %v2146 = vld [vmem:[#allocation5 + $0x408] sm:$0xff]
    %v2147 = vld [vmem:[#allocation5 + $0x410] sm:$0xff]
    %v2148 = vld [vmem:[#allocation5 + $0x418] sm:$0xff]
    %v2149 = vld [vmem:[#allocation5 + $0x420] sm:$0xff]
    %v2150 = vld [vmem:[#allocation5 + $0x428] sm:$0xff]
    %v2151 = vld [vmem:[#allocation5 + $0x430] sm:$0xff]
    %v2152 = vld [vmem:[#allocation5 + $0x438] sm:$0xff]
    %v2153 = vld [vmem:[#allocation5 + $0x440] sm:$0xff]
    %v2154 = vld [vmem:[#allocation5 + $0x448] sm:$0xff]
    %v2155 = vld [vmem:[#allocation5 + $0x450] sm:$0xff]
    %v2156 = vld [vmem:[#allocation5 + $0x458] sm:$0xff]
    %v2157 = vld [vmem:[#allocation5 + $0x460] sm:$0xff]
    %v2158 = vld [vmem:[#allocation5 + $0x468] sm:$0xff]
    %v2159 = vld [vmem:[#allocation5 + $0x470] sm:$0xff]
    %v2160 = vld [vmem:[#allocation5 + $0x478] sm:$0xff]
    %v2161 = vld [vmem:[#allocation5 + $0x480] sm:$0xff]
    %v2162 = vld [vmem:[#allocation5 + $0x488] sm:$0xff]
    %v2163 = vld [vmem:[#allocation5 + $0x490] sm:$0xff]
    %v2164 = vld [vmem:[#allocation5 + $0x498] sm:$0xff]
    %v2165 = vld [vmem:[#allocation5 + $0x4a0] sm:$0xff]
    %v2166 = vld [vmem:[#allocation5 + $0x4a8] sm:$0xff]
    %v2167 = vld [vmem:[#allocation5 + $0x4b0] sm:$0xff]
    %v2168 = vld [vmem:[#allocation5 + $0x4b8] sm:$0xff]
    %v2169 = vld [vmem:[#allocation5 + $0x4c0] sm:$0xff]
    %v2170 = vld [vmem:[#allocation5 + $0x4c8] sm:$0xff]
    %v2171 = vld [vmem:[#allocation5 + $0x4d0] sm:$0xff]
    %v2172 = vld [vmem:[#allocation5 + $0x4d8] sm:$0xff]
    %v2173 = vld [vmem:[#allocation5 + $0x4e0] sm:$0xff]
    %v2174 = vld [vmem:[#allocation5 + $0x4e8] sm:$0xff]
    %v2175 = vld [vmem:[#allocation5 + $0x4f0] sm:$0xff]
    %v2176 = vld [vmem:[#allocation5 + $0x4f8] sm:$0xff]
    %v2177 = vld [vmem:[#allocation5 + $0x500] sm:$0xff]
    %v2178 = vld [vmem:[#allocation5 + $0x508] sm:$0xff]
    %v2179 = vld [vmem:[#allocation5 + $0x510] sm:$0xff]
    %v2180 = vld [vmem:[#allocation5 + $0x518] sm:$0xff]
    %v2181 = vld [vmem:[#allocation5 + $0x520] sm:$0xff]
    %v2182 = vld [vmem:[#allocation5 + $0x528] sm:$0xff]
    %v2183 = vld [vmem:[#allocation5 + $0x530] sm:$0xff]
    %v2184 = vld [vmem:[#allocation5 + $0x538] sm:$0xff]
    %v2185 = vld [vmem:[#allocation5 + $0x540] sm:$0xff]
    %v2186 = vld [vmem:[#allocation5 + $0x548] sm:$0xff]
    %v2187 = vld [vmem:[#allocation5 + $0x550] sm:$0xff]
    %v2188 = vld [vmem:[#allocation5 + $0x558] sm:$0xff]
    %v2189 = vld [vmem:[#allocation5 + $0x560] sm:$0xff]
    %v2190 = vld [vmem:[#allocation5 + $0x568] sm:$0xff]
    %v2191 = vld [vmem:[#allocation5 + $0x570] sm:$0xff]
    %v2192 = vld [vmem:[#allocation5 + $0x578] sm:$0xff]
    %v2193 = vld [vmem:[#allocation5 + $0x580] sm:$0xff]
    %v2194 = vld [vmem:[#allocation5 + $0x588] sm:$0xff]
    %v2195 = vld [vmem:[#allocation5 + $0x590] sm:$0xff]
    %v2196 = vld [vmem:[#allocation5 + $0x598] sm:$0xff]
    %v2197 = vld [vmem:[#allocation5 + $0x5a0] sm:$0xff]
    %v2198 = vld [vmem:[#allocation5 + $0x5a8] sm:$0xff]
    %v2199 = vld [vmem:[#allocation5 + $0x5b0] sm:$0xff]
    %v2200 = vld [vmem:[#allocation5 + $0x5b8] sm:$0xff]
    %v2201 = vld [vmem:[#allocation5 + $0x5c0] sm:$0xff]
    %v2202 = vld [vmem:[#allocation5 + $0x5c8] sm:$0xff]
    %v2203 = vld [vmem:[#allocation5 + $0x5d0] sm:$0xff]
    %v2204 = vld [vmem:[#allocation5 + $0x5d8] sm:$0xff]
    %v2205 = vld [vmem:[#allocation5 + $0x5e0] sm:$0xff]
    %v2206 = vld [vmem:[#allocation5 + $0x5e8] sm:$0xff]
    %v2207 = vld [vmem:[#allocation5 + $0x5f0] sm:$0xff]
    %v2208 = vld [vmem:[#allocation5 + $0x5f8] sm:$0xff]
    %v2209 = vld [vmem:[#allocation5 + $0x600] sm:$0xff]
    %v2210 = vld [vmem:[#allocation5 + $0x608] sm:$0xff]
    %v2211 = vld [vmem:[#allocation5 + $0x610] sm:$0xff]
    %v2212 = vld [vmem:[#allocation5 + $0x618] sm:$0xff]
    %v2213 = vld [vmem:[#allocation5 + $0x620] sm:$0xff]
    %v2214 = vld [vmem:[#allocation5 + $0x628] sm:$0xff]
    %v2215 = vld [vmem:[#allocation5 + $0x630] sm:$0xff]
    %v2216 = vld [vmem:[#allocation5 + $0x638] sm:$0xff]
    %v2217 = vld [vmem:[#allocation5 + $0x640] sm:$0xff]
    %v2218 = vld [vmem:[#allocation5 + $0x648] sm:$0xff]
    %v2219 = vld [vmem:[#allocation5 + $0x650] sm:$0xff]
    %v2220 = vld [vmem:[#allocation5 + $0x658] sm:$0xff]
    %v2221 = vld [vmem:[#allocation5 + $0x660] sm:$0xff]
    %v2222 = vld [vmem:[#allocation5 + $0x668] sm:$0xff]
    %v2223 = vld [vmem:[#allocation5 + $0x670] sm:$0xff]
    %v2224 = vld [vmem:[#allocation5 + $0x678] sm:$0xff]
    %v2225 = vld [vmem:[#allocation5 + $0x680] sm:$0xff]
    %v2226 = vld [vmem:[#allocation5 + $0x688] sm:$0xff]
    %v2227 = vld [vmem:[#allocation5 + $0x690] sm:$0xff]
    %v2228 = vld [vmem:[#allocation5 + $0x698] sm:$0xff]
    %v2229 = vld [vmem:[#allocation5 + $0x6a0] sm:$0xff]
    %v2230 = vld [vmem:[#allocation5 + $0x6a8] sm:$0xff]
    %v2231 = vld [vmem:[#allocation5 + $0x6b0] sm:$0xff]
    %v2232 = vld [vmem:[#allocation5 + $0x6b8] sm:$0xff]
    %v2233 = vld [vmem:[#allocation5 + $0x6c0] sm:$0xff]
    %v2234 = vld [vmem:[#allocation5 + $0x6c8] sm:$0xff]
    %v2235 = vld [vmem:[#allocation5 + $0x6d0] sm:$0xff]
    %v2236 = vld [vmem:[#allocation5 + $0x6d8] sm:$0xff]
    %v2237 = vld [vmem:[#allocation5 + $0x6e0] sm:$0xff]
    %v2238 = vld [vmem:[#allocation5 + $0x6e8] sm:$0xff]
    %v2239 = vld [vmem:[#allocation5 + $0x6f0] sm:$0xff]
    %v2240 = vld [vmem:[#allocation5 + $0x6f8] sm:$0xff]
    %v2241 = vld [vmem:[#allocation5 + $0x700] sm:$0xff]
    %v2242 = vld [vmem:[#allocation5 + $0x708] sm:$0xff]
    %v2243 = vld [vmem:[#allocation5 + $0x710] sm:$0xff]
    %v2244 = vld [vmem:[#allocation5 + $0x718] sm:$0xff]
    %v2245 = vld [vmem:[#allocation5 + $0x720] sm:$0xff]
    %v2246 = vld [vmem:[#allocation5 + $0x728] sm:$0xff]
    %v2247 = vld [vmem:[#allocation5 + $0x730] sm:$0xff]
    %v2248 = vld [vmem:[#allocation5 + $0x738] sm:$0xff]
    %v2249 = vld [vmem:[#allocation5 + $0x740] sm:$0xff]
    %v2250 = vld [vmem:[#allocation5 + $0x748] sm:$0xff]
    %v2251 = vld [vmem:[#allocation5 + $0x750] sm:$0xff]
    %v2252 = vld [vmem:[#allocation5 + $0x758] sm:$0xff]
    %v2253 = vld [vmem:[#allocation5 + $0x760] sm:$0xff]
    %v2254 = vld [vmem:[#allocation5 + $0x768] sm:$0xff]
    %v2255 = vld [vmem:[#allocation5 + $0x770] sm:$0xff]
    %v2256 = vld [vmem:[#allocation5 + $0x778] sm:$0xff]
    %v2257 = vld [vmem:[#allocation5 + $0x780] sm:$0xff]
    %v2258 = vld [vmem:[#allocation5 + $0x788] sm:$0xff]
    %v2259 = vld [vmem:[#allocation5 + $0x790] sm:$0xff]
    %v2260 = vld [vmem:[#allocation5 + $0x798] sm:$0xff]
    %v2261 = vld [vmem:[#allocation5 + $0x7a0] sm:$0xff]
    %v2262 = vld [vmem:[#allocation5 + $0x7a8] sm:$0xff]
    %v2263 = vld [vmem:[#allocation5 + $0x7b0] sm:$0xff]
    %v2264 = vld [vmem:[#allocation5 + $0x7b8] sm:$0xff]
    %v2265 = vld [vmem:[#allocation5 + $0x7c0] sm:$0xff]
    %v2266 = vld [vmem:[#allocation5 + $0x7c8] sm:$0xff]
    %v2267 = vld [vmem:[#allocation5 + $0x7d0] sm:$0xff]
    %v2268 = vld [vmem:[#allocation5 + $0x7d8] sm:$0xff]
    %v2269 = vld [vmem:[#allocation5 + $0x7e0] sm:$0xff]
    %v2270 = vld [vmem:[#allocation5 + $0x7e8] sm:$0xff]
    %v2271 = vld [vmem:[#allocation5 + $0x7f0] sm:$0xff]
    %v2272 = vld [vmem:[#allocation5 + $0x7f8] sm:$0xff]
    %v2529 = vunpack.c.l.b16 %v2017
    %v2530 = vunpack.c.h.b16 %v2017
    %v2531 = vunpack.c.l.b16 %v2018
    %v2532 = vunpack.c.h.b16 %v2018
    %v2533 = vunpack.c.l.b16 %v2019
    %v2534 = vunpack.c.h.b16 %v2019
    %v2535 = vunpack.c.l.b16 %v2020
    %v2536 = vunpack.c.h.b16 %v2020
    %v2537 = vunpack.c.l.b16 %v2021
    %v2538 = vunpack.c.h.b16 %v2021
    %v2539 = vunpack.c.l.b16 %v2022
    %v2540 = vunpack.c.h.b16 %v2022
    %v2541 = vunpack.c.l.b16 %v2023
    %v2542 = vunpack.c.h.b16 %v2023
    %v2543 = vunpack.c.l.b16 %v2024
    %v2544 = vunpack.c.h.b16 %v2024
    %v2545 = vunpack.c.l.b16 %v2025
    %v2546 = vunpack.c.h.b16 %v2025
    %v2547 = vunpack.c.l.b16 %v2026
    %v2548 = vunpack.c.h.b16 %v2026
    %v2549 = vunpack.c.l.b16 %v2027
    %v2550 = vunpack.c.h.b16 %v2027
    %v2551 = vunpack.c.l.b16 %v2028
    %v2552 = vunpack.c.h.b16 %v2028
    %v2553 = vunpack.c.l.b16 %v2029
    %v2554 = vunpack.c.h.b16 %v2029
    %v2555 = vunpack.c.l.b16 %v2030
    %v2556 = vunpack.c.h.b16 %v2030
    %v2557 = vunpack.c.l.b16 %v2031
    %v2558 = vunpack.c.h.b16 %v2031
    %v2559 = vunpack.c.l.b16 %v2032
    %v2560 = vunpack.c.h.b16 %v2032
    %v2561 = vunpack.c.l.b16 %v2033
    %v2562 = vunpack.c.h.b16 %v2033
    %v2563 = vunpack.c.l.b16 %v2034
    %v2564 = vunpack.c.h.b16 %v2034
    %v2565 = vunpack.c.l.b16 %v2035
    %v2566 = vunpack.c.h.b16 %v2035
    %v2567 = vunpack.c.l.b16 %v2036
    %v2568 = vunpack.c.h.b16 %v2036
    %v2569 = vunpack.c.l.b16 %v2037
    %v2570 = vunpack.c.h.b16 %v2037
    %v2571 = vunpack.c.l.b16 %v2038
    %v2572 = vunpack.c.h.b16 %v2038
    %v2573 = vunpack.c.l.b16 %v2039
    %v2574 = vunpack.c.h.b16 %v2039
    %v2575 = vunpack.c.l.b16 %v2040
    %v2576 = vunpack.c.h.b16 %v2040
    %v2577 = vunpack.c.l.b16 %v2041
    %v2578 = vunpack.c.h.b16 %v2041
    %v2579 = vunpack.c.l.b16 %v2042
    %v2580 = vunpack.c.h.b16 %v2042
    %v2581 = vunpack.c.l.b16 %v2043
    %v2582 = vunpack.c.h.b16 %v2043
    %v2583 = vunpack.c.l.b16 %v2044
    %v2584 = vunpack.c.h.b16 %v2044
    %v2585 = vunpack.c.l.b16 %v2045
    %v2586 = vunpack.c.h.b16 %v2045
    %v2587 = vunpack.c.l.b16 %v2046
    %v2588 = vunpack.c.h.b16 %v2046
    %v2589 = vunpack.c.l.b16 %v2047
    %v2590 = vunpack.c.h.b16 %v2047
    %v2591 = vunpack.c.l.b16 %v2048
    %v2592 = vunpack.c.h.b16 %v2048
    %v2593 = vunpack.c.l.b16 %v2049
    %v2594 = vunpack.c.h.b16 %v2049
    %v2595 = vunpack.c.l.b16 %v2050
    %v2596 = vunpack.c.h.b16 %v2050
    %v2597 = vunpack.c.l.b16 %v2051
    %v2598 = vunpack.c.h.b16 %v2051
    %v2599 = vunpack.c.l.b16 %v2052
    %v2600 = vunpack.c.h.b16 %v2052
    %v2601 = vunpack.c.l.b16 %v2053
    %v2602 = vunpack.c.h.b16 %v2053
    %v2603 = vunpack.c.l.b16 %v2054
    %v2604 = vunpack.c.h.b16 %v2054
    %v2605 = vunpack.c.l.b16 %v2055
    %v2606 = vunpack.c.h.b16 %v2055
    %v2607 = vunpack.c.l.b16 %v2056
    %v2608 = vunpack.c.h.b16 %v2056
    %v2609 = vunpack.c.l.b16 %v2057
    %v2610 = vunpack.c.h.b16 %v2057
    %v2611 = vunpack.c.l.b16 %v2058
    %v2612 = vunpack.c.h.b16 %v2058
    %v2613 = vunpack.c.l.b16 %v2059
    %v2614 = vunpack.c.h.b16 %v2059
    %v2615 = vunpack.c.l.b16 %v2060
    %v2616 = vunpack.c.h.b16 %v2060
    %v2617 = vunpack.c.l.b16 %v2061
    %v2618 = vunpack.c.h.b16 %v2061
    %v2619 = vunpack.c.l.b16 %v2062
    %v2620 = vunpack.c.h.b16 %v2062
    %v2621 = vunpack.c.l.b16 %v2063
    %v2622 = vunpack.c.h.b16 %v2063
    %v2623 = vunpack.c.l.b16 %v2064
    %v2624 = vunpack.c.h.b16 %v2064
    %v2625 = vunpack.c.l.b16 %v2065
    %v2626 = vunpack.c.h.b16 %v2065
    %v2627 = vunpack.c.l.b16 %v2066
    %v2628 = vunpack.c.h.b16 %v2066
    %v2629 = vunpack.c.l.b16 %v2067
    %v2630 = vunpack.c.h.b16 %v2067
    %v2631 = vunpack.c.l.b16 %v2068
    %v2632 = vunpack.c.h.b16 %v2068
    %v2633 = vunpack.c.l.b16 %v2069
    %v2634 = vunpack.c.h.b16 %v2069
    %v2635 = vunpack.c.l.b16 %v2070
    %v2636 = vunpack.c.h.b16 %v2070
    %v2637 = vunpack.c.l.b16 %v2071
    %v2638 = vunpack.c.h.b16 %v2071
    %v2639 = vunpack.c.l.b16 %v2072
    %v2640 = vunpack.c.h.b16 %v2072
    %v2641 = vunpack.c.l.b16 %v2073
    %v2642 = vunpack.c.h.b16 %v2073
    %v2643 = vunpack.c.l.b16 %v2074
    %v2644 = vunpack.c.h.b16 %v2074
    %v2645 = vunpack.c.l.b16 %v2075
    %v2646 = vunpack.c.h.b16 %v2075
    %v2647 = vunpack.c.l.b16 %v2076
    %v2648 = vunpack.c.h.b16 %v2076
    %v2649 = vunpack.c.l.b16 %v2077
    %v2650 = vunpack.c.h.b16 %v2077
    %v2651 = vunpack.c.l.b16 %v2078
    %v2652 = vunpack.c.h.b16 %v2078
    %v2653 = vunpack.c.l.b16 %v2079
    %v2654 = vunpack.c.h.b16 %v2079
    %v2655 = vunpack.c.l.b16 %v2080
    %v2656 = vunpack.c.h.b16 %v2080
    %v2657 = vunpack.c.l.b16 %v2081
    %v2658 = vunpack.c.h.b16 %v2081
    %v2659 = vunpack.c.l.b16 %v2082
    %v2660 = vunpack.c.h.b16 %v2082
    %v2661 = vunpack.c.l.b16 %v2083
    %v2662 = vunpack.c.h.b16 %v2083
    %v2663 = vunpack.c.l.b16 %v2084
    %v2664 = vunpack.c.h.b16 %v2084
    %v2665 = vunpack.c.l.b16 %v2085
    %v2666 = vunpack.c.h.b16 %v2085
    %v2667 = vunpack.c.l.b16 %v2086
    %v2668 = vunpack.c.h.b16 %v2086
    %v2669 = vunpack.c.l.b16 %v2087
    %v2670 = vunpack.c.h.b16 %v2087
    %v2671 = vunpack.c.l.b16 %v2088
    %v2672 = vunpack.c.h.b16 %v2088
    %v2673 = vunpack.c.l.b16 %v2089
    %v2674 = vunpack.c.h.b16 %v2089
    %v2675 = vunpack.c.l.b16 %v2090
    %v2676 = vunpack.c.h.b16 %v2090
    %v2677 = vunpack.c.l.b16 %v2091
    %v2678 = vunpack.c.h.b16 %v2091
    %v2679 = vunpack.c.l.b16 %v2092
    %v2680 = vunpack.c.h.b16 %v2092
    %v2681 = vunpack.c.l.b16 %v2093
    %v2682 = vunpack.c.h.b16 %v2093
    %v2683 = vunpack.c.l.b16 %v2094
    %v2684 = vunpack.c.h.b16 %v2094
    %v2685 = vunpack.c.l.b16 %v2095
    %v2686 = vunpack.c.h.b16 %v2095
    %v2687 = vunpack.c.l.b16 %v2096
    %v2688 = vunpack.c.h.b16 %v2096
    %v2689 = vunpack.c.l.b16 %v2097
    %v2690 = vunpack.c.h.b16 %v2097
    %v2691 = vunpack.c.l.b16 %v2098
    %v2692 = vunpack.c.h.b16 %v2098
    %v2693 = vunpack.c.l.b16 %v2099
    %v2694 = vunpack.c.h.b16 %v2099
    %v2695 = vunpack.c.l.b16 %v2100
    %v2696 = vunpack.c.h.b16 %v2100
    %v2697 = vunpack.c.l.b16 %v2101
    %v2698 = vunpack.c.h.b16 %v2101
    %v2699 = vunpack.c.l.b16 %v2102
    %v2700 = vunpack.c.h.b16 %v2102
    %v2701 = vunpack.c.l.b16 %v2103
    %v2702 = vunpack.c.h.b16 %v2103
    %v2703 = vunpack.c.l.b16 %v2104
    %v2704 = vunpack.c.h.b16 %v2104
    %v2705 = vunpack.c.l.b16 %v2105
    %v2706 = vunpack.c.h.b16 %v2105
    %v2707 = vunpack.c.l.b16 %v2106
    %v2708 = vunpack.c.h.b16 %v2106
    %v2709 = vunpack.c.l.b16 %v2107
    %v2710 = vunpack.c.h.b16 %v2107
    %v2711 = vunpack.c.l.b16 %v2108
    %v2712 = vunpack.c.h.b16 %v2108
    %v2713 = vunpack.c.l.b16 %v2109
    %v2714 = vunpack.c.h.b16 %v2109
    %v2715 = vunpack.c.l.b16 %v2110
    %v2716 = vunpack.c.h.b16 %v2110
    %v2717 = vunpack.c.l.b16 %v2111
    %v2718 = vunpack.c.h.b16 %v2111
    %v2719 = vunpack.c.l.b16 %v2112
    %v2720 = vunpack.c.h.b16 %v2112
    %v2721 = vunpack.c.l.b16 %v2113
    %v2722 = vunpack.c.h.b16 %v2113
    %v2723 = vunpack.c.l.b16 %v2114
    %v2724 = vunpack.c.h.b16 %v2114
    %v2725 = vunpack.c.l.b16 %v2115
    %v2726 = vunpack.c.h.b16 %v2115
    %v2727 = vunpack.c.l.b16 %v2116
    %v2728 = vunpack.c.h.b16 %v2116
    %v2729 = vunpack.c.l.b16 %v2117
    %v2730 = vunpack.c.h.b16 %v2117
    %v2731 = vunpack.c.l.b16 %v2118
    %v2732 = vunpack.c.h.b16 %v2118
    %v2733 = vunpack.c.l.b16 %v2119
    %v2734 = vunpack.c.h.b16 %v2119
    %v2735 = vunpack.c.l.b16 %v2120
    %v2736 = vunpack.c.h.b16 %v2120
    %v2737 = vunpack.c.l.b16 %v2121
    %v2738 = vunpack.c.h.b16 %v2121
    %v2739 = vunpack.c.l.b16 %v2122
    %v2740 = vunpack.c.h.b16 %v2122
    %v2741 = vunpack.c.l.b16 %v2123
    %v2742 = vunpack.c.h.b16 %v2123
    %v2743 = vunpack.c.l.b16 %v2124
    %v2744 = vunpack.c.h.b16 %v2124
    %v2745 = vunpack.c.l.b16 %v2125
    %v2746 = vunpack.c.h.b16 %v2125
    %v2747 = vunpack.c.l.b16 %v2126
    %v2748 = vunpack.c.h.b16 %v2126
    %v2749 = vunpack.c.l.b16 %v2127
    %v2750 = vunpack.c.h.b16 %v2127
    %v2751 = vunpack.c.l.b16 %v2128
    %v2752 = vunpack.c.h.b16 %v2128
    %v2753 = vunpack.c.l.b16 %v2129
    %v2754 = vunpack.c.h.b16 %v2129
    %v2755 = vunpack.c.l.b16 %v2130
    %v2756 = vunpack.c.h.b16 %v2130
    %v2757 = vunpack.c.l.b16 %v2131
    %v2758 = vunpack.c.h.b16 %v2131
    %v2759 = vunpack.c.l.b16 %v2132
    %v2760 = vunpack.c.h.b16 %v2132
    %v2761 = vunpack.c.l.b16 %v2133
    %v2762 = vunpack.c.h.b16 %v2133
    %v2763 = vunpack.c.l.b16 %v2134
    %v2764 = vunpack.c.h.b16 %v2134
    %v2765 = vunpack.c.l.b16 %v2135
    %v2766 = vunpack.c.h.b16 %v2135
    %v2767 = vunpack.c.l.b16 %v2136
    %v2768 = vunpack.c.h.b16 %v2136
    %v2769 = vunpack.c.l.b16 %v2137
    %v2770 = vunpack.c.h.b16 %v2137
    %v2771 = vunpack.c.l.b16 %v2138
    %v2772 = vunpack.c.h.b16 %v2138
    %v2773 = vunpack.c.l.b16 %v2139
    %v2774 = vunpack.c.h.b16 %v2139
    %v2775 = vunpack.c.l.b16 %v2140
    %v2776 = vunpack.c.h.b16 %v2140
    %v2777 = vunpack.c.l.b16 %v2141
    %v2778 = vunpack.c.h.b16 %v2141
    %v2779 = vunpack.c.l.b16 %v2142
    %v2780 = vunpack.c.h.b16 %v2142
    %v2781 = vunpack.c.l.b16 %v2143
    %v2782 = vunpack.c.h.b16 %v2143
    %v2783 = vunpack.c.l.b16 %v2144
    %v2784 = vunpack.c.h.b16 %v2144
    %v2785 = vunpack.c.l.b16 %v2145
    %v2786 = vunpack.c.h.b16 %v2145
    %v2787 = vunpack.c.l.b16 %v2146
    %v2788 = vunpack.c.h.b16 %v2146
    %v2789 = vunpack.c.l.b16 %v2147
    %v2790 = vunpack.c.h.b16 %v2147
    %v2791 = vunpack.c.l.b16 %v2148
    %v2792 = vunpack.c.h.b16 %v2148
    %v2793 = vunpack.c.l.b16 %v2149
    %v2794 = vunpack.c.h.b16 %v2149
    %v2795 = vunpack.c.l.b16 %v2150
    %v2796 = vunpack.c.h.b16 %v2150
    %v2797 = vunpack.c.l.b16 %v2151
    %v2798 = vunpack.c.h.b16 %v2151
    %v2799 = vunpack.c.l.b16 %v2152
    %v2800 = vunpack.c.h.b16 %v2152
    %v2801 = vunpack.c.l.b16 %v2153
    %v2802 = vunpack.c.h.b16 %v2153
    %v2803 = vunpack.c.l.b16 %v2154
    %v2804 = vunpack.c.h.b16 %v2154
    %v2805 = vunpack.c.l.b16 %v2155
    %v2806 = vunpack.c.h.b16 %v2155
    %v2807 = vunpack.c.l.b16 %v2156
    %v2808 = vunpack.c.h.b16 %v2156
    %v2809 = vunpack.c.l.b16 %v2157
    %v2810 = vunpack.c.h.b16 %v2157
    %v2811 = vunpack.c.l.b16 %v2158
    %v2812 = vunpack.c.h.b16 %v2158
    %v2813 = vunpack.c.l.b16 %v2159
    %v2814 = vunpack.c.h.b16 %v2159
    %v2815 = vunpack.c.l.b16 %v2160
    %v2816 = vunpack.c.h.b16 %v2160
    %v2817 = vunpack.c.l.b16 %v2161
    %v2818 = vunpack.c.h.b16 %v2161
    %v2819 = vunpack.c.l.b16 %v2162
    %v2820 = vunpack.c.h.b16 %v2162
    %v2821 = vunpack.c.l.b16 %v2163
    %v2822 = vunpack.c.h.b16 %v2163
    %v2823 = vunpack.c.l.b16 %v2164
    %v2824 = vunpack.c.h.b16 %v2164
    %v2825 = vunpack.c.l.b16 %v2165
    %v2826 = vunpack.c.h.b16 %v2165
    %v2827 = vunpack.c.l.b16 %v2166
    %v2828 = vunpack.c.h.b16 %v2166
    %v2829 = vunpack.c.l.b16 %v2167
    %v2830 = vunpack.c.h.b16 %v2167
    %v2831 = vunpack.c.l.b16 %v2168
    %v2832 = vunpack.c.h.b16 %v2168
    %v2833 = vunpack.c.l.b16 %v2169
    %v2834 = vunpack.c.h.b16 %v2169
    %v2835 = vunpack.c.l.b16 %v2170
    %v2836 = vunpack.c.h.b16 %v2170
    %v2837 = vunpack.c.l.b16 %v2171
    %v2838 = vunpack.c.h.b16 %v2171
    %v2839 = vunpack.c.l.b16 %v2172
    %v2840 = vunpack.c.h.b16 %v2172
    %v2841 = vunpack.c.l.b16 %v2173
    %v2842 = vunpack.c.h.b16 %v2173
    %v2843 = vunpack.c.l.b16 %v2174
    %v2844 = vunpack.c.h.b16 %v2174
    %v2845 = vunpack.c.l.b16 %v2175
    %v2846 = vunpack.c.h.b16 %v2175
    %v2847 = vunpack.c.l.b16 %v2176
    %v2848 = vunpack.c.h.b16 %v2176
    %v2849 = vunpack.c.l.b16 %v2177
    %v2850 = vunpack.c.h.b16 %v2177
    %v2851 = vunpack.c.l.b16 %v2178
    %v2852 = vunpack.c.h.b16 %v2178
    %v2853 = vunpack.c.l.b16 %v2179
    %v2854 = vunpack.c.h.b16 %v2179
    %v2855 = vunpack.c.l.b16 %v2180
    %v2856 = vunpack.c.h.b16 %v2180
    %v2857 = vunpack.c.l.b16 %v2181
    %v2858 = vunpack.c.h.b16 %v2181
    %v2859 = vunpack.c.l.b16 %v2182
    %v2860 = vunpack.c.h.b16 %v2182
    %v2861 = vunpack.c.l.b16 %v2183
    %v2862 = vunpack.c.h.b16 %v2183
    %v2863 = vunpack.c.l.b16 %v2184
    %v2864 = vunpack.c.h.b16 %v2184
    %v2865 = vunpack.c.l.b16 %v2185
    %v2866 = vunpack.c.h.b16 %v2185
    %v2867 = vunpack.c.l.b16 %v2186
    %v2868 = vunpack.c.h.b16 %v2186
    %v2869 = vunpack.c.l.b16 %v2187
    %v2870 = vunpack.c.h.b16 %v2187
    %v2871 = vunpack.c.l.b16 %v2188
    %v2872 = vunpack.c.h.b16 %v2188
    %v2873 = vunpack.c.l.b16 %v2189
    %v2874 = vunpack.c.h.b16 %v2189
    %v2875 = vunpack.c.l.b16 %v2190
    %v2876 = vunpack.c.h.b16 %v2190
    %v2877 = vunpack.c.l.b16 %v2191
    %v2878 = vunpack.c.h.b16 %v2191
    %v2879 = vunpack.c.l.b16 %v2192
    %v2880 = vunpack.c.h.b16 %v2192
    %v2881 = vunpack.c.l.b16 %v2193
    %v2882 = vunpack.c.h.b16 %v2193
    %v2883 = vunpack.c.l.b16 %v2194
    %v2884 = vunpack.c.h.b16 %v2194
    %v2885 = vunpack.c.l.b16 %v2195
    %v2886 = vunpack.c.h.b16 %v2195
    %v2887 = vunpack.c.l.b16 %v2196
    %v2888 = vunpack.c.h.b16 %v2196
    %v2889 = vunpack.c.l.b16 %v2197
    %v2890 = vunpack.c.h.b16 %v2197
    %v2891 = vunpack.c.l.b16 %v2198
    %v2892 = vunpack.c.h.b16 %v2198
    %v2893 = vunpack.c.l.b16 %v2199
    %v2894 = vunpack.c.h.b16 %v2199
    %v2895 = vunpack.c.l.b16 %v2200
    %v2896 = vunpack.c.h.b16 %v2200
    %v2897 = vunpack.c.l.b16 %v2201
    %v2898 = vunpack.c.h.b16 %v2201
    %v2899 = vunpack.c.l.b16 %v2202
    %v2900 = vunpack.c.h.b16 %v2202
    %v2901 = vunpack.c.l.b16 %v2203
    %v2902 = vunpack.c.h.b16 %v2203
    %v2903 = vunpack.c.l.b16 %v2204
    %v2904 = vunpack.c.h.b16 %v2204
    %v2905 = vunpack.c.l.b16 %v2205
    %v2906 = vunpack.c.h.b16 %v2205
    %v2907 = vunpack.c.l.b16 %v2206
    %v2908 = vunpack.c.h.b16 %v2206
    %v2909 = vunpack.c.l.b16 %v2207
    %v2910 = vunpack.c.h.b16 %v2207
    %v2911 = vunpack.c.l.b16 %v2208
    %v2912 = vunpack.c.h.b16 %v2208
    %v2913 = vunpack.c.l.b16 %v2209
    %v2914 = vunpack.c.h.b16 %v2209
    %v2915 = vunpack.c.l.b16 %v2210
    %v2916 = vunpack.c.h.b16 %v2210
    %v2917 = vunpack.c.l.b16 %v2211
    %v2918 = vunpack.c.h.b16 %v2211
    %v2919 = vunpack.c.l.b16 %v2212
    %v2920 = vunpack.c.h.b16 %v2212
    %v2921 = vunpack.c.l.b16 %v2213
    %v2922 = vunpack.c.h.b16 %v2213
    %v2923 = vunpack.c.l.b16 %v2214
    %v2924 = vunpack.c.h.b16 %v2214
    %v2925 = vunpack.c.l.b16 %v2215
    %v2926 = vunpack.c.h.b16 %v2215
    %v2927 = vunpack.c.l.b16 %v2216
    %v2928 = vunpack.c.h.b16 %v2216
    %v2929 = vunpack.c.l.b16 %v2217
    %v2930 = vunpack.c.h.b16 %v2217
    %v2931 = vunpack.c.l.b16 %v2218
    %v2932 = vunpack.c.h.b16 %v2218
    %v2933 = vunpack.c.l.b16 %v2219
    %v2934 = vunpack.c.h.b16 %v2219
    %v2935 = vunpack.c.l.b16 %v2220
    %v2936 = vunpack.c.h.b16 %v2220
    %v2937 = vunpack.c.l.b16 %v2221
    %v2938 = vunpack.c.h.b16 %v2221
    %v2939 = vunpack.c.l.b16 %v2222
    %v2940 = vunpack.c.h.b16 %v2222
    %v2941 = vunpack.c.l.b16 %v2223
    %v2942 = vunpack.c.h.b16 %v2223
    %v2943 = vunpack.c.l.b16 %v2224
    %v2944 = vunpack.c.h.b16 %v2224
    %v2945 = vunpack.c.l.b16 %v2225
    %v2946 = vunpack.c.h.b16 %v2225
    %v2947 = vunpack.c.l.b16 %v2226
    %v2948 = vunpack.c.h.b16 %v2226
    %v2949 = vunpack.c.l.b16 %v2227
    %v2950 = vunpack.c.h.b16 %v2227
    %v2951 = vunpack.c.l.b16 %v2228
    %v2952 = vunpack.c.h.b16 %v2228
    %v2953 = vunpack.c.l.b16 %v2229
    %v2954 = vunpack.c.h.b16 %v2229
    %v2955 = vunpack.c.l.b16 %v2230
    %v2956 = vunpack.c.h.b16 %v2230
    %v2957 = vunpack.c.l.b16 %v2231
    %v2958 = vunpack.c.h.b16 %v2231
    %v2959 = vunpack.c.l.b16 %v2232
    %v2960 = vunpack.c.h.b16 %v2232
    %v2961 = vunpack.c.l.b16 %v2233
    %v2962 = vunpack.c.h.b16 %v2233
    %v2963 = vunpack.c.l.b16 %v2234
    %v2964 = vunpack.c.h.b16 %v2234
    %v2965 = vunpack.c.l.b16 %v2235
    %v2966 = vunpack.c.h.b16 %v2235
    %v2967 = vunpack.c.l.b16 %v2236
    %v2968 = vunpack.c.h.b16 %v2236
    %v2969 = vunpack.c.l.b16 %v2237
    %v2970 = vunpack.c.h.b16 %v2237
    %v2971 = vunpack.c.l.b16 %v2238
    %v2972 = vunpack.c.h.b16 %v2238
    %v2973 = vunpack.c.l.b16 %v2239
    %v2974 = vunpack.c.h.b16 %v2239
    %v2975 = vunpack.c.l.b16 %v2240
    %v2976 = vunpack.c.h.b16 %v2240
    %v2977 = vunpack.c.l.b16 %v2241
    %v2978 = vunpack.c.h.b16 %v2241
    %v2979 = vunpack.c.l.b16 %v2242
    %v2980 = vunpack.c.h.b16 %v2242
    %v2981 = vunpack.c.l.b16 %v2243
    %v2982 = vunpack.c.h.b16 %v2243
    %v2983 = vunpack.c.l.b16 %v2244
    %v2984 = vunpack.c.h.b16 %v2244
    %v2985 = vunpack.c.l.b16 %v2245
    %v2986 = vunpack.c.h.b16 %v2245
    %v2987 = vunpack.c.l.b16 %v2246
    %v2988 = vunpack.c.h.b16 %v2246
    %v2989 = vunpack.c.l.b16 %v2247
    %v2990 = vunpack.c.h.b16 %v2247
    %v2991 = vunpack.c.l.b16 %v2248
    %v2992 = vunpack.c.h.b16 %v2248
    %v2993 = vunpack.c.l.b16 %v2249
    %v2994 = vunpack.c.h.b16 %v2249
    %v2995 = vunpack.c.l.b16 %v2250
    %v2996 = vunpack.c.h.b16 %v2250
    %v2997 = vunpack.c.l.b16 %v2251
    %v2998 = vunpack.c.h.b16 %v2251
    %v2999 = vunpack.c.l.b16 %v2252
    %v3000 = vunpack.c.h.b16 %v2252
    %v3001 = vunpack.c.l.b16 %v2253
    %v3002 = vunpack.c.h.b16 %v2253
    %v3003 = vunpack.c.l.b16 %v2254
    %v3004 = vunpack.c.h.b16 %v2254
    %v3005 = vunpack.c.l.b16 %v2255
    %v3006 = vunpack.c.h.b16 %v2255
    %v3007 = vunpack.c.l.b16 %v2256
    %v3008 = vunpack.c.h.b16 %v2256
    %v3009 = vunpack.c.l.b16 %v2257
    %v3010 = vunpack.c.h.b16 %v2257
    %v3011 = vunpack.c.l.b16 %v2258
    %v3012 = vunpack.c.h.b16 %v2258
    %v3013 = vunpack.c.l.b16 %v2259
    %v3014 = vunpack.c.h.b16 %v2259
    %v3015 = vunpack.c.l.b16 %v2260
    %v3016 = vunpack.c.h.b16 %v2260
    %v3017 = vunpack.c.l.b16 %v2261
    %v3018 = vunpack.c.h.b16 %v2261
    %v3019 = vunpack.c.l.b16 %v2262
    %v3020 = vunpack.c.h.b16 %v2262
    %v3021 = vunpack.c.l.b16 %v2263
    %v3022 = vunpack.c.h.b16 %v2263
    %v3023 = vunpack.c.l.b16 %v2264
    %v3024 = vunpack.c.h.b16 %v2264
    %v3025 = vunpack.c.l.b16 %v2265
    %v3026 = vunpack.c.h.b16 %v2265
    %v3027 = vunpack.c.l.b16 %v2266
    %v3028 = vunpack.c.h.b16 %v2266
    %v3029 = vunpack.c.l.b16 %v2267
    %v3030 = vunpack.c.h.b16 %v2267
    %v3031 = vunpack.c.l.b16 %v2268
    %v3032 = vunpack.c.h.b16 %v2268
    %v3033 = vunpack.c.l.b16 %v2269
    %v3034 = vunpack.c.h.b16 %v2269
    %v3035 = vunpack.c.l.b16 %v2270
    %v3036 = vunpack.c.h.b16 %v2270
    %v3037 = vunpack.c.l.b16 %v2271
    %v3038 = vunpack.c.h.b16 %v2271
    %v3039 = vunpack.c.l.b16 %v2272
    %v3040 = vunpack.c.h.b16 %v2272
    %v3041 = vpack.c.b16 %v2537, %v2529
    %v3042 = vpack.c.b16 %v2538, %v2530
    %v3043 = vpack.c.b16 %v2539, %v2531
    %v3044 = vpack.c.b16 %v2540, %v2532
    %v3045 = vpack.c.b16 %v2541, %v2533
    %v3046 = vpack.c.b16 %v2542, %v2534
    %v3047 = vpack.c.b16 %v2543, %v2535
    %v3048 = vpack.c.b16 %v2544, %v2536
    %v3049 = vpack.c.b16 %v2553, %v2545
    %v3050 = vpack.c.b16 %v2554, %v2546
    %v3051 = vpack.c.b16 %v2555, %v2547
    %v3052 = vpack.c.b16 %v2556, %v2548
    %v3053 = vpack.c.b16 %v2557, %v2549
    %v3054 = vpack.c.b16 %v2558, %v2550
    %v3055 = vpack.c.b16 %v2559, %v2551
    %v3056 = vpack.c.b16 %v2560, %v2552
    %v3057 = vpack.c.b16 %v2569, %v2561
    %v3058 = vpack.c.b16 %v2570, %v2562
    %v3059 = vpack.c.b16 %v2571, %v2563
    %v3060 = vpack.c.b16 %v2572, %v2564
    %v3061 = vpack.c.b16 %v2573, %v2565
    %v3062 = vpack.c.b16 %v2574, %v2566
    %v3063 = vpack.c.b16 %v2575, %v2567
    %v3064 = vpack.c.b16 %v2576, %v2568
    %v3065 = vpack.c.b16 %v2585, %v2577
    %v3066 = vpack.c.b16 %v2586, %v2578
    %v3067 = vpack.c.b16 %v2587, %v2579
    %v3068 = vpack.c.b16 %v2588, %v2580
    %v3069 = vpack.c.b16 %v2589, %v2581
    %v3070 = vpack.c.b16 %v2590, %v2582
    %v3071 = vpack.c.b16 %v2591, %v2583
    %v3072 = vpack.c.b16 %v2592, %v2584
    %v3073 = vpack.c.b16 %v2601, %v2593
    %v3074 = vpack.c.b16 %v2602, %v2594
    %v3075 = vpack.c.b16 %v2603, %v2595
    %v3076 = vpack.c.b16 %v2604, %v2596
    %v3077 = vpack.c.b16 %v2605, %v2597
    %v3078 = vpack.c.b16 %v2606, %v2598
    %v3079 = vpack.c.b16 %v2607, %v2599
    %v3080 = vpack.c.b16 %v2608, %v2600
    %v3081 = vpack.c.b16 %v2617, %v2609
    %v3082 = vpack.c.b16 %v2618, %v2610
    %v3083 = vpack.c.b16 %v2619, %v2611
    %v3084 = vpack.c.b16 %v2620, %v2612
    %v3085 = vpack.c.b16 %v2621, %v2613
    %v3086 = vpack.c.b16 %v2622, %v2614
    %v3087 = vpack.c.b16 %v2623, %v2615
    %v3088 = vpack.c.b16 %v2624, %v2616
    %v3089 = vpack.c.b16 %v2633, %v2625
    %v3090 = vpack.c.b16 %v2634, %v2626
    %v3091 = vpack.c.b16 %v2635, %v2627
    %v3092 = vpack.c.b16 %v2636, %v2628
    %v3093 = vpack.c.b16 %v2637, %v2629
    %v3094 = vpack.c.b16 %v2638, %v2630
    %v3095 = vpack.c.b16 %v2639, %v2631
    %v3096 = vpack.c.b16 %v2640, %v2632
    %v3097 = vpack.c.b16 %v2649, %v2641
    %v3098 = vpack.c.b16 %v2650, %v2642
    %v3099 = vpack.c.b16 %v2651, %v2643
    %v3100 = vpack.c.b16 %v2652, %v2644
    %v3101 = vpack.c.b16 %v2653, %v2645
    %v3102 = vpack.c.b16 %v2654, %v2646
    %v3103 = vpack.c.b16 %v2655, %v2647
    %v3104 = vpack.c.b16 %v2656, %v2648
    %v3105 = vpack.c.b16 %v2665, %v2657
    %v3106 = vpack.c.b16 %v2666, %v2658
    %v3107 = vpack.c.b16 %v2667, %v2659
    %v3108 = vpack.c.b16 %v2668, %v2660
    %v3109 = vpack.c.b16 %v2669, %v2661
    %v3110 = vpack.c.b16 %v2670, %v2662
    %v3111 = vpack.c.b16 %v2671, %v2663
    %v3112 = vpack.c.b16 %v2672, %v2664
    %v3113 = vpack.c.b16 %v2681, %v2673
    %v3114 = vpack.c.b16 %v2682, %v2674
    %v3115 = vpack.c.b16 %v2683, %v2675
    %v3116 = vpack.c.b16 %v2684, %v2676
    %v3117 = vpack.c.b16 %v2685, %v2677
    %v3118 = vpack.c.b16 %v2686, %v2678
    %v3119 = vpack.c.b16 %v2687, %v2679
    %v3120 = vpack.c.b16 %v2688, %v2680
    %v3121 = vpack.c.b16 %v2697, %v2689
    %v3122 = vpack.c.b16 %v2698, %v2690
    %v3123 = vpack.c.b16 %v2699, %v2691
    %v3124 = vpack.c.b16 %v2700, %v2692
    %v3125 = vpack.c.b16 %v2701, %v2693
    %v3126 = vpack.c.b16 %v2702, %v2694
    %v3127 = vpack.c.b16 %v2703, %v2695
    %v3128 = vpack.c.b16 %v2704, %v2696
    %v3129 = vpack.c.b16 %v2713, %v2705
    %v3130 = vpack.c.b16 %v2714, %v2706
    %v3131 = vpack.c.b16 %v2715, %v2707
    %v3132 = vpack.c.b16 %v2716, %v2708
    %v3133 = vpack.c.b16 %v2717, %v2709
    %v3134 = vpack.c.b16 %v2718, %v2710
    %v3135 = vpack.c.b16 %v2719, %v2711
    %v3136 = vpack.c.b16 %v2720, %v2712
    %v3137 = vpack.c.b16 %v2729, %v2721
    %v3138 = vpack.c.b16 %v2730, %v2722
    %v3139 = vpack.c.b16 %v2731, %v2723
    %v3140 = vpack.c.b16 %v2732, %v2724
    %v3141 = vpack.c.b16 %v2733, %v2725
    %v3142 = vpack.c.b16 %v2734, %v2726
    %v3143 = vpack.c.b16 %v2735, %v2727
    %v3144 = vpack.c.b16 %v2736, %v2728
    %v3145 = vpack.c.b16 %v2745, %v2737
    %v3146 = vpack.c.b16 %v2746, %v2738
    %v3147 = vpack.c.b16 %v2747, %v2739
    %v3148 = vpack.c.b16 %v2748, %v2740
    %v3149 = vpack.c.b16 %v2749, %v2741
    %v3150 = vpack.c.b16 %v2750, %v2742
    %v3151 = vpack.c.b16 %v2751, %v2743
    %v3152 = vpack.c.b16 %v2752, %v2744
    %v3153 = vpack.c.b16 %v2761, %v2753
    %v3154 = vpack.c.b16 %v2762, %v2754
    %v3155 = vpack.c.b16 %v2763, %v2755
    %v3156 = vpack.c.b16 %v2764, %v2756
    %v3157 = vpack.c.b16 %v2765, %v2757
    %v3158 = vpack.c.b16 %v2766, %v2758
    %v3159 = vpack.c.b16 %v2767, %v2759
    %v3160 = vpack.c.b16 %v2768, %v2760
    %v3161 = vpack.c.b16 %v2777, %v2769
    %v3162 = vpack.c.b16 %v2778, %v2770
    %v3163 = vpack.c.b16 %v2779, %v2771
    %v3164 = vpack.c.b16 %v2780, %v2772
    %v3165 = vpack.c.b16 %v2781, %v2773
    %v3166 = vpack.c.b16 %v2782, %v2774
    %v3167 = vpack.c.b16 %v2783, %v2775
    %v3168 = vpack.c.b16 %v2784, %v2776
    %v3169 = vpack.c.b16 %v2793, %v2785
    %v3170 = vpack.c.b16 %v2794, %v2786
    %v3171 = vpack.c.b16 %v2795, %v2787
    %v3172 = vpack.c.b16 %v2796, %v2788
    %v3173 = vpack.c.b16 %v2797, %v2789
    %v3174 = vpack.c.b16 %v2798, %v2790
    %v3175 = vpack.c.b16 %v2799, %v2791
    %v3176 = vpack.c.b16 %v2800, %v2792
    %v3177 = vpack.c.b16 %v2809, %v2801
    %v3178 = vpack.c.b16 %v2810, %v2802
    %v3179 = vpack.c.b16 %v2811, %v2803
    %v3180 = vpack.c.b16 %v2812, %v2804
    %v3181 = vpack.c.b16 %v2813, %v2805
    %v3182 = vpack.c.b16 %v2814, %v2806
    %v3183 = vpack.c.b16 %v2815, %v2807
    %v3184 = vpack.c.b16 %v2816, %v2808
    %v3185 = vpack.c.b16 %v2825, %v2817
    %v3186 = vpack.c.b16 %v2826, %v2818
    %v3187 = vpack.c.b16 %v2827, %v2819
    %v3188 = vpack.c.b16 %v2828, %v2820
    %v3189 = vpack.c.b16 %v2829, %v2821
    %v3190 = vpack.c.b16 %v2830, %v2822
    %v3191 = vpack.c.b16 %v2831, %v2823
    %v3192 = vpack.c.b16 %v2832, %v2824
    %v3193 = vpack.c.b16 %v2841, %v2833
    %v3194 = vpack.c.b16 %v2842, %v2834
    %v3195 = vpack.c.b16 %v2843, %v2835
    %v3196 = vpack.c.b16 %v2844, %v2836
    %v3197 = vpack.c.b16 %v2845, %v2837
    %v3198 = vpack.c.b16 %v2846, %v2838
    %v3199 = vpack.c.b16 %v2847, %v2839
    %v3200 = vpack.c.b16 %v2848, %v2840
    %v3201 = vpack.c.b16 %v2857, %v2849
    %v3202 = vpack.c.b16 %v2858, %v2850
    %v3203 = vpack.c.b16 %v2859, %v2851
    %v3204 = vpack.c.b16 %v2860, %v2852
    %v3205 = vpack.c.b16 %v2861, %v2853
    %v3206 = vpack.c.b16 %v2862, %v2854
    %v3207 = vpack.c.b16 %v2863, %v2855
    %v3208 = vpack.c.b16 %v2864, %v2856
    %v3209 = vpack.c.b16 %v2873, %v2865
    %v3210 = vpack.c.b16 %v2874, %v2866
    %v3211 = vpack.c.b16 %v2875, %v2867
    %v3212 = vpack.c.b16 %v2876, %v2868
    %v3213 = vpack.c.b16 %v2877, %v2869
    %v3214 = vpack.c.b16 %v2878, %v2870
    %v3215 = vpack.c.b16 %v2879, %v2871
    %v3216 = vpack.c.b16 %v2880, %v2872
    %v3217 = vpack.c.b16 %v2889, %v2881
    %v3218 = vpack.c.b16 %v2890, %v2882
    %v3219 = vpack.c.b16 %v2891, %v2883
    %v3220 = vpack.c.b16 %v2892, %v2884
    %v3221 = vpack.c.b16 %v2893, %v2885
    %v3222 = vpack.c.b16 %v2894, %v2886
    %v3223 = vpack.c.b16 %v2895, %v2887
    %v3224 = vpack.c.b16 %v2896, %v2888
    %v3225 = vpack.c.b16 %v2905, %v2897
    %v3226 = vpack.c.b16 %v2906, %v2898
    %v3227 = vpack.c.b16 %v2907, %v2899
    %v3228 = vpack.c.b16 %v2908, %v2900
    %v3229 = vpack.c.b16 %v2909, %v2901
    %v3230 = vpack.c.b16 %v2910, %v2902
    %v3231 = vpack.c.b16 %v2911, %v2903
    %v3232 = vpack.c.b16 %v2912, %v2904
    %v3233 = vpack.c.b16 %v2921, %v2913
    %v3234 = vpack.c.b16 %v2922, %v2914
    %v3235 = vpack.c.b16 %v2923, %v2915
    %v3236 = vpack.c.b16 %v2924, %v2916
    %v3237 = vpack.c.b16 %v2925, %v2917
    %v3238 = vpack.c.b16 %v2926, %v2918
    %v3239 = vpack.c.b16 %v2927, %v2919
    %v3240 = vpack.c.b16 %v2928, %v2920
    %v3241 = vpack.c.b16 %v2937, %v2929
    %v3242 = vpack.c.b16 %v2938, %v2930
    %v3243 = vpack.c.b16 %v2939, %v2931
    %v3244 = vpack.c.b16 %v2940, %v2932
    %v3245 = vpack.c.b16 %v2941, %v2933
    %v3246 = vpack.c.b16 %v2942, %v2934
    %v3247 = vpack.c.b16 %v2943, %v2935
    %v3248 = vpack.c.b16 %v2944, %v2936
    %v3249 = vpack.c.b16 %v2953, %v2945
    %v3250 = vpack.c.b16 %v2954, %v2946
    %v3251 = vpack.c.b16 %v2955, %v2947
    %v3252 = vpack.c.b16 %v2956, %v2948
    %v3253 = vpack.c.b16 %v2957, %v2949
    %v3254 = vpack.c.b16 %v2958, %v2950
    %v3255 = vpack.c.b16 %v2959, %v2951
    %v3256 = vpack.c.b16 %v2960, %v2952
    %v3257 = vpack.c.b16 %v2969, %v2961
    %v3258 = vpack.c.b16 %v2970, %v2962
    %v3259 = vpack.c.b16 %v2971, %v2963
    %v3260 = vpack.c.b16 %v2972, %v2964
    %v3261 = vpack.c.b16 %v2973, %v2965
    %v3262 = vpack.c.b16 %v2974, %v2966
    %v3263 = vpack.c.b16 %v2975, %v2967
    %v3264 = vpack.c.b16 %v2976, %v2968
    %v3265 = vpack.c.b16 %v2985, %v2977
    %v3266 = vpack.c.b16 %v2986, %v2978
    %v3267 = vpack.c.b16 %v2987, %v2979
    %v3268 = vpack.c.b16 %v2988, %v2980
    %v3269 = vpack.c.b16 %v2989, %v2981
    %v3270 = vpack.c.b16 %v2990, %v2982
    %v3271 = vpack.c.b16 %v2991, %v2983
    %v3272 = vpack.c.b16 %v2992, %v2984
    %v3273 = vpack.c.b16 %v3001, %v2993
    %v3274 = vpack.c.b16 %v3002, %v2994
    %v3275 = vpack.c.b16 %v3003, %v2995
    %v3276 = vpack.c.b16 %v3004, %v2996
    %v3277 = vpack.c.b16 %v3005, %v2997
    %v3278 = vpack.c.b16 %v3006, %v2998
    %v3279 = vpack.c.b16 %v3007, %v2999
    %v3280 = vpack.c.b16 %v3008, %v3000
    %v3281 = vpack.c.b16 %v3017, %v3009
    %v3282 = vpack.c.b16 %v3018, %v3010
    %v3283 = vpack.c.b16 %v3019, %v3011
    %v3284 = vpack.c.b16 %v3020, %v3012
    %v3285 = vpack.c.b16 %v3021, %v3013
    %v3286 = vpack.c.b16 %v3022, %v3014
    %v3287 = vpack.c.b16 %v3023, %v3015
    %v3288 = vpack.c.b16 %v3024, %v3016
    %v3289 = vpack.c.b16 %v3033, %v3025
    %v3290 = vpack.c.b16 %v3034, %v3026
    %v3291 = vpack.c.b16 %v3035, %v3027
    %v3292 = vpack.c.b16 %v3036, %v3028
    %v3293 = vpack.c.b16 %v3037, %v3029
    %v3294 = vpack.c.b16 %v3038, %v3030
    %v3295 = vpack.c.b16 %v3039, %v3031
    %v3296 = vpack.c.b16 %v3040, %v3032
    %3553 = vmatprep.subr.bf16.mxu0 %v3042
    %3554 = vmatpush1.bf16.msra.mxu0 %v3041
    %3555 = vmatprep.subr.bf16.mxu0 %v3050
    %3556 = vmatpush1.bf16.msra.mxu0 %v3049
    %3557 = vmatprep.subr.bf16.mxu0 %v3058
    %3558 = vmatpush1.bf16.msra.mxu0 %v3057
    %3559 = vmatprep.subr.bf16.mxu0 %v3066
    %3560 = vmatpush1.bf16.msra.mxu0 %v3065
    %3561 = vmatprep.subr.bf16.mxu0 %v3074
    %3562 = vmatpush1.bf16.msra.mxu0 %v3073
    %3563 = vmatprep.subr.bf16.mxu0 %v3082
    %3564 = vmatpush1.bf16.msra.mxu0 %v3081
    %3565 = vmatprep.subr.bf16.mxu0 %v3090
    %3566 = vmatpush1.bf16.msra.mxu0 %v3089
    %3567 = vmatprep.subr.bf16.mxu0 %v3098
    %3568 = vmatpush1.bf16.msra.mxu0 %v3097
    %3569 = vmatprep.subr.bf16.mxu0 %v3106
    %3570 = vmatpush1.bf16.msra.mxu0 %v3105
    %3571 = vmatprep.subr.bf16.mxu0 %v3114
    %3572 = vmatpush1.bf16.msra.mxu0 %v3113
    %3573 = vmatprep.subr.bf16.mxu0 %v3122
    %3574 = vmatpush1.bf16.msra.mxu0 %v3121
    %3575 = vmatprep.subr.bf16.mxu0 %v3130
    %3576 = vmatpush1.bf16.msra.mxu0 %v3129
    %3577 = vmatprep.subr.bf16.mxu0 %v3138
    %3578 = vmatpush1.bf16.msra.mxu0 %v3137
    %3579 = vmatprep.subr.bf16.mxu0 %v3146
    %3580 = vmatpush1.bf16.msra.mxu0 %v3145
    %3581 = vmatprep.subr.bf16.mxu0 %v3154
    %3582 = vmatpush1.bf16.msra.mxu0 %v3153
    %3583 = vmatprep.subr.bf16.mxu0 %v3162
    %3584 = vmatpush1.bf16.msra.mxu0 %v3161
    %3585 = vmatprep.mubr.bf16.mxu0 %v2014
    %3586 = vmatmul.mubr.bf16.gmra.mrb[0].mxu0 %v2013
    %v3587 = vpop.f32.mrb[0].mxu0
    %v3588 = vadd.f32 0.0, %v3587
    %v3589 = vpop.f32.mrb[0].mxu0
    %v3590 = vadd.f32 0.0, %v3589
    %v3591 = vpop.f32.mrb[0].mxu0
    %v3592 = vpop.f32.mrb[0].mxu0
    %3593 = vdwg.mxu0
    %3594 = vmatprep.subr.bf16.mxu0 %v3170
    %3595 = vmatpush1.bf16.msra.mxu0 %v3169
    %3596 = vmatprep.subr.bf16.mxu0 %v3178
    %3597 = vmatpush1.bf16.msra.mxu0 %v3177
    %3598 = vmatprep.subr.bf16.mxu0 %v3186
    %3599 = vmatpush1.bf16.msra.mxu0 %v3185
    %3600 = vmatprep.subr.bf16.mxu0 %v3194
    %3601 = vmatpush1.bf16.msra.mxu0 %v3193
    %3602 = vmatprep.subr.bf16.mxu0 %v3202
    %3603 = vmatpush1.bf16.msra.mxu0 %v3201
    %3604 = vmatprep.subr.bf16.mxu0 %v3210
    %3605 = vmatpush1.bf16.msra.mxu0 %v3209
    %3606 = vmatprep.subr.bf16.mxu0 %v3218
    %3607 = vmatpush1.bf16.msra.mxu0 %v3217
    %3608 = vmatprep.subr.bf16.mxu0 %v3226
    %3609 = vmatpush1.bf16.msra.mxu0 %v3225
    %3610 = vmatprep.subr.bf16.mxu0 %v3234
    %3611 = vmatpush1.bf16.msra.mxu0 %v3233
    %3612 = vmatprep.subr.bf16.mxu0 %v3242
    %3613 = vmatpush1.bf16.msra.mxu0 %v3241
    %3614 = vmatprep.subr.bf16.mxu0 %v3250
    %3615 = vmatpush1.bf16.msra.mxu0 %v3249
    %3616 = vmatprep.subr.bf16.mxu0 %v3258
    %3617 = vmatpush1.bf16.msra.mxu0 %v3257
    %3618 = vmatprep.subr.bf16.mxu0 %v3266
    %3619 = vmatpush1.bf16.msra.mxu0 %v3265
    %3620 = vmatprep.subr.bf16.mxu0 %v3274
    %3621 = vmatpush1.bf16.msra.mxu0 %v3273
    %3622 = vmatprep.subr.bf16.mxu0 %v3282
    %3623 = vmatpush1.bf16.msra.mxu0 %v3281
    %3624 = vmatprep.subr.bf16.mxu0 %v3290
    %3625 = vmatpush1.bf16.msra.mxu0 %v3289
    %3626 = vmatprep.mubr.bf16.mxu0 %v2016
    %3627 = vmatmul.mubr.bf16.gmra.mrb[0].mxu0 %v2015
    %v3628 = vpop.f32.mrb[0].mxu0
    %v3629 = vadd.f32 %v3588, %v3628
    %v3630 = vpop.f32.mrb[0].mxu0
    %v3631 = vadd.f32 %v3590, %v3630
    %v3632 = vpop.f32.mrb[0].mxu0
    %v3633 = vpop.f32.mrb[0].mxu0
    %3634 = vdwg.mxu0
    %3635 = vmatprep.subr.bf16.mxu0 %v3044
    %3636 = vmatpush1.bf16.msra.mxu0 %v3043
    %3637 = vmatprep.subr.bf16.mxu0 %v3052
    %3638 = vmatpush1.bf16.msra.mxu0 %v3051
    %3639 = vmatprep.subr.bf16.mxu0 %v3060
    %3640 = vmatpush1.bf16.msra.mxu0 %v3059
    %3641 = vmatprep.subr.bf16.mxu0 %v3068
    %3642 = vmatpush1.bf16.msra.mxu0 %v3067
    %3643 = vmatprep.subr.bf16.mxu0 %v3076
    %3644 = vmatpush1.bf16.msra.mxu0 %v3075
    %3645 = vmatprep.subr.bf16.mxu0 %v3084
    %3646 = vmatpush1.bf16.msra.mxu0 %v3083
    %3647 = vmatprep.subr.bf16.mxu0 %v3092
    %3648 = vmatpush1.bf16.msra.mxu0 %v3091
    %3649 = vmatprep.subr.bf16.mxu0 %v3100
    %3650 = vmatpush1.bf16.msra.mxu0 %v3099
    %3651 = vmatprep.subr.bf16.mxu0 %v3108
    %3652 = vmatpush1.bf16.msra.mxu0 %v3107
    %3653 = vmatprep.subr.bf16.mxu0 %v3116
    %3654 = vmatpush1.bf16.msra.mxu0 %v3115
    %3655 = vmatprep.subr.bf16.mxu0 %v3124
    %3656 = vmatpush1.bf16.msra.mxu0 %v3123
    %3657 = vmatprep.subr.bf16.mxu0 %v3132
    %3658 = vmatpush1.bf16.msra.mxu0 %v3131
    %3659 = vmatprep.subr.bf16.mxu0 %v3140
    %3660 = vmatpush1.bf16.msra.mxu0 %v3139
    %3661 = vmatprep.subr.bf16.mxu0 %v3148
    %3662 = vmatpush1.bf16.msra.mxu0 %v3147
    %3663 = vmatprep.subr.bf16.mxu0 %v3156
    %3664 = vmatpush1.bf16.msra.mxu0 %v3155
    %3665 = vmatprep.subr.bf16.mxu0 %v3164
    %3666 = vmatpush1.bf16.msra.mxu0 %v3163
    %3667 = vmatprep.mubr.bf16.mxu0 %v2014
    %3668 = vmatmul.mubr.bf16.gmra.mrb[0].mxu0 %v2013
    %v3669 = vpop.f32.mrb[0].mxu0
    %v3670 = vadd.f32 0.0, %v3669
    %v3671 = vpop.f32.mrb[0].mxu0
    %v3672 = vadd.f32 0.0, %v3671
    %v3673 = vpop.f32.mrb[0].mxu0
    %v3674 = vpop.f32.mrb[0].mxu0
    %3675 = vdwg.mxu0
    %3676 = vmatprep.subr.bf16.mxu0 %v3172
    %3677 = vmatpush1.bf16.msra.mxu0 %v3171
    %3678 = vmatprep.subr.bf16.mxu0 %v3180
    %3679 = vmatpush1.bf16.msra.mxu0 %v3179
    %3680 = vmatprep.subr.bf16.mxu0 %v3188
    %3681 = vmatpush1.bf16.msra.mxu0 %v3187
    %3682 = vmatprep.subr.bf16.mxu0 %v3196
    %3683 = vmatpush1.bf16.msra.mxu0 %v3195
    %3684 = vmatprep.subr.bf16.mxu0 %v3204
    %3685 = vmatpush1.bf16.msra.mxu0 %v3203
    %3686 = vmatprep.subr.bf16.mxu0 %v3212
    %3687 = vmatpush1.bf16.msra.mxu0 %v3211
    %3688 = vmatprep.subr.bf16.mxu0 %v3220
    %3689 = vmatpush1.bf16.msra.mxu0 %v3219
    %3690 = vmatprep.subr.bf16.mxu0 %v3228
    %3691 = vmatpush1.bf16.msra.mxu0 %v3227
    %3692 = vmatprep.subr.bf16.mxu0 %v3236
    %3693 = vmatpush1.bf16.msra.mxu0 %v3235
    %3694 = vmatprep.subr.bf16.mxu0 %v3244
    %3695 = vmatpush1.bf16.msra.mxu0 %v3243
    %3696 = vmatprep.subr.bf16.mxu0 %v3252
    %3697 = vmatpush1.bf16.msra.mxu0 %v3251
    %3698 = vmatprep.subr.bf16.mxu0 %v3260
    %3699 = vmatpush1.bf16.msra.mxu0 %v3259
    %3700 = vmatprep.subr.bf16.mxu0 %v3268
    %3701 = vmatpush1.bf16.msra.mxu0 %v3267
    %3702 = vmatprep.subr.bf16.mxu0 %v3276
    %3703 = vmatpush1.bf16.msra.mxu0 %v3275
    %3704 = vmatprep.subr.bf16.mxu0 %v3284
    %3705 = vmatpush1.bf16.msra.mxu0 %v3283
    %3706 = vmatprep.subr.bf16.mxu0 %v3292
    %3707 = vmatpush1.bf16.msra.mxu0 %v3291
    %3708 = vmatprep.mubr.bf16.mxu0 %v2016
    %3709 = vmatmul.mubr.bf16.gmra.mrb[0].mxu0 %v2015
    %v3710 = vpop.f32.mrb[0].mxu0
    %v3711 = vadd.f32 %v3670, %v3710
    %v3712 = vpop.f32.mrb[0].mxu0
    %v3713 = vadd.f32 %v3672, %v3712
    %v3714 = vpop.f32.mrb[0].mxu0
    %v3715 = vpop.f32.mrb[0].mxu0
    %3716 = vdwg.mxu0
    %3717 = vmatprep.subr.bf16.mxu0 %v3046
    %3718 = vmatpush1.bf16.msra.mxu0 %v3045
    %3719 = vmatprep.subr.bf16.mxu0 %v3054
    %3720 = vmatpush1.bf16.msra.mxu0 %v3053
    %3721 = vmatprep.subr.bf16.mxu0 %v3062
    %3722 = vmatpush1.bf16.msra.mxu0 %v3061
    %3723 = vmatprep.subr.bf16.mxu0 %v3070
    %3724 = vmatpush1.bf16.msra.mxu0 %v3069
    %3725 = vmatprep.subr.bf16.mxu0 %v3078
    %3726 = vmatpush1.bf16.msra.mxu0 %v3077
    %3727 = vmatprep.subr.bf16.mxu0 %v3086
    %3728 = vmatpush1.bf16.msra.mxu0 %v3085
    %3729 = vmatprep.subr.bf16.mxu0 %v3094
    %3730 = vmatpush1.bf16.msra.mxu0 %v3093
    %3731 = vmatprep.subr.bf16.mxu0 %v3102
    %3732 = vmatpush1.bf16.msra.mxu0 %v3101
    %3733 = vmatprep.subr.bf16.mxu0 %v3110
    %3734 = vmatpush1.bf16.msra.mxu0 %v3109
    %3735 = vmatprep.subr.bf16.mxu0 %v3118
    %3736 = vmatpush1.bf16.msra.mxu0 %v3117
    %3737 = vmatprep.subr.bf16.mxu0 %v3126
    %3738 = vmatpush1.bf16.msra.mxu0 %v3125
    %3739 = vmatprep.subr.bf16.mxu0 %v3134
    %3740 = vmatpush1.bf16.msra.mxu0 %v3133
    %3741 = vmatprep.subr.bf16.mxu0 %v3142
    %3742 = vmatpush1.bf16.msra.mxu0 %v3141
    %3743 = vmatprep.subr.bf16.mxu0 %v3150
    %3744 = vmatpush1.bf16.msra.mxu0 %v3149
    %3745 = vmatprep.subr.bf16.mxu0 %v3158
    %3746 = vmatpush1.bf16.msra.mxu0 %v3157
    %3747 = vmatprep.subr.bf16.mxu0 %v3166
    %3748 = vmatpush1.bf16.msra.mxu0 %v3165
    %3749 = vmatprep.mubr.bf16.mxu0 %v2014
    %3750 = vmatmul.mubr.bf16.gmra.mrb[0].mxu0 %v2013
    %v3751 = vpop.f32.mrb[0].mxu0
    %v3752 = vadd.f32 0.0, %v3751
    %v3753 = vpop.f32.mrb[0].mxu0
    %v3754 = vadd.f32 0.0, %v3753
    %v3755 = vpop.f32.mrb[0].mxu0
    %v3756 = vpop.f32.mrb[0].mxu0
    %3757 = vdwg.mxu0
    %3758 = vmatprep.subr.bf16.mxu0 %v3174
    %3759 = vmatpush1.bf16.msra.mxu0 %v3173
    %3760 = vmatprep.subr.bf16.mxu0 %v3182
    %3761 = vmatpush1.bf16.msra.mxu0 %v3181
    %3762 = vmatprep.subr.bf16.mxu0 %v3190
    %3763 = vmatpush1.bf16.msra.mxu0 %v3189
    %3764 = vmatprep.subr.bf16.mxu0 %v3198
    %3765 = vmatpush1.bf16.msra.mxu0 %v3197
    %3766 = vmatprep.subr.bf16.mxu0 %v3206
    %3767 = vmatpush1.bf16.msra.mxu0 %v3205
    %3768 = vmatprep.subr.bf16.mxu0 %v3214
    %3769 = vmatpush1.bf16.msra.mxu0 %v3213
    %3770 = vmatprep.subr.bf16.mxu0 %v3222
    %3771 = vmatpush1.bf16.msra.mxu0 %v3221
    %3772 = vmatprep.subr.bf16.mxu0 %v3230
    %3773 = vmatpush1.bf16.msra.mxu0 %v3229
    %3774 = vmatprep.subr.bf16.mxu0 %v3238
    %3775 = vmatpush1.bf16.msra.mxu0 %v3237
    %3776 = vmatprep.subr.bf16.mxu0 %v3246
    %3777 = vmatpush1.bf16.msra.mxu0 %v3245
    %3778 = vmatprep.subr.bf16.mxu0 %v3254
    %3779 = vmatpush1.bf16.msra.mxu0 %v3253
    %3780 = vmatprep.subr.bf16.mxu0 %v3262
    %3781 = vmatpush1.bf16.msra.mxu0 %v3261
    %3782 = vmatprep.subr.bf16.mxu0 %v3270
    %3783 = vmatpush1.bf16.msra.mxu0 %v3269
    %3784 = vmatprep.subr.bf16.mxu0 %v3278
    %3785 = vmatpush1.bf16.msra.mxu0 %v3277
    %3786 = vmatprep.subr.bf16.mxu0 %v3286
    %3787 = vmatpush1.bf16.msra.mxu0 %v3285
    %3788 = vmatprep.subr.bf16.mxu0 %v3294
    %3789 = vmatpush1.bf16.msra.mxu0 %v3293
    %3790 = vmatprep.mubr.bf16.mxu0 %v2016
    %3791 = vmatmul.mubr.bf16.gmra.mrb[0].mxu0 %v2015
    %v3792 = vpop.f32.mrb[0].mxu0
    %v3793 = vadd.f32 %v3752, %v3792
    %v3794 = vpop.f32.mrb[0].mxu0
    %v3795 = vadd.f32 %v3754, %v3794
    %v3796 = vpop.f32.mrb[0].mxu0
    %v3797 = vpop.f32.mrb[0].mxu0
    %3798 = vdwg.mxu0
    %3799 = vmatprep.subr.bf16.mxu0 %v3048
    %3800 = vmatpush1.bf16.msra.mxu0 %v3047
    %3801 = vmatprep.subr.bf16.mxu0 %v3056
    %3802 = vmatpush1.bf16.msra.mxu0 %v3055
    %3803 = vmatprep.subr.bf16.mxu0 %v3064
    %3804 = vmatpush1.bf16.msra.mxu0 %v3063
    %3805 = vmatprep.subr.bf16.mxu0 %v3072
    %3806 = vmatpush1.bf16.msra.mxu0 %v3071
    %3807 = vmatprep.subr.bf16.mxu0 %v3080
    %3808 = vmatpush1.bf16.msra.mxu0 %v3079
    %3809 = vmatprep.subr.bf16.mxu0 %v3088
    %3810 = vmatpush1.bf16.msra.mxu0 %v3087
    %3811 = vmatprep.subr.bf16.mxu0 %v3096
    %3812 = vmatpush1.bf16.msra.mxu0 %v3095
    %3813 = vmatprep.subr.bf16.mxu0 %v3104
    %3814 = vmatpush1.bf16.msra.mxu0 %v3103
    %3815 = vmatprep.subr.bf16.mxu0 %v3112
    %3816 = vmatpush1.bf16.msra.mxu0 %v3111
    %3817 = vmatprep.subr.bf16.mxu0 %v3120
    %3818 = vmatpush1.bf16.msra.mxu0 %v3119
    %3819 = vmatprep.subr.bf16.mxu0 %v3128
    %3820 = vmatpush1.bf16.msra.mxu0 %v3127
    %3821 = vmatprep.subr.bf16.mxu0 %v3136
    %3822 = vmatpush1.bf16.msra.mxu0 %v3135
    %3823 = vmatprep.subr.bf16.mxu0 %v3144
    %3824 = vmatpush1.bf16.msra.mxu0 %v3143
    %3825 = vmatprep.subr.bf16.mxu0 %v3152
    %3826 = vmatpush1.bf16.msra.mxu0 %v3151
    %3827 = vmatprep.subr.bf16.mxu0 %v3160
    %3828 = vmatpush1.bf16.msra.mxu0 %v3159
    %3829 = vmatprep.subr.bf16.mxu0 %v3168
    %3830 = vmatpush1.bf16.msra.mxu0 %v3167
    %3831 = vmatprep.mubr.bf16.mxu0 %v2014
    %3832 = vmatmul.mubr.bf16.gmra.mrb[0].mxu0 %v2013
    %v3833 = vpop.f32.mrb[0].mxu0
    %v3834 = vadd.f32 0.0, %v3833
    %v3835 = vpop.f32.mrb[0].mxu0
    %v3836 = vadd.f32 0.0, %v3835
    %v3837 = vpop.f32.mrb[0].mxu0
    %v3838 = vpop.f32.mrb[0].mxu0
    %3839 = vdwg.mxu0
    %3840 = vmatprep.subr.bf16.mxu0 %v3176
    %3841 = vmatpush1.bf16.msra.mxu0 %v3175
    %3842 = vmatprep.subr.bf16.mxu0 %v3184
    %3843 = vmatpush1.bf16.msra.mxu0 %v3183
    %3844 = vmatprep.subr.bf16.mxu0 %v3192
    %3845 = vmatpush1.bf16.msra.mxu0 %v3191
    %3846 = vmatprep.subr.bf16.mxu0 %v3200
    %3847 = vmatpush1.bf16.msra.mxu0 %v3199
    %3848 = vmatprep.subr.bf16.mxu0 %v3208
    %3849 = vmatpush1.bf16.msra.mxu0 %v3207
    %3850 = vmatprep.subr.bf16.mxu0 %v3216
    %3851 = vmatpush1.bf16.msra.mxu0 %v3215
    %3852 = vmatprep.subr.bf16.mxu0 %v3224
    %3853 = vmatpush1.bf16.msra.mxu0 %v3223
    %3854 = vmatprep.subr.bf16.mxu0 %v3232
    %3855 = vmatpush1.bf16.msra.mxu0 %v3231
    %3856 = vmatprep.subr.bf16.mxu0 %v3240
    %3857 = vmatpush1.bf16.msra.mxu0 %v3239
    %3858 = vmatprep.subr.bf16.mxu0 %v3248
    %3859 = vmatpush1.bf16.msra.mxu0 %v3247
    %3860 = vmatprep.subr.bf16.mxu0 %v3256
    %3861 = vmatpush1.bf16.msra.mxu0 %v3255
    %3862 = vmatprep.subr.bf16.mxu0 %v3264
    %3863 = vmatpush1.bf16.msra.mxu0 %v3263
    %3864 = vmatprep.subr.bf16.mxu0 %v3272
    %3865 = vmatpush1.bf16.msra.mxu0 %v3271
    %3866 = vmatprep.subr.bf16.mxu0 %v3280
    %3867 = vmatpush1.bf16.msra.mxu0 %v3279
    %3868 = vmatprep.subr.bf16.mxu0 %v3288
    %3869 = vmatpush1.bf16.msra.mxu0 %v3287
    %3870 = vmatprep.subr.bf16.mxu0 %v3296
    %3871 = vmatpush1.bf16.msra.mxu0 %v3295
    %3872 = vmatprep.mubr.bf16.mxu0 %v2016
    %3873 = vmatmul.mubr.bf16.gmra.mrb[0].mxu0 %v2015
    %v3874 = vpop.f32.mrb[0].mxu0
    %v3875 = vadd.f32 %v3834, %v3874
    %v3876 = vpop.f32.mrb[0].mxu0
    %v3877 = vadd.f32 %v3836, %v3876
    %v3878 = vpop.f32.mrb[0].mxu0
    %v3879 = vpop.f32.mrb[0].mxu0
    %3880 = vdwg.mxu0
    %v3881 = vmax.f32 %v3629, %v3711
    %v3882 = vmax.f32 %v3631, %v3713
    %v3883 = vmax.f32 %v3793, %v3875
    %v3884 = vmax.f32 %v3795, %v3877
    %v3885 = vmax.f32 %v3881, %v3883
    %v3886 = vmax.f32 %v3882, %v3884
    %v3887 = vld [vmem:[%s4] sm:$0x3]
    %v3889 = vlaneseq
    %v3890 = vshrl.u32 %v3889, 7
    %v3891 = vsub.s32 0, %v3890
    %v3892 = vrot.slane %v3887, %v3891
    %v3893 = vlaneseq
    %v3894 = vshrl.u32 %v3893, 7
    %v3895 = vsub.s32 1, %v3894
    %v3896 = vrot.slane %v3887, %v3895
    %v3899 = vadd.f32 %v3885, %v3892
    %v3900 = vadd.f32 %v3886, %v3896
    %v3901 = vmul.f32 %v3899, 0.01
    %v3902 = vmul.f32 %v3900, 0.01
    %v3903 = vmax.f32 %v3899, %v3901
    %v3904 = vmax.f32 %v3900, %v3902
    %v3905 = vpack.c.bf16 %v3903, %v3903
    %v3906 = vpack.c.bf16 %v3904, %v3904
    %v3907 = vld [vmem:[#allocation7] sm:$0xff]
    %v3908 = vld [vmem:[#allocation7 + $0x8] sm:$0xff]
    %v3909 = vld [vmem:[#allocation7 + $0x10] sm:$0xff]
    %v3910 = vld [vmem:[#allocation7 + $0x18] sm:$0xff]
    %v3911 = vld [vmem:[#allocation7 + $0x20] sm:$0xff]
    %v3912 = vld [vmem:[#allocation7 + $0x28] sm:$0xff]
    %v3913 = vld [vmem:[#allocation7 + $0x30] sm:$0xff]
    %v3914 = vld [vmem:[#allocation7 + $0x38] sm:$0xff]
    %v3915 = vld [vmem:[#allocation7 + $0x40] sm:$0xff]
    %v3916 = vld [vmem:[#allocation7 + $0x48] sm:$0xff]
    %v3917 = vld [vmem:[#allocation7 + $0x50] sm:$0xff]
    %v3918 = vld [vmem:[#allocation7 + $0x58] sm:$0xff]
    %v3919 = vld [vmem:[#allocation7 + $0x60] sm:$0xff]
    %v3920 = vld [vmem:[#allocation7 + $0x68] sm:$0xff]
    %v3921 = vld [vmem:[#allocation7 + $0x70] sm:$0xff]
    %v3922 = vld [vmem:[#allocation7 + $0x78] sm:$0xff]
    %v3923 = vld [vmem:[#allocation7 + $0x80] sm:$0xff]
    %v3924 = vld [vmem:[#allocation7 + $0x88] sm:$0xff]
    %v3925 = vld [vmem:[#allocation7 + $0x90] sm:$0xff]
    %v3926 = vld [vmem:[#allocation7 + $0x98] sm:$0xff]
    %v3927 = vld [vmem:[#allocation7 + $0xa0] sm:$0xff]
    %v3928 = vld [vmem:[#allocation7 + $0xa8] sm:$0xff]
    %v3929 = vld [vmem:[#allocation7 + $0xb0] sm:$0xff]
    %v3930 = vld [vmem:[#allocation7 + $0xb8] sm:$0xff]
    %v3931 = vld [vmem:[#allocation7 + $0xc0] sm:$0xff]
    %v3932 = vld [vmem:[#allocation7 + $0xc8] sm:$0xff]
    %v3933 = vld [vmem:[#allocation7 + $0xd0] sm:$0xff]
    %v3934 = vld [vmem:[#allocation7 + $0xd8] sm:$0xff]
    %v3935 = vld [vmem:[#allocation7 + $0xe0] sm:$0xff]
    %v3936 = vld [vmem:[#allocation7 + $0xe8] sm:$0xff]
    %v3937 = vld [vmem:[#allocation7 + $0xf0] sm:$0xff]
    %v3938 = vld [vmem:[#allocation7 + $0xf8] sm:$0xff]
    %v3939 = vld [vmem:[#allocation7 + $0x100] sm:$0xff]
    %v3940 = vld [vmem:[#allocation7 + $0x108] sm:$0xff]
    %v3941 = vld [vmem:[#allocation7 + $0x110] sm:$0xff]
    %v3942 = vld [vmem:[#allocation7 + $0x118] sm:$0xff]
    %v3943 = vld [vmem:[#allocation7 + $0x120] sm:$0xff]
    %v3944 = vld [vmem:[#allocation7 + $0x128] sm:$0xff]
    %v3945 = vld [vmem:[#allocation7 + $0x130] sm:$0xff]
    %v3946 = vld [vmem:[#allocation7 + $0x138] sm:$0xff]
    %v3947 = vld [vmem:[#allocation7 + $0x140] sm:$0xff]
    %v3948 = vld [vmem:[#allocation7 + $0x148] sm:$0xff]
    %v3949 = vld [vmem:[#allocation7 + $0x150] sm:$0xff]
    %v3950 = vld [vmem:[#allocation7 + $0x158] sm:$0xff]
    %v3951 = vld [vmem:[#allocation7 + $0x160] sm:$0xff]
    %v3952 = vld [vmem:[#allocation7 + $0x168] sm:$0xff]
    %v3953 = vld [vmem:[#allocation7 + $0x170] sm:$0xff]
    %v3954 = vld [vmem:[#allocation7 + $0x178] sm:$0xff]
    %v3955 = vld [vmem:[#allocation7 + $0x180] sm:$0xff]
    %v3956 = vld [vmem:[#allocation7 + $0x188] sm:$0xff]
    %v3957 = vld [vmem:[#allocation7 + $0x190] sm:$0xff]
    %v3958 = vld [vmem:[#allocation7 + $0x198] sm:$0xff]
    %v3959 = vld [vmem:[#allocation7 + $0x1a0] sm:$0xff]
    %v3960 = vld [vmem:[#allocation7 + $0x1a8] sm:$0xff]
    %v3961 = vld [vmem:[#allocation7 + $0x1b0] sm:$0xff]
    %v3962 = vld [vmem:[#allocation7 + $0x1b8] sm:$0xff]
    %v3963 = vld [vmem:[#allocation7 + $0x1c0] sm:$0xff]
    %v3964 = vld [vmem:[#allocation7 + $0x1c8] sm:$0xff]
    %v3965 = vld [vmem:[#allocation7 + $0x1d0] sm:$0xff]
    %v3966 = vld [vmem:[#allocation7 + $0x1d8] sm:$0xff]
    %v3967 = vld [vmem:[#allocation7 + $0x1e0] sm:$0xff]
    %v3968 = vld [vmem:[#allocation7 + $0x1e8] sm:$0xff]
    %v3969 = vld [vmem:[#allocation7 + $0x1f0] sm:$0xff]
    %v3970 = vld [vmem:[#allocation7 + $0x1f8] sm:$0xff]
    %v3971 = vld [vmem:[#allocation7 + $0x200] sm:$0xff]
    %v3972 = vld [vmem:[#allocation7 + $0x208] sm:$0xff]
    %v3973 = vld [vmem:[#allocation7 + $0x210] sm:$0xff]
    %v3974 = vld [vmem:[#allocation7 + $0x218] sm:$0xff]
    %v3975 = vld [vmem:[#allocation7 + $0x220] sm:$0xff]
    %v3976 = vld [vmem:[#allocation7 + $0x228] sm:$0xff]
    %v3977 = vld [vmem:[#allocation7 + $0x230] sm:$0xff]
    %v3978 = vld [vmem:[#allocation7 + $0x238] sm:$0xff]
    %v3979 = vld [vmem:[#allocation7 + $0x240] sm:$0xff]
    %v3980 = vld [vmem:[#allocation7 + $0x248] sm:$0xff]
    %v3981 = vld [vmem:[#allocation7 + $0x250] sm:$0xff]
    %v3982 = vld [vmem:[#allocation7 + $0x258] sm:$0xff]
    %v3983 = vld [vmem:[#allocation7 + $0x260] sm:$0xff]
    %v3984 = vld [vmem:[#allocation7 + $0x268] sm:$0xff]
    %v3985 = vld [vmem:[#allocation7 + $0x270] sm:$0xff]
    %v3986 = vld [vmem:[#allocation7 + $0x278] sm:$0xff]
    %v3987 = vld [vmem:[#allocation7 + $0x280] sm:$0xff]
    %v3988 = vld [vmem:[#allocation7 + $0x288] sm:$0xff]
    %v3989 = vld [vmem:[#allocation7 + $0x290] sm:$0xff]
    %v3990 = vld [vmem:[#allocation7 + $0x298] sm:$0xff]
    %v3991 = vld [vmem:[#allocation7 + $0x2a0] sm:$0xff]
    %v3992 = vld [vmem:[#allocation7 + $0x2a8] sm:$0xff]
    %v3993 = vld [vmem:[#allocation7 + $0x2b0] sm:$0xff]
    %v3994 = vld [vmem:[#allocation7 + $0x2b8] sm:$0xff]
    %v3995 = vld [vmem:[#allocation7 + $0x2c0] sm:$0xff]
    %v3996 = vld [vmem:[#allocation7 + $0x2c8] sm:$0xff]
    %v3997 = vld [vmem:[#allocation7 + $0x2d0] sm:$0xff]
    %v3998 = vld [vmem:[#allocation7 + $0x2d8] sm:$0xff]
    %v3999 = vld [vmem:[#allocation7 + $0x2e0] sm:$0xff]
    %v4000 = vld [vmem:[#allocation7 + $0x2e8] sm:$0xff]
    %v4001 = vld [vmem:[#allocation7 + $0x2f0] sm:$0xff]
    %v4002 = vld [vmem:[#allocation7 + $0x2f8] sm:$0xff]
    %v4003 = vld [vmem:[#allocation7 + $0x300] sm:$0xff]
    %v4004 = vld [vmem:[#allocation7 + $0x308] sm:$0xff]
    %v4005 = vld [vmem:[#allocation7 + $0x310] sm:$0xff]
    %v4006 = vld [vmem:[#allocation7 + $0x318] sm:$0xff]
    %v4007 = vld [vmem:[#allocation7 + $0x320] sm:$0xff]
    %v4008 = vld [vmem:[#allocation7 + $0x328] sm:$0xff]
    %v4009 = vld [vmem:[#allocation7 + $0x330] sm:$0xff]
    %v4010 = vld [vmem:[#allocation7 + $0x338] sm:$0xff]
    %v4011 = vld [vmem:[#allocation7 + $0x340] sm:$0xff]
    %v4012 = vld [vmem:[#allocation7 + $0x348] sm:$0xff]
    %v4013 = vld [vmem:[#allocation7 + $0x350] sm:$0xff]
    %v4014 = vld [vmem:[#allocation7 + $0x358] sm:$0xff]
    %v4015 = vld [vmem:[#allocation7 + $0x360] sm:$0xff]
    %v4016 = vld [vmem:[#allocation7 + $0x368] sm:$0xff]
    %v4017 = vld [vmem:[#allocation7 + $0x370] sm:$0xff]
    %v4018 = vld [vmem:[#allocation7 + $0x378] sm:$0xff]
    %v4019 = vld [vmem:[#allocation7 + $0x380] sm:$0xff]
    %v4020 = vld [vmem:[#allocation7 + $0x388] sm:$0xff]
    %v4021 = vld [vmem:[#allocation7 + $0x390] sm:$0xff]
    %v4022 = vld [vmem:[#allocation7 + $0x398] sm:$0xff]
    %v4023 = vld [vmem:[#allocation7 + $0x3a0] sm:$0xff]
    %v4024 = vld [vmem:[#allocation7 + $0x3a8] sm:$0xff]
    %v4025 = vld [vmem:[#allocation7 + $0x3b0] sm:$0xff]
    %v4026 = vld [vmem:[#allocation7 + $0x3b8] sm:$0xff]
    %v4027 = vld [vmem:[#allocation7 + $0x3c0] sm:$0xff]
    %v4028 = vld [vmem:[#allocation7 + $0x3c8] sm:$0xff]
    %v4029 = vld [vmem:[#allocation7 + $0x3d0] sm:$0xff]
    %v4030 = vld [vmem:[#allocation7 + $0x3d8] sm:$0xff]
    %v4031 = vld [vmem:[#allocation7 + $0x3e0] sm:$0xff]
    %v4032 = vld [vmem:[#allocation7 + $0x3e8] sm:$0xff]
    %v4033 = vld [vmem:[#allocation7 + $0x3f0] sm:$0xff]
    %v4034 = vld [vmem:[#allocation7 + $0x3f8] sm:$0xff]
    %v4163 = vunpack.c.l.b16 %v3907
    %v4164 = vunpack.c.h.b16 %v3907
    %v4165 = vunpack.c.l.b16 %v3908
    %v4166 = vunpack.c.h.b16 %v3908
    %v4167 = vunpack.c.l.b16 %v3909
    %v4168 = vunpack.c.h.b16 %v3909
    %v4169 = vunpack.c.l.b16 %v3910
    %v4170 = vunpack.c.h.b16 %v3910
    %v4171 = vunpack.c.l.b16 %v3911
    %v4172 = vunpack.c.h.b16 %v3911
    %v4173 = vunpack.c.l.b16 %v3912
    %v4174 = vunpack.c.h.b16 %v3912
    %v4175 = vunpack.c.l.b16 %v3913
    %v4176 = vunpack.c.h.b16 %v3913
    %v4177 = vunpack.c.l.b16 %v3914
    %v4178 = vunpack.c.h.b16 %v3914
    %v4179 = vunpack.c.l.b16 %v3915
    %v4180 = vunpack.c.h.b16 %v3915
    %v4181 = vunpack.c.l.b16 %v3916
    %v4182 = vunpack.c.h.b16 %v3916
    %v4183 = vunpack.c.l.b16 %v3917
    %v4184 = vunpack.c.h.b16 %v3917
    %v4185 = vunpack.c.l.b16 %v3918
    %v4186 = vunpack.c.h.b16 %v3918
    %v4187 = vunpack.c.l.b16 %v3919
    %v4188 = vunpack.c.h.b16 %v3919
    %v4189 = vunpack.c.l.b16 %v3920
    %v4190 = vunpack.c.h.b16 %v3920
    %v4191 = vunpack.c.l.b16 %v3921
    %v4192 = vunpack.c.h.b16 %v3921
    %v4193 = vunpack.c.l.b16 %v3922
    %v4194 = vunpack.c.h.b16 %v3922
    %v4195 = vunpack.c.l.b16 %v3923
    %v4196 = vunpack.c.h.b16 %v3923
    %v4197 = vunpack.c.l.b16 %v3924
    %v4198 = vunpack.c.h.b16 %v3924
    %v4199 = vunpack.c.l.b16 %v3925
    %v4200 = vunpack.c.h.b16 %v3925
    %v4201 = vunpack.c.l.b16 %v3926
    %v4202 = vunpack.c.h.b16 %v3926
    %v4203 = vunpack.c.l.b16 %v3927
    %v4204 = vunpack.c.h.b16 %v3927
    %v4205 = vunpack.c.l.b16 %v3928
    %v4206 = vunpack.c.h.b16 %v3928
    %v4207 = vunpack.c.l.b16 %v3929
    %v4208 = vunpack.c.h.b16 %v3929
    %v4209 = vunpack.c.l.b16 %v3930
    %v4210 = vunpack.c.h.b16 %v3930
    %v4211 = vunpack.c.l.b16 %v3931
    %v4212 = vunpack.c.h.b16 %v3931
    %v4213 = vunpack.c.l.b16 %v3932
    %v4214 = vunpack.c.h.b16 %v3932
    %v4215 = vunpack.c.l.b16 %v3933
    %v4216 = vunpack.c.h.b16 %v3933
    %v4217 = vunpack.c.l.b16 %v3934
    %v4218 = vunpack.c.h.b16 %v3934
    %v4219 = vunpack.c.l.b16 %v3935
    %v4220 = vunpack.c.h.b16 %v3935
    %v4221 = vunpack.c.l.b16 %v3936
    %v4222 = vunpack.c.h.b16 %v3936
    %v4223 = vunpack.c.l.b16 %v3937
    %v4224 = vunpack.c.h.b16 %v3937
    %v4225 = vunpack.c.l.b16 %v3938
    %v4226 = vunpack.c.h.b16 %v3938
    %v4227 = vunpack.c.l.b16 %v3939
    %v4228 = vunpack.c.h.b16 %v3939
    %v4229 = vunpack.c.l.b16 %v3940
    %v4230 = vunpack.c.h.b16 %v3940
    %v4231 = vunpack.c.l.b16 %v3941
    %v4232 = vunpack.c.h.b16 %v3941
    %v4233 = vunpack.c.l.b16 %v3942
    %v4234 = vunpack.c.h.b16 %v3942
    %v4235 = vunpack.c.l.b16 %v3943
    %v4236 = vunpack.c.h.b16 %v3943
    %v4237 = vunpack.c.l.b16 %v3944
    %v4238 = vunpack.c.h.b16 %v3944
    %v4239 = vunpack.c.l.b16 %v3945
    %v4240 = vunpack.c.h.b16 %v3945
    %v4241 = vunpack.c.l.b16 %v3946
    %v4242 = vunpack.c.h.b16 %v3946
    %v4243 = vunpack.c.l.b16 %v3947
    %v4244 = vunpack.c.h.b16 %v3947
    %v4245 = vunpack.c.l.b16 %v3948
    %v4246 = vunpack.c.h.b16 %v3948
    %v4247 = vunpack.c.l.b16 %v3949
    %v4248 = vunpack.c.h.b16 %v3949
    %v4249 = vunpack.c.l.b16 %v3950
    %v4250 = vunpack.c.h.b16 %v3950
    %v4251 = vunpack.c.l.b16 %v3951
    %v4252 = vunpack.c.h.b16 %v3951
    %v4253 = vunpack.c.l.b16 %v3952
    %v4254 = vunpack.c.h.b16 %v3952
    %v4255 = vunpack.c.l.b16 %v3953
    %v4256 = vunpack.c.h.b16 %v3953
    %v4257 = vunpack.c.l.b16 %v3954
    %v4258 = vunpack.c.h.b16 %v3954
    %v4259 = vunpack.c.l.b16 %v3955
    %v4260 = vunpack.c.h.b16 %v3955
    %v4261 = vunpack.c.l.b16 %v3956
    %v4262 = vunpack.c.h.b16 %v3956
    %v4263 = vunpack.c.l.b16 %v3957
    %v4264 = vunpack.c.h.b16 %v3957
    %v4265 = vunpack.c.l.b16 %v3958
    %v4266 = vunpack.c.h.b16 %v3958
    %v4267 = vunpack.c.l.b16 %v3959
    %v4268 = vunpack.c.h.b16 %v3959
    %v4269 = vunpack.c.l.b16 %v3960
    %v4270 = vunpack.c.h.b16 %v3960
    %v4271 = vunpack.c.l.b16 %v3961
    %v4272 = vunpack.c.h.b16 %v3961
    %v4273 = vunpack.c.l.b16 %v3962
    %v4274 = vunpack.c.h.b16 %v3962
    %v4275 = vunpack.c.l.b16 %v3963
    %v4276 = vunpack.c.h.b16 %v3963
    %v4277 = vunpack.c.l.b16 %v3964
    %v4278 = vunpack.c.h.b16 %v3964
    %v4279 = vunpack.c.l.b16 %v3965
    %v4280 = vunpack.c.h.b16 %v3965
    %v4281 = vunpack.c.l.b16 %v3966
    %v4282 = vunpack.c.h.b16 %v3966
    %v4283 = vunpack.c.l.b16 %v3967
    %v4284 = vunpack.c.h.b16 %v3967
    %v4285 = vunpack.c.l.b16 %v3968
    %v4286 = vunpack.c.h.b16 %v3968
    %v4287 = vunpack.c.l.b16 %v3969
    %v4288 = vunpack.c.h.b16 %v3969
    %v4289 = vunpack.c.l.b16 %v3970
    %v4290 = vunpack.c.h.b16 %v3970
    %v4291 = vunpack.c.l.b16 %v3971
    %v4292 = vunpack.c.h.b16 %v3971
    %v4293 = vunpack.c.l.b16 %v3972
    %v4294 = vunpack.c.h.b16 %v3972
    %v4295 = vunpack.c.l.b16 %v3973
    %v4296 = vunpack.c.h.b16 %v3973
    %v4297 = vunpack.c.l.b16 %v3974
    %v4298 = vunpack.c.h.b16 %v3974
    %v4299 = vunpack.c.l.b16 %v3975
    %v4300 = vunpack.c.h.b16 %v3975
    %v4301 = vunpack.c.l.b16 %v3976
    %v4302 = vunpack.c.h.b16 %v3976
    %v4303 = vunpack.c.l.b16 %v3977
    %v4304 = vunpack.c.h.b16 %v3977
    %v4305 = vunpack.c.l.b16 %v3978
    %v4306 = vunpack.c.h.b16 %v3978
    %v4307 = vunpack.c.l.b16 %v3979
    %v4308 = vunpack.c.h.b16 %v3979
    %v4309 = vunpack.c.l.b16 %v3980
    %v4310 = vunpack.c.h.b16 %v3980
    %v4311 = vunpack.c.l.b16 %v3981
    %v4312 = vunpack.c.h.b16 %v3981
    %v4313 = vunpack.c.l.b16 %v3982
    %v4314 = vunpack.c.h.b16 %v3982
    %v4315 = vunpack.c.l.b16 %v3983
    %v4316 = vunpack.c.h.b16 %v3983
    %v4317 = vunpack.c.l.b16 %v3984
    %v4318 = vunpack.c.h.b16 %v3984
    %v4319 = vunpack.c.l.b16 %v3985
    %v4320 = vunpack.c.h.b16 %v3985
    %v4321 = vunpack.c.l.b16 %v3986
    %v4322 = vunpack.c.h.b16 %v3986
    %v4323 = vunpack.c.l.b16 %v3987
    %v4324 = vunpack.c.h.b16 %v3987
    %v4325 = vunpack.c.l.b16 %v3988
    %v4326 = vunpack.c.h.b16 %v3988
    %v4327 = vunpack.c.l.b16 %v3989
    %v4328 = vunpack.c.h.b16 %v3989
    %v4329 = vunpack.c.l.b16 %v3990
    %v4330 = vunpack.c.h.b16 %v3990
    %v4331 = vunpack.c.l.b16 %v3991
    %v4332 = vunpack.c.h.b16 %v3991
    %v4333 = vunpack.c.l.b16 %v3992
    %v4334 = vunpack.c.h.b16 %v3992
    %v4335 = vunpack.c.l.b16 %v3993
    %v4336 = vunpack.c.h.b16 %v3993
    %v4337 = vunpack.c.l.b16 %v3994
    %v4338 = vunpack.c.h.b16 %v3994
    %v4339 = vunpack.c.l.b16 %v3995
    %v4340 = vunpack.c.h.b16 %v3995
    %v4341 = vunpack.c.l.b16 %v3996
    %v4342 = vunpack.c.h.b16 %v3996
    %v4343 = vunpack.c.l.b16 %v3997
    %v4344 = vunpack.c.h.b16 %v3997
    %v4345 = vunpack.c.l.b16 %v3998
    %v4346 = vunpack.c.h.b16 %v3998
    %v4347 = vunpack.c.l.b16 %v3999
    %v4348 = vunpack.c.h.b16 %v3999
    %v4349 = vunpack.c.l.b16 %v4000
    %v4350 = vunpack.c.h.b16 %v4000
    %v4351 = vunpack.c.l.b16 %v4001
    %v4352 = vunpack.c.h.b16 %v4001
    %v4353 = vunpack.c.l.b16 %v4002
    %v4354 = vunpack.c.h.b16 %v4002
    %v4355 = vunpack.c.l.b16 %v4003
    %v4356 = vunpack.c.h.b16 %v4003
    %v4357 = vunpack.c.l.b16 %v4004
    %v4358 = vunpack.c.h.b16 %v4004
    %v4359 = vunpack.c.l.b16 %v4005
    %v4360 = vunpack.c.h.b16 %v4005
    %v4361 = vunpack.c.l.b16 %v4006
    %v4362 = vunpack.c.h.b16 %v4006
    %v4363 = vunpack.c.l.b16 %v4007
    %v4364 = vunpack.c.h.b16 %v4007
    %v4365 = vunpack.c.l.b16 %v4008
    %v4366 = vunpack.c.h.b16 %v4008
    %v4367 = vunpack.c.l.b16 %v4009
    %v4368 = vunpack.c.h.b16 %v4009
    %v4369 = vunpack.c.l.b16 %v4010
    %v4370 = vunpack.c.h.b16 %v4010
    %v4371 = vunpack.c.l.b16 %v4011
    %v4372 = vunpack.c.h.b16 %v4011
    %v4373 = vunpack.c.l.b16 %v4012
    %v4374 = vunpack.c.h.b16 %v4012
    %v4375 = vunpack.c.l.b16 %v4013
    %v4376 = vunpack.c.h.b16 %v4013
    %v4377 = vunpack.c.l.b16 %v4014
    %v4378 = vunpack.c.h.b16 %v4014
    %v4379 = vunpack.c.l.b16 %v4015
    %v4380 = vunpack.c.h.b16 %v4015
    %v4381 = vunpack.c.l.b16 %v4016
    %v4382 = vunpack.c.h.b16 %v4016
    %v4383 = vunpack.c.l.b16 %v4017
    %v4384 = vunpack.c.h.b16 %v4017
    %v4385 = vunpack.c.l.b16 %v4018
    %v4386 = vunpack.c.h.b16 %v4018
    %v4387 = vunpack.c.l.b16 %v4019
    %v4388 = vunpack.c.h.b16 %v4019
    %v4389 = vunpack.c.l.b16 %v4020
    %v4390 = vunpack.c.h.b16 %v4020
    %v4391 = vunpack.c.l.b16 %v4021
    %v4392 = vunpack.c.h.b16 %v4021
    %v4393 = vunpack.c.l.b16 %v4022
    %v4394 = vunpack.c.h.b16 %v4022
    %v4395 = vunpack.c.l.b16 %v4023
    %v4396 = vunpack.c.h.b16 %v4023
    %v4397 = vunpack.c.l.b16 %v4024
    %v4398 = vunpack.c.h.b16 %v4024
    %v4399 = vunpack.c.l.b16 %v4025
    %v4400 = vunpack.c.h.b16 %v4025
    %v4401 = vunpack.c.l.b16 %v4026
    %v4402 = vunpack.c.h.b16 %v4026
    %v4403 = vunpack.c.l.b16 %v4027
    %v4404 = vunpack.c.h.b16 %v4027
    %v4405 = vunpack.c.l.b16 %v4028
    %v4406 = vunpack.c.h.b16 %v4028
    %v4407 = vunpack.c.l.b16 %v4029
    %v4408 = vunpack.c.h.b16 %v4029
    %v4409 = vunpack.c.l.b16 %v4030
    %v4410 = vunpack.c.h.b16 %v4030
    %v4411 = vunpack.c.l.b16 %v4031
    %v4412 = vunpack.c.h.b16 %v4031
    %v4413 = vunpack.c.l.b16 %v4032
    %v4414 = vunpack.c.h.b16 %v4032
    %v4415 = vunpack.c.l.b16 %v4033
    %v4416 = vunpack.c.h.b16 %v4033
    %v4417 = vunpack.c.l.b16 %v4034
    %v4418 = vunpack.c.h.b16 %v4034
    %v4419 = vpack.c.b16 %v4171, %v4163
    %v4420 = vpack.c.b16 %v4172, %v4164
    %v4421 = vpack.c.b16 %v4173, %v4165
    %v4422 = vpack.c.b16 %v4174, %v4166
    %v4423 = vpack.c.b16 %v4175, %v4167
    %v4424 = vpack.c.b16 %v4176, %v4168
    %v4425 = vpack.c.b16 %v4177, %v4169
    %v4426 = vpack.c.b16 %v4178, %v4170
    %v4427 = vpack.c.b16 %v4187, %v4179
    %v4428 = vpack.c.b16 %v4188, %v4180
    %v4429 = vpack.c.b16 %v4189, %v4181
    %v4430 = vpack.c.b16 %v4190, %v4182
    %v4431 = vpack.c.b16 %v4191, %v4183
    %v4432 = vpack.c.b16 %v4192, %v4184
    %v4433 = vpack.c.b16 %v4193, %v4185
    %v4434 = vpack.c.b16 %v4194, %v4186
    %v4435 = vpack.c.b16 %v4203, %v4195
    %v4436 = vpack.c.b16 %v4204, %v4196
    %v4437 = vpack.c.b16 %v4205, %v4197
    %v4438 = vpack.c.b16 %v4206, %v4198
    %v4439 = vpack.c.b16 %v4207, %v4199
    %v4440 = vpack.c.b16 %v4208, %v4200
    %v4441 = vpack.c.b16 %v4209, %v4201
    %v4442 = vpack.c.b16 %v4210, %v4202
    %v4443 = vpack.c.b16 %v4219, %v4211
    %v4444 = vpack.c.b16 %v4220, %v4212
    %v4445 = vpack.c.b16 %v4221, %v4213
    %v4446 = vpack.c.b16 %v4222, %v4214
    %v4447 = vpack.c.b16 %v4223, %v4215
    %v4448 = vpack.c.b16 %v4224, %v4216
    %v4449 = vpack.c.b16 %v4225, %v4217
    %v4450 = vpack.c.b16 %v4226, %v4218
    %v4451 = vpack.c.b16 %v4235, %v4227
    %v4452 = vpack.c.b16 %v4236, %v4228
    %v4453 = vpack.c.b16 %v4237, %v4229
    %v4454 = vpack.c.b16 %v4238, %v4230
    %v4455 = vpack.c.b16 %v4239, %v4231
    %v4456 = vpack.c.b16 %v4240, %v4232
    %v4457 = vpack.c.b16 %v4241, %v4233
    %v4458 = vpack.c.b16 %v4242, %v4234
    %v4459 = vpack.c.b16 %v4251, %v4243
    %v4460 = vpack.c.b16 %v4252, %v4244
    %v4461 = vpack.c.b16 %v4253, %v4245
    %v4462 = vpack.c.b16 %v4254, %v4246
    %v4463 = vpack.c.b16 %v4255, %v4247
    %v4464 = vpack.c.b16 %v4256, %v4248
    %v4465 = vpack.c.b16 %v4257, %v4249
    %v4466 = vpack.c.b16 %v4258, %v4250
    %v4467 = vpack.c.b16 %v4267, %v4259
    %v4468 = vpack.c.b16 %v4268, %v4260
    %v4469 = vpack.c.b16 %v4269, %v4261
    %v4470 = vpack.c.b16 %v4270, %v4262
    %v4471 = vpack.c.b16 %v4271, %v4263
    %v4472 = vpack.c.b16 %v4272, %v4264
    %v4473 = vpack.c.b16 %v4273, %v4265
    %v4474 = vpack.c.b16 %v4274, %v4266
    %v4475 = vpack.c.b16 %v4283, %v4275
    %v4476 = vpack.c.b16 %v4284, %v4276
    %v4477 = vpack.c.b16 %v4285, %v4277
    %v4478 = vpack.c.b16 %v4286, %v4278
    %v4479 = vpack.c.b16 %v4287, %v4279
    %v4480 = vpack.c.b16 %v4288, %v4280
    %v4481 = vpack.c.b16 %v4289, %v4281
    %v4482 = vpack.c.b16 %v4290, %v4282
    %v4483 = vpack.c.b16 %v4299, %v4291
    %v4484 = vpack.c.b16 %v4300, %v4292
    %v4485 = vpack.c.b16 %v4301, %v4293
    %v4486 = vpack.c.b16 %v4302, %v4294
    %v4487 = vpack.c.b16 %v4303, %v4295
    %v4488 = vpack.c.b16 %v4304, %v4296
    %v4489 = vpack.c.b16 %v4305, %v4297
    %v4490 = vpack.c.b16 %v4306, %v4298
    %v4491 = vpack.c.b16 %v4315, %v4307
    %v4492 = vpack.c.b16 %v4316, %v4308
    %v4493 = vpack.c.b16 %v4317, %v4309
    %v4494 = vpack.c.b16 %v4318, %v4310
    %v4495 = vpack.c.b16 %v4319, %v4311
    %v4496 = vpack.c.b16 %v4320, %v4312
    %v4497 = vpack.c.b16 %v4321, %v4313
    %v4498 = vpack.c.b16 %v4322, %v4314
    %v4499 = vpack.c.b16 %v4331, %v4323
    %v4500 = vpack.c.b16 %v4332, %v4324
    %v4501 = vpack.c.b16 %v4333, %v4325
    %v4502 = vpack.c.b16 %v4334, %v4326
    %v4503 = vpack.c.b16 %v4335, %v4327
    %v4504 = vpack.c.b16 %v4336, %v4328
    %v4505 = vpack.c.b16 %v4337, %v4329
    %v4506 = vpack.c.b16 %v4338, %v4330
    %v4507 = vpack.c.b16 %v4347, %v4339
    %v4508 = vpack.c.b16 %v4348, %v4340
    %v4509 = vpack.c.b16 %v4349, %v4341
    %v4510 = vpack.c.b16 %v4350, %v4342
    %v4511 = vpack.c.b16 %v4351, %v4343
    %v4512 = vpack.c.b16 %v4352, %v4344
    %v4513 = vpack.c.b16 %v4353, %v4345
    %v4514 = vpack.c.b16 %v4354, %v4346
    %v4515 = vpack.c.b16 %v4363, %v4355
    %v4516 = vpack.c.b16 %v4364, %v4356
    %v4517 = vpack.c.b16 %v4365, %v4357
    %v4518 = vpack.c.b16 %v4366, %v4358
    %v4519 = vpack.c.b16 %v4367, %v4359
    %v4520 = vpack.c.b16 %v4368, %v4360
    %v4521 = vpack.c.b16 %v4369, %v4361
    %v4522 = vpack.c.b16 %v4370, %v4362
    %v4523 = vpack.c.b16 %v4379, %v4371
    %v4524 = vpack.c.b16 %v4380, %v4372
    %v4525 = vpack.c.b16 %v4381, %v4373
    %v4526 = vpack.c.b16 %v4382, %v4374
    %v4527 = vpack.c.b16 %v4383, %v4375
    %v4528 = vpack.c.b16 %v4384, %v4376
    %v4529 = vpack.c.b16 %v4385, %v4377
    %v4530 = vpack.c.b16 %v4386, %v4378
    %v4531 = vpack.c.b16 %v4395, %v4387
    %v4532 = vpack.c.b16 %v4396, %v4388
    %v4533 = vpack.c.b16 %v4397, %v4389
    %v4534 = vpack.c.b16 %v4398, %v4390
    %v4535 = vpack.c.b16 %v4399, %v4391
    %v4536 = vpack.c.b16 %v4400, %v4392
    %v4537 = vpack.c.b16 %v4401, %v4393
    %v4538 = vpack.c.b16 %v4402, %v4394
    %v4539 = vpack.c.b16 %v4411, %v4403
    %v4540 = vpack.c.b16 %v4412, %v4404
    %v4541 = vpack.c.b16 %v4413, %v4405
    %v4542 = vpack.c.b16 %v4414, %v4406
    %v4543 = vpack.c.b16 %v4415, %v4407
    %v4544 = vpack.c.b16 %v4416, %v4408
    %v4545 = vpack.c.b16 %v4417, %v4409
    %v4546 = vpack.c.b16 %v4418, %v4410
    %4675 = vmatprep.subr.bf16.mxu0 %v4420
    %4676 = vmatpush1.bf16.msra.mxu0 %v4419
    %4677 = vmatprep.subr.bf16.mxu0 %v4428
    %4678 = vmatpush1.bf16.msra.mxu0 %v4427
    %4679 = vmatprep.subr.bf16.mxu0 %v4436
    %4680 = vmatpush1.bf16.msra.mxu0 %v4435
    %4681 = vmatprep.subr.bf16.mxu0 %v4444
    %4682 = vmatpush1.bf16.msra.mxu0 %v4443
    %4683 = vmatprep.subr.bf16.mxu0 %v4452
    %4684 = vmatpush1.bf16.msra.mxu0 %v4451
    %4685 = vmatprep.subr.bf16.mxu0 %v4460
    %4686 = vmatpush1.bf16.msra.mxu0 %v4459
    %4687 = vmatprep.subr.bf16.mxu0 %v4468
    %4688 = vmatpush1.bf16.msra.mxu0 %v4467
    %4689 = vmatprep.subr.bf16.mxu0 %v4476
    %4690 = vmatpush1.bf16.msra.mxu0 %v4475
    %4691 = vmatprep.subr.bf16.mxu0 %v4484
    %4692 = vmatpush1.bf16.msra.mxu0 %v4483
    %4693 = vmatprep.subr.bf16.mxu0 %v4492
    %4694 = vmatpush1.bf16.msra.mxu0 %v4491
    %4695 = vmatprep.subr.bf16.mxu0 %v4500
    %4696 = vmatpush1.bf16.msra.mxu0 %v4499
    %4697 = vmatprep.subr.bf16.mxu0 %v4508
    %4698 = vmatpush1.bf16.msra.mxu0 %v4507
    %4699 = vmatprep.subr.bf16.mxu0 %v4516
    %4700 = vmatpush1.bf16.msra.mxu0 %v4515
    %4701 = vmatprep.subr.bf16.mxu0 %v4524
    %4702 = vmatpush1.bf16.msra.mxu0 %v4523
    %4703 = vmatprep.subr.bf16.mxu0 %v4532
    %4704 = vmatpush1.bf16.msra.mxu0 %v4531
    %4705 = vmatprep.subr.bf16.mxu0 %v4540
    %4706 = vmatpush1.bf16.msra.mxu0 %v4539
    %4707 = vmatprep.mubr.bf16.mxu0 %v3906
    %4708 = vmatmul.mubr.bf16.gmra.mrb[0].mxu0 %v3905
    %v4709 = vpop.f32.mrb[0].mxu0
    %v4710 = vadd.f32 0.0, %v4709
    %v4711 = vpop.f32.mrb[0].mxu0
    %v4712 = vadd.f32 0.0, %v4711
    %v4713 = vpop.f32.mrb[0].mxu0
    %v4714 = vpop.f32.mrb[0].mxu0
    %4715 = vdwg.mxu0
    %4716 = vmatprep.subr.bf16.mxu0 %v4422
    %4717 = vmatpush1.bf16.msra.mxu0 %v4421
    %4718 = vmatprep.subr.bf16.mxu0 %v4430
    %4719 = vmatpush1.bf16.msra.mxu0 %v4429
    %4720 = vmatprep.subr.bf16.mxu0 %v4438
    %4721 = vmatpush1.bf16.msra.mxu0 %v4437
    %4722 = vmatprep.subr.bf16.mxu0 %v4446
    %4723 = vmatpush1.bf16.msra.mxu0 %v4445
    %4724 = vmatprep.subr.bf16.mxu0 %v4454
    %4725 = vmatpush1.bf16.msra.mxu0 %v4453
    %4726 = vmatprep.subr.bf16.mxu0 %v4462
    %4727 = vmatpush1.bf16.msra.mxu0 %v4461
    %4728 = vmatprep.subr.bf16.mxu0 %v4470
    %4729 = vmatpush1.bf16.msra.mxu0 %v4469
    %4730 = vmatprep.subr.bf16.mxu0 %v4478
    %4731 = vmatpush1.bf16.msra.mxu0 %v4477
    %4732 = vmatprep.subr.bf16.mxu0 %v4486
    %4733 = vmatpush1.bf16.msra.mxu0 %v4485
    %4734 = vmatprep.subr.bf16.mxu0 %v4494
    %4735 = vmatpush1.bf16.msra.mxu0 %v4493
    %4736 = vmatprep.subr.bf16.mxu0 %v4502
    %4737 = vmatpush1.bf16.msra.mxu0 %v4501
    %4738 = vmatprep.subr.bf16.mxu0 %v4510
    %4739 = vmatpush1.bf16.msra.mxu0 %v4509
    %4740 = vmatprep.subr.bf16.mxu0 %v4518
    %4741 = vmatpush1.bf16.msra.mxu0 %v4517
    %4742 = vmatprep.subr.bf16.mxu0 %v4526
    %4743 = vmatpush1.bf16.msra.mxu0 %v4525
    %4744 = vmatprep.subr.bf16.mxu0 %v4534
    %4745 = vmatpush1.bf16.msra.mxu0 %v4533
    %4746 = vmatprep.subr.bf16.mxu0 %v4542
    %4747 = vmatpush1.bf16.msra.mxu0 %v4541
    %4748 = vmatprep.mubr.bf16.mxu0 %v3906
    %4749 = vmatmul.mubr.bf16.gmra.mrb[0].mxu0 %v3905
    %v4750 = vpop.f32.mrb[0].mxu0
    %v4751 = vadd.f32 0.0, %v4750
    %v4752 = vpop.f32.mrb[0].mxu0
    %v4753 = vadd.f32 0.0, %v4752
    %v4754 = vpop.f32.mrb[0].mxu0
    %v4755 = vpop.f32.mrb[0].mxu0
    %4756 = vdwg.mxu0
    %4757 = vmatprep.subr.bf16.mxu0 %v4424
    %4758 = vmatpush1.bf16.msra.mxu0 %v4423
    %4759 = vmatprep.subr.bf16.mxu0 %v4432
    %4760 = vmatpush1.bf16.msra.mxu0 %v4431
    %4761 = vmatprep.subr.bf16.mxu0 %v4440
    %4762 = vmatpush1.bf16.msra.mxu0 %v4439
    %4763 = vmatprep.subr.bf16.mxu0 %v4448
    %4764 = vmatpush1.bf16.msra.mxu0 %v4447
    %4765 = vmatprep.subr.bf16.mxu0 %v4456
    %4766 = vmatpush1.bf16.msra.mxu0 %v4455
    %4767 = vmatprep.subr.bf16.mxu0 %v4464
    %4768 = vmatpush1.bf16.msra.mxu0 %v4463
    %4769 = vmatprep.subr.bf16.mxu0 %v4472
    %4770 = vmatpush1.bf16.msra.mxu0 %v4471
    %4771 = vmatprep.subr.bf16.mxu0 %v4480
    %4772 = vmatpush1.bf16.msra.mxu0 %v4479
    %4773 = vmatprep.subr.bf16.mxu0 %v4488
    %4774 = vmatpush1.bf16.msra.mxu0 %v4487
    %4775 = vmatprep.subr.bf16.mxu0 %v4496
    %4776 = vmatpush1.bf16.msra.mxu0 %v4495
    %4777 = vmatprep.subr.bf16.mxu0 %v4504
    %4778 = vmatpush1.bf16.msra.mxu0 %v4503
    %4779 = vmatprep.subr.bf16.mxu0 %v4512
    %4780 = vmatpush1.bf16.msra.mxu0 %v4511
    %4781 = vmatprep.subr.bf16.mxu0 %v4520
    %4782 = vmatpush1.bf16.msra.mxu0 %v4519
    %4783 = vmatprep.subr.bf16.mxu0 %v4528
    %4784 = vmatpush1.bf16.msra.mxu0 %v4527
    %4785 = vmatprep.subr.bf16.mxu0 %v4536
    %4786 = vmatpush1.bf16.msra.mxu0 %v4535
    %4787 = vmatprep.subr.bf16.mxu0 %v4544
    %4788 = vmatpush1.bf16.msra.mxu0 %v4543
    %4789 = vmatprep.mubr.bf16.mxu0 %v3906
    %4790 = vmatmul.mubr.bf16.gmra.mrb[0].mxu0 %v3905
    %v4791 = vpop.f32.mrb[0].mxu0
    %v4792 = vadd.f32 0.0, %v4791
    %v4793 = vpop.f32.mrb[0].mxu0
    %v4794 = vadd.f32 0.0, %v4793
    %v4795 = vpop.f32.mrb[0].mxu0
    %v4796 = vpop.f32.mrb[0].mxu0
    %4797 = vdwg.mxu0
    %4798 = vmatprep.subr.bf16.mxu0 %v4426
    %4799 = vmatpush1.bf16.msra.mxu0 %v4425
    %4800 = vmatprep.subr.bf16.mxu0 %v4434
    %4801 = vmatpush1.bf16.msra.mxu0 %v4433
    %4802 = vmatprep.subr.bf16.mxu0 %v4442
    %4803 = vmatpush1.bf16.msra.mxu0 %v4441
    %4804 = vmatprep.subr.bf16.mxu0 %v4450
    %4805 = vmatpush1.bf16.msra.mxu0 %v4449
    %4806 = vmatprep.subr.bf16.mxu0 %v4458
    %4807 = vmatpush1.bf16.msra.mxu0 %v4457
    %4808 = vmatprep.subr.bf16.mxu0 %v4466
    %4809 = vmatpush1.bf16.msra.mxu0 %v4465
    %4810 = vmatprep.subr.bf16.mxu0 %v4474
    %4811 = vmatpush1.bf16.msra.mxu0 %v4473
    %4812 = vmatprep.subr.bf16.mxu0 %v4482
    %4813 = vmatpush1.bf16.msra.mxu0 %v4481
    %4814 = vmatprep.subr.bf16.mxu0 %v4490
    %4815 = vmatpush1.bf16.msra.mxu0 %v4489
    %4816 = vmatprep.subr.bf16.mxu0 %v4498
    %4817 = vmatpush1.bf16.msra.mxu0 %v4497
    %4818 = vmatprep.subr.bf16.mxu0 %v4506
    %4819 = vmatpush1.bf16.msra.mxu0 %v4505
    %4820 = vmatprep.subr.bf16.mxu0 %v4514
    %4821 = vmatpush1.bf16.msra.mxu0 %v4513
    %4822 = vmatprep.subr.bf16.mxu0 %v4522
    %4823 = vmatpush1.bf16.msra.mxu0 %v4521
    %4824 = vmatprep.subr.bf16.mxu0 %v4530
    %4825 = vmatpush1.bf16.msra.mxu0 %v4529
    %4826 = vmatprep.subr.bf16.mxu0 %v4538
    %4827 = vmatpush1.bf16.msra.mxu0 %v4537
    %4828 = vmatprep.subr.bf16.mxu0 %v4546
    %4829 = vmatpush1.bf16.msra.mxu0 %v4545
    %4830 = vmatprep.mubr.bf16.mxu0 %v3906
    %4831 = vmatmul.mubr.bf16.gmra.mrb[0].mxu0 %v3905
    %v4832 = vpop.f32.mrb[0].mxu0
    %v4833 = vadd.f32 0.0, %v4832
    %v4834 = vpop.f32.mrb[0].mxu0
    %v4835 = vadd.f32 0.0, %v4834
    %v4836 = vpop.f32.mrb[0].mxu0
    %v4837 = vpop.f32.mrb[0].mxu0
    %4838 = vdwg.mxu0
    %v4839 = vmax.f32 %v4710, %v4751
    %v4840 = vmax.f32 %v4712, %v4753
    %v4841 = vmax.f32 %v4792, %v4833
    %v4842 = vmax.f32 %v4794, %v4835
    %v4843 = vmax.f32 %v4839, %v4841
    %v4844 = vmax.f32 %v4840, %v4842
    %v4845 = vld [vmem:[%s6] sm:$0x3]
    %v4847 = vlaneseq
    %v4848 = vshrl.u32 %v4847, 7
    %v4849 = vsub.s32 0, %v4848
    %v4850 = vrot.slane %v4845, %v4849
    %v4851 = vlaneseq
    %v4852 = vshrl.u32 %v4851, 7
    %v4853 = vsub.s32 1, %v4852
    %v4854 = vrot.slane %v4845, %v4853
    %v4857 = vadd.f32 %v4843, %v4850
    %v4858 = vadd.f32 %v4844, %v4854
    %v4859 = vmul.f32 %v4857, 0.01
    %v4860 = vmul.f32 %v4858, 0.01
    %v4861 = vmax.f32 %v4857, %v4859
    %v4862 = vmax.f32 %v4858, %v4860
    %v4863 = vpack.c.bf16 %v4861, %v4861
    %v4864 = vpack.c.bf16 %v4862, %v4862
    %v4865 = vld [vmem:[#allocation8] sm:$0xf]
    %v4866 = vld [vmem:[#allocation8 + $0x4] sm:$0xf]
    %v4867 = vld [vmem:[#allocation8 + $0x8] sm:$0xf]
    %v4868 = vld [vmem:[#allocation8 + $0xc] sm:$0xf]
    %v4869 = vld [vmem:[#allocation8 + $0x10] sm:$0xf]
    %v4870 = vld [vmem:[#allocation8 + $0x14] sm:$0xf]
    %v4871 = vld [vmem:[#allocation8 + $0x18] sm:$0xf]
    %v4872 = vld [vmem:[#allocation8 + $0x1c] sm:$0xf]
    %v4873 = vld [vmem:[#allocation8 + $0x20] sm:$0xf]
    %v4874 = vld [vmem:[#allocation8 + $0x24] sm:$0xf]
    %v4875 = vld [vmem:[#allocation8 + $0x28] sm:$0xf]
    %v4876 = vld [vmem:[#allocation8 + $0x2c] sm:$0xf]
    %v4877 = vld [vmem:[#allocation8 + $0x30] sm:$0xf]
    %v4878 = vld [vmem:[#allocation8 + $0x34] sm:$0xf]
    %v4879 = vld [vmem:[#allocation8 + $0x38] sm:$0xf]
    %v4880 = vld [vmem:[#allocation8 + $0x3c] sm:$0xf]
    %v4881 = vld [vmem:[#allocation8 + $0x40] sm:$0xf]
    %v4882 = vld [vmem:[#allocation8 + $0x44] sm:$0xf]
    %v4883 = vld [vmem:[#allocation8 + $0x48] sm:$0xf]
    %v4884 = vld [vmem:[#allocation8 + $0x4c] sm:$0xf]
    %v4885 = vld [vmem:[#allocation8 + $0x50] sm:$0xf]
    %v4886 = vld [vmem:[#allocation8 + $0x54] sm:$0xf]
    %v4887 = vld [vmem:[#allocation8 + $0x58] sm:$0xf]
    %v4888 = vld [vmem:[#allocation8 + $0x5c] sm:$0xf]
    %v4889 = vld [vmem:[#allocation8 + $0x60] sm:$0xf]
    %v4890 = vld [vmem:[#allocation8 + $0x64] sm:$0xf]
    %v4891 = vld [vmem:[#allocation8 + $0x68] sm:$0xf]
    %v4892 = vld [vmem:[#allocation8 + $0x6c] sm:$0xf]
    %v4893 = vld [vmem:[#allocation8 + $0x70] sm:$0xf]
    %v4894 = vld [vmem:[#allocation8 + $0x74] sm:$0xf]
    %v4895 = vld [vmem:[#allocation8 + $0x78] sm:$0xf]
    %v4896 = vld [vmem:[#allocation8 + $0x7c] sm:$0xf]
    %v4897 = vld [vmem:[%s8] sm:$0x1]
    %v4899 = vlaneseq
    %v4900 = vshrl.u32 %v4899, 7
    %v4901 = vsub.s32 0, %v4900
    %v4902 = vrot.slane %v4897, %v4901
    %v4936 = vunpack.c.l.b16 %v4865
    %v4937 = vunpack.c.l.b16 %v4866
    %v4938 = vunpack.c.l.b16 %v4867
    %v4939 = vunpack.c.l.b16 %v4868
    %v4940 = vunpack.c.l.b16 %v4869
    %v4941 = vunpack.c.l.b16 %v4870
    %v4942 = vunpack.c.l.b16 %v4871
    %v4943 = vunpack.c.l.b16 %v4872
    %v4944 = vunpack.c.l.b16 %v4873
    %v4945 = vunpack.c.l.b16 %v4874
    %v4946 = vunpack.c.l.b16 %v4875
    %v4947 = vunpack.c.l.b16 %v4876
    %v4948 = vunpack.c.l.b16 %v4877
    %v4949 = vunpack.c.l.b16 %v4878
    %v4950 = vunpack.c.l.b16 %v4879
    %v4951 = vunpack.c.l.b16 %v4880
    %v4952 = vunpack.c.l.b16 %v4881
    %v4953 = vunpack.c.l.b16 %v4882
    %v4954 = vunpack.c.l.b16 %v4883
    %v4955 = vunpack.c.l.b16 %v4884
    %v4956 = vunpack.c.l.b16 %v4885
    %v4957 = vunpack.c.l.b16 %v4886
    %v4958 = vunpack.c.l.b16 %v4887
    %v4959 = vunpack.c.l.b16 %v4888
    %v4960 = vunpack.c.l.b16 %v4889
    %v4961 = vunpack.c.l.b16 %v4890
    %v4962 = vunpack.c.l.b16 %v4891
    %v4963 = vunpack.c.l.b16 %v4892
    %v4964 = vunpack.c.l.b16 %v4893
    %v4965 = vunpack.c.l.b16 %v4894
    %v4966 = vunpack.c.l.b16 %v4895
    %v4967 = vunpack.c.l.b16 %v4896
    %v4968 = vpack.c.b16 %v4937, %v4936
    %v4969 = vpack.c.b16 %v4939, %v4938
    %v4970 = vpack.c.b16 %v4941, %v4940
    %v4971 = vpack.c.b16 %v4943, %v4942
    %v4972 = vpack.c.b16 %v4945, %v4944
    %v4973 = vpack.c.b16 %v4947, %v4946
    %v4974 = vpack.c.b16 %v4949, %v4948
    %v4975 = vpack.c.b16 %v4951, %v4950
    %v4976 = vpack.c.b16 %v4953, %v4952
    %v4977 = vpack.c.b16 %v4955, %v4954
    %v4978 = vpack.c.b16 %v4957, %v4956
    %v4979 = vpack.c.b16 %v4959, %v4958
    %v4980 = vpack.c.b16 %v4961, %v4960
    %v4981 = vpack.c.b16 %v4963, %v4962
    %v4982 = vpack.c.b16 %v4965, %v4964
    %v4983 = vpack.c.b16 %v4967, %v4966
    %5000 = vmatprep.subr.bf16.mxu0 0
    %5001 = vmatpush1.bf16.msra.mxu0 %v4968
    %5002 = vmatprep.subr.bf16.mxu0 0
    %5003 = vmatpush1.bf16.msra.mxu0 %v4969
    %5004 = vmatprep.subr.bf16.mxu0 0
    %5005 = vmatpush1.bf16.msra.mxu0 %v4970
    %5006 = vmatprep.subr.bf16.mxu0 0
    %5007 = vmatpush1.bf16.msra.mxu0 %v4971
    %5008 = vmatprep.subr.bf16.mxu0 0
    %5009 = vmatpush1.bf16.msra.mxu0 %v4972
    %5010 = vmatprep.subr.bf16.mxu0 0
    %5011 = vmatpush1.bf16.msra.mxu0 %v4973
    %5012 = vmatprep.subr.bf16.mxu0 0
    %5013 = vmatpush1.bf16.msra.mxu0 %v4974
    %5014 = vmatprep.subr.bf16.mxu0 0
    %5015 = vmatpush1.bf16.msra.mxu0 %v4975
    %5016 = vmatprep.subr.bf16.mxu0 0
    %5017 = vmatpush1.bf16.msra.mxu0 %v4976
    %5018 = vmatprep.subr.bf16.mxu0 0
    %5019 = vmatpush1.bf16.msra.mxu0 %v4977
    %5020 = vmatprep.subr.bf16.mxu0 0
    %5021 = vmatpush1.bf16.msra.mxu0 %v4978
    %5022 = vmatprep.subr.bf16.mxu0 0
    %5023 = vmatpush1.bf16.msra.mxu0 %v4979
    %5024 = vmatprep.subr.bf16.mxu0 0
    %5025 = vmatpush1.bf16.msra.mxu0 %v4980
    %5026 = vmatprep.subr.bf16.mxu0 0
    %5027 = vmatpush1.bf16.msra.mxu0 %v4981
    %5028 = vmatprep.subr.bf16.mxu0 0
    %5029 = vmatpush1.bf16.msra.mxu0 %v4982
    %5030 = vmatprep.subr.bf16.mxu0 0
    %5031 = vmatpush1.bf16.msra.mxu0 %v4983
    %5032 = vmatprep.mubr.bf16.mxu0 %v4864
    %5033 = vmatmul.mubr.bf16.gmra.mrb[0].mxu0 %v4863
    %v5034 = vpop.f32.mrb[0].mxu0
    %v5035 = vadd.f32 %v4902, %v5034
    %v5036 = vpop.f32.mrb[0].mxu0
    %v5037 = vpop.f32.mrb[0].mxu0
    %v5038 = vpop.f32.mrb[0].mxu0
    %5039 = vdwg.mxu0
    %5040 = vst [vmem:[#allocation10] sm:$0x3] %v5035
    // Predicated region
    $region54: #{conv3lin1_forward.1} parent=1 // pred_check
      _
    $region55: #{conv3lin1_forward.1} parent=1 // pred_check_branch
      %5042 = sbr.rel (0) target = $region57
    $region56: #{conv3lin1_forward.1} parent=1 // pred_region
      %s5044 = ssub.s32 32, 32
      %5045 = vsyncadd [#allocation4], %s5044
      %s5047 = sshll.u32 [#allocation10], 4
      %s5048 = int_to_ptr.vmem [resolvable:$true] %s5047
      %5050 = dma.vmem_to_hbm [thread:$0]  %s5048, 32, %s9, [#allocation4]
    $region57: #{conv3lin1_forward.1} parent=1 // pred_fallthru
      _
    // Predicated region
    $region58: #{conv3lin1_forward.1} parent=1 // pred_check
      _
    $region59: #{conv3lin1_forward.1} parent=1 // pred_check_branch
      %5052 = sbr.rel (0) target = $region61
    $region60: #{conv3lin1_forward.1} parent=1 // pred_region
      %5053 = dma.done [#allocation4], 32
    $region61: #{conv3lin1_forward.1} parent=1 // pred_fallthru
      _
    %5054 = vsyncpa [#allocation3], 1
    %5055 = vsyncpa [#allocation6], 1
    %5056 = vsyncpa [#allocation9], 1
    %5057 = vsyncpa [#allocation4], 1

</llo_original>
